<compile_context>
chip_gen: v7x
topology: tpu7x:2x2x1
jax: 0.10.0
libtpu: 0.0.40
codegen_flags: <defaults>
</compile_context>

<pallas_src>
import math

import jax
import jax.numpy as jnp
from jax.experimental import pallas as pl
from jax.experimental.pallas import tpu as pltpu


def _make_upsample_kernel(s_h: int, s_w: int):
    """Kernel for one (BC, BH, W) input block -> (BC, BH, s_h*s_w*W) output block.

    The output array is viewed wrapper-side as (NC, H, s_h*out_w): for a given
    input row h, the s_h replicated output rows are contiguous in memory, so
    height replication is a lane-axis concatenation of identical copies.
    """

    def kernel(x_ref, o_ref):
        x = x_ref[...]                              # (BC, BH, W)
        bc, bh, w = x.shape

        # Width (lane) interleave: each input column -> s_w adjacent lanes.
        if s_w > 1:
            y_w = jnp.broadcast_to(
                x[:, :, :, None], (bc, bh, w, s_w)).reshape(bc, bh, w * s_w)
        else:
            y_w = x

        # Height replication: s_h contiguous copies of each width-interleaved
        # row (lane-concat; sublane layout untouched).
        if s_h > 1:
            y = jnp.concatenate([y_w] * s_h, axis=-1)
        else:
            y = y_w

        o_ref[...] = y                              # one lane-dense block store

    return kernel


def upsampling_nearest_2d(x, scale_factor=2.0, *, in_tile_target_bytes=2 << 20):
    """Nearest-neighbor upsample for NCHW input, matching
    F.interpolate(..., mode='nearest', recompute_scale_factor=True)."""
    N, C, H, W = x.shape
    out_h = int(math.floor(H * scale_factor))
    out_w = int(math.floor(W * scale_factor))
    s_h, s_w = out_h // H, out_w // W
    if s_h * H != out_h or s_w * W != out_w:
        # TODO(synk): non-integer effective scale factors need a gather-style
        # index map; DenseNet only uses scale_factor in {1, 2}.
        raise NotImplementedError(
            "non-integer effective scale factor not supported by this kernel")

    NC = N * C
    itemsize = jnp.dtype(x.dtype).itemsize
    spatial_bytes = H * W * itemsize

    # --- tile selection ------------------------------------------------------
    # Double-buffered in + out footprint ~ 2*(1 + s_h*s_w)*in_tile; with a
    # ~2 MiB input tile that is ~20 MiB at scale=2, inside the raised scoped
    # VMEM limit on every generation (incl. v7x's 64 MiB physical VMEM).
    if spatial_bytes <= in_tile_target_bytes:
        BH = H
        BC = 1
        for d in range(1, NC + 1):                  # largest fitting divisor
            if NC % d == 0 and d * spatial_bytes <= in_tile_target_bytes:
                BC = d
    else:
        # A single channel is already large: split rows instead (multiple of 8
        # so the second-minor block dim respects the (8, 128) tiling).
        BC = 1
        rows = (in_tile_target_bytes // (W * itemsize)) // 8 * 8
        BH = int(min(H, max(8, rows)))

    grid = (NC // BC, pl.cdiv(H, BH))

    xr = x.reshape(NC, H, W)
    kernel = _make_upsample_kernel(s_h, s_w)

    out_flat = pl.pallas_call(
        kernel,
        out_shape=jax.ShapeDtypeStruct((NC, H, s_h * out_w), x.dtype),
        grid=grid,
        in_specs=[pl.BlockSpec((BC, BH, W), lambda i, j: (i, j, 0))],
        out_specs=pl.BlockSpec((BC, BH, s_h * out_w), lambda i, j: (i, j, 0)),
        compiler_params=pltpu.CompilerParams(
            dimension_semantics=("parallel", "parallel"),
            vmem_limit_bytes=48 * 1024 * 1024,
        ),
        cost_estimate=pl.CostEstimate(
            flops=0,
            transcendentals=0,
            bytes_accessed=int((1 + s_h * s_w) * NC * H * W * itemsize),
        ),
    )(xr)

    # (NC, H, s_h*out_w) is a contiguous view of (N, C, out_h, out_w).
    return out_flat.reshape(N, C, out_h, out_w)


if __name__ == "__main__":
    key = jax.random.PRNGKey(0)
    x = jax.random.normal(key, (2, 4, 16, 16), dtype=jnp.float32)

    # scale_factor=2 path (DenseNet decoder1).
    out = upsampling_nearest_2d(x, scale_factor=2.0)
    out = jax.block_until_ready(out)

    # Pure-JAX reference (nearest 2x replication).
    ref = jnp.repeat(jnp.repeat(x, 2, axis=2), 2, axis=3)

    assert out.shape == (2, 4, 32, 32), out.shape
    assert out.dtype == x.dtype
    assert jnp.array_equal(out, ref), "mismatch vs reference"

    # scale_factor=1 path (DenseNet decoder2) — identity values.
    out1 = jax.block_until_ready(upsampling_nearest_2d(x, scale_factor=1.0))
    assert out1.shape == x.shape
    assert jnp.array_equal(out1, x), "scale=1 path mismatch"

    print("KERNEL_OK")
</pallas_src>

<mosaic_0001>
module attributes {stable_mosaic.version = 11 : i64} {
  func.func @kernel(%arg0: i32, %arg1: i32, %arg2: memref<8x16x16xf32, #tpu.memory_space<vmem>>, %arg3: memref<8x16x64xf32, #tpu.memory_space<vmem>>) attributes {dimension_semantics = [#tpu.dimension_semantics<parallel>, #tpu.dimension_semantics<parallel>], iteration_bounds = array<i64: 1, 1>, scalar_prefetch = 0 : i64, scratch_operands = 0 : i64, tpu.core_type = #tpu.core_type<tc>, window_params = [{transform_indices = @transform_0, window_bounds = array<i64: 8, 16, 16>}, {transform_indices = @transform_1, window_bounds = array<i64: 8, 16, 64>}]} {
    %c0 = arith.constant 0 : index
    %c0_0 = arith.constant 0 : index
    %c0_1 = arith.constant 0 : index
    %0 = vector.load %arg2[%c0, %c0_0, %c0_1] : memref<8x16x16xf32, #tpu.memory_space<vmem>>, vector<8x16x16xf32>
    %1 = vector.shape_cast %0 : vector<8x16x16xf32> to vector<8x16x16x1xf32>
    %2 = vector.shape_cast %1 : vector<8x16x16x1xf32> to vector<8x16x16x1xf32>
    %3 = vector.broadcast %2 : vector<8x16x16x1xf32> to vector<8x16x16x2xf32>
    %4 = vector.shape_cast %3 : vector<8x16x16x2xf32> to vector<8x16x32xf32>
    %5 = tpu.concatenate %4, %4 in 2 : vector<8x16x32xf32>, vector<8x16x32xf32> -> vector<8x16x64xf32>
    %c0_2 = arith.constant 0 : index
    %c0_3 = arith.constant 0 : index
    %c0_4 = arith.constant 0 : index
    %6 = vector.load %arg3[%c0_2, %c0_3, %c0_4] : memref<8x16x64xf32, #tpu.memory_space<vmem>>, vector<8x16x64xf32>
    tpu.vector_store %arg3[%c0_2, %c0_3, %c0_4], %5 {strides = array<i32>} : memref<8x16x64xf32, #tpu.memory_space<vmem>>, vector<8x16x64xf32>,
    return
  }
  func.func @transform_0(%arg0: i32, %arg1: i32) -> (i32, i32, i32) {
    %c0_i32 = arith.constant 0 : i32
    %c0_i32_0 = arith.constant 0 : i32
    return %arg0, %arg1, %c0_i32 : i32, i32, i32
  }
  func.func @transform_1(%arg0: i32, %arg1: i32) -> (i32, i32, i32) {
    %c0_i32 = arith.constant 0 : i32
    %c0_i32_0 = arith.constant 0 : i32
    return %arg0, %arg1, %c0_i32 : i32, i32, i32
  }
}

</mosaic_0001>

<llo_original>
// kernel: tpu_custom_call.1
$region0: #{tpu_custom_call.1}
  #allocation0 [shape = 'u32[]', space=smem, size = 0x4, offset = 0x4, fixed_abs, tag = 'smem constant byte address 0x4 - core index']
  #allocation1 [shape = 'u32[144,128]{1,0:T(1,128)}', space=vmem, size = 0x12000, scoped, tag = 'internal scratch']
  %s0 = inlined_call_operand.hbm [shape: f32[8,16,16], index: 0, kind: input, shape index: {}]
  %s1 = inlined_call_operand.hbm [shape: f32[8,16,64], index: 1, kind: output, shape index: {}]
  %s2 = sld [smem:[#allocation0]]
  $region18: #{tpu_custom_call.1} parent=0
    _
  %s4 = ssub.s32 1, %s2
  %s5 = scalar_select 0, %s4, %s2
  $region1: #{tpu_custom_call.1} parent=0
    #allocation2 [shape = 'u8[65536]{0}', space=vmem, size = 0x10000, scoped, tag = 'input window, operand 0, single buffered']
    #allocation3 [shape = 's32[1]{0}', space=sflag, size = 0x4, scoped, tag = 'scoped memory for tpu_custom_call.1']
    #allocation4 [shape = 's32[1]{0}', space=sflag, size = 0x4, scoped, tag = 'scoped memory for tpu_custom_call.1']
    #allocation5 [shape = 'u8[65536]{0}', space=vmem, size = 0x10000, scoped, tag = 'output window, operand 0, single buffered']
    %6 = vsyncpa [#allocation3], 0
    %7 = vsyncpa [#allocation4], 0
    // Predicated region
    $region2: #{tpu_custom_call.1} parent=1 // pred_check
      _
    $region3: #{tpu_custom_call.1} parent=1 // pred_check_branch
      %9 = sbr.rel (0) target = $region5
    $region4: #{tpu_custom_call.1} parent=1 // pred_region
      %s11 = ssub.s32 2048, 2048
      %12 = vsyncadd [#allocation3], %s11
      %s13 = sshll.u32 [#allocation2], 4
      %s14 = int_to_ptr.vmem [resolvable:$true] %s13
      %19 = dma.hbm_to_vmem [thread:$0]  %s0, 2048, %s14, [#allocation3], 128, 128, 8
    $region5: #{tpu_custom_call.1} parent=1 // pred_fallthru
      _
    // Predicated region
    $region6: #{tpu_custom_call.1} parent=1 // pred_check
      _
    $region7: #{tpu_custom_call.1} parent=1 // pred_check_branch
      %21 = sbr.rel (0) target = $region9
    $region8: #{tpu_custom_call.1} parent=1 // pred_region
      %22 = dma.done [#allocation3], 2048
    $region9: #{tpu_custom_call.1} parent=1 // pred_fallthru
      _
    %v23 = vld [vmem:[#allocation2] sm:$0xff]
    %v24 = vld [vmem:[#allocation2 + $0x8] sm:$0xff]
    %v25 = vld [vmem:[#allocation2 + $0x10] sm:$0xff]
    %v26 = vld [vmem:[#allocation2 + $0x18] sm:$0xff]
    %v27 = vld [vmem:[#allocation2 + $0x20] sm:$0xff]
    %v28 = vld [vmem:[#allocation2 + $0x28] sm:$0xff]
    %v29 = vld [vmem:[#allocation2 + $0x30] sm:$0xff]
    %v30 = vld [vmem:[#allocation2 + $0x38] sm:$0xff]
    %v31 = vld [vmem:[#allocation2 + $0x40] sm:$0xff]
    %v32 = vld [vmem:[#allocation2 + $0x48] sm:$0xff]
    %v33 = vld [vmem:[#allocation2 + $0x50] sm:$0xff]
    %v34 = vld [vmem:[#allocation2 + $0x58] sm:$0xff]
    %v35 = vld [vmem:[#allocation2 + $0x60] sm:$0xff]
    %v36 = vld [vmem:[#allocation2 + $0x68] sm:$0xff]
    %v37 = vld [vmem:[#allocation2 + $0x70] sm:$0xff]
    %v38 = vld [vmem:[#allocation2 + $0x78] sm:$0xff]
    %v39 = vlaneseq
    %v40 = vshrl.u32 %v39, 7
    %v41 = vsub.s32 0, %v40
    %v42 = vrot.slane %v23, %v41
    %44 = vbcast.lane.b32.xlu0 %v42, 256
    %v45 = vpop.permute.xlu0 %44
    %s47 = sor.u32 256, 8
    %48 = vbcast.lane.b32.xlu0 %v42, %s47
    %v49 = vpop.permute.xlu0 %48
    %v50 = vlaneseq
    %v51 = vshrl.u32 %v50, 7
    %v52 = vsub.s32 1, %v51
    %v53 = vrot.slane %v23, %v52
    %55 = vbcast.lane.b32.xlu0 %v53, 256
    %v56 = vpop.permute.xlu0 %55
    %s58 = sor.u32 256, 8
    %59 = vbcast.lane.b32.xlu0 %v53, %s58
    %v60 = vpop.permute.xlu0 %59
    %v61 = vlaneseq
    %v62 = vshrl.u32 %v61, 7
    %v63 = vsub.s32 2, %v62
    %v64 = vrot.slane %v23, %v63
    %66 = vbcast.lane.b32.xlu0 %v64, 256
    %v67 = vpop.permute.xlu0 %66
    %s69 = sor.u32 256, 8
    %70 = vbcast.lane.b32.xlu0 %v64, %s69
    %v71 = vpop.permute.xlu0 %70
    %v72 = vlaneseq
    %v73 = vshrl.u32 %v72, 7
    %v74 = vsub.s32 3, %v73
    %v75 = vrot.slane %v23, %v74
    %77 = vbcast.lane.b32.xlu0 %v75, 256
    %v78 = vpop.permute.xlu0 %77
    %s80 = sor.u32 256, 8
    %81 = vbcast.lane.b32.xlu0 %v75, %s80
    %v82 = vpop.permute.xlu0 %81
    %v83 = vlaneseq
    %v84 = vshrl.u32 %v83, 7
    %v85 = vsub.s32 4, %v84
    %v86 = vrot.slane %v23, %v85
    %88 = vbcast.lane.b32.xlu0 %v86, 256
    %v89 = vpop.permute.xlu0 %88
    %s91 = sor.u32 256, 8
    %92 = vbcast.lane.b32.xlu0 %v86, %s91
    %v93 = vpop.permute.xlu0 %92
    %v94 = vlaneseq
    %v95 = vshrl.u32 %v94, 7
    %v96 = vsub.s32 5, %v95
    %v97 = vrot.slane %v23, %v96
    %99 = vbcast.lane.b32.xlu0 %v97, 256
    %v100 = vpop.permute.xlu0 %99
    %s102 = sor.u32 256, 8
    %103 = vbcast.lane.b32.xlu0 %v97, %s102
    %v104 = vpop.permute.xlu0 %103
    %v105 = vlaneseq
    %v106 = vshrl.u32 %v105, 7
    %v107 = vsub.s32 6, %v106
    %v108 = vrot.slane %v23, %v107
    %110 = vbcast.lane.b32.xlu0 %v108, 256
    %v111 = vpop.permute.xlu0 %110
    %s113 = sor.u32 256, 8
    %114 = vbcast.lane.b32.xlu0 %v108, %s113
    %v115 = vpop.permute.xlu0 %114
    %v116 = vlaneseq
    %v117 = vshrl.u32 %v116, 7
    %v118 = vsub.s32 7, %v117
    %v119 = vrot.slane %v23, %v118
    %121 = vbcast.lane.b32.xlu0 %v119, 256
    %v122 = vpop.permute.xlu0 %121
    %s124 = sor.u32 256, 8
    %125 = vbcast.lane.b32.xlu0 %v119, %s124
    %v126 = vpop.permute.xlu0 %125
    %v127 = vlaneseq
    %v128 = vshrl.u32 %v127, 7
    %v129 = vsub.s32 0, %v128
    %v130 = vrot.slane %v24, %v129
    %132 = vbcast.lane.b32.xlu0 %v130, 256
    %v133 = vpop.permute.xlu0 %132
    %s135 = sor.u32 256, 8
    %136 = vbcast.lane.b32.xlu0 %v130, %s135
    %v137 = vpop.permute.xlu0 %136
    %v138 = vlaneseq
    %v139 = vshrl.u32 %v138, 7
    %v140 = vsub.s32 1, %v139
    %v141 = vrot.slane %v24, %v140
    %143 = vbcast.lane.b32.xlu0 %v141, 256
    %v144 = vpop.permute.xlu0 %143
    %s146 = sor.u32 256, 8
    %147 = vbcast.lane.b32.xlu0 %v141, %s146
    %v148 = vpop.permute.xlu0 %147
    %v149 = vlaneseq
    %v150 = vshrl.u32 %v149, 7
    %v151 = vsub.s32 2, %v150
    %v152 = vrot.slane %v24, %v151
    %154 = vbcast.lane.b32.xlu0 %v152, 256
    %v155 = vpop.permute.xlu0 %154
    %s157 = sor.u32 256, 8
    %158 = vbcast.lane.b32.xlu0 %v152, %s157
    %v159 = vpop.permute.xlu0 %158
    %v160 = vlaneseq
    %v161 = vshrl.u32 %v160, 7
    %v162 = vsub.s32 3, %v161
    %v163 = vrot.slane %v24, %v162
    %165 = vbcast.lane.b32.xlu0 %v163, 256
    %v166 = vpop.permute.xlu0 %165
    %s168 = sor.u32 256, 8
    %169 = vbcast.lane.b32.xlu0 %v163, %s168
    %v170 = vpop.permute.xlu0 %169
    %v171 = vlaneseq
    %v172 = vshrl.u32 %v171, 7
    %v173 = vsub.s32 4, %v172
    %v174 = vrot.slane %v24, %v173
    %176 = vbcast.lane.b32.xlu0 %v174, 256
    %v177 = vpop.permute.xlu0 %176
    %s179 = sor.u32 256, 8
    %180 = vbcast.lane.b32.xlu0 %v174, %s179
    %v181 = vpop.permute.xlu0 %180
    %v182 = vlaneseq
    %v183 = vshrl.u32 %v182, 7
    %v184 = vsub.s32 5, %v183
    %v185 = vrot.slane %v24, %v184
    %187 = vbcast.lane.b32.xlu0 %v185, 256
    %v188 = vpop.permute.xlu0 %187
    %s190 = sor.u32 256, 8
    %191 = vbcast.lane.b32.xlu0 %v185, %s190
    %v192 = vpop.permute.xlu0 %191
    %v193 = vlaneseq
    %v194 = vshrl.u32 %v193, 7
    %v195 = vsub.s32 6, %v194
    %v196 = vrot.slane %v24, %v195
    %198 = vbcast.lane.b32.xlu0 %v196, 256
    %v199 = vpop.permute.xlu0 %198
    %s201 = sor.u32 256, 8
    %202 = vbcast.lane.b32.xlu0 %v196, %s201
    %v203 = vpop.permute.xlu0 %202
    %v204 = vlaneseq
    %v205 = vshrl.u32 %v204, 7
    %v206 = vsub.s32 7, %v205
    %v207 = vrot.slane %v24, %v206
    %209 = vbcast.lane.b32.xlu0 %v207, 256
    %v210 = vpop.permute.xlu0 %209
    %s212 = sor.u32 256, 8
    %213 = vbcast.lane.b32.xlu0 %v207, %s212
    %v214 = vpop.permute.xlu0 %213
    %v215 = vlaneseq
    %v216 = vshrl.u32 %v215, 7
    %v217 = vsub.s32 0, %v216
    %v218 = vrot.slane %v25, %v217
    %220 = vbcast.lane.b32.xlu0 %v218, 256
    %v221 = vpop.permute.xlu0 %220
    %s223 = sor.u32 256, 8
    %224 = vbcast.lane.b32.xlu0 %v218, %s223
    %v225 = vpop.permute.xlu0 %224
    %v226 = vlaneseq
    %v227 = vshrl.u32 %v226, 7
    %v228 = vsub.s32 1, %v227
    %v229 = vrot.slane %v25, %v228
    %231 = vbcast.lane.b32.xlu0 %v229, 256
    %v232 = vpop.permute.xlu0 %231
    %s234 = sor.u32 256, 8
    %235 = vbcast.lane.b32.xlu0 %v229, %s234
    %v236 = vpop.permute.xlu0 %235
    %v237 = vlaneseq
    %v238 = vshrl.u32 %v237, 7
    %v239 = vsub.s32 2, %v238
    %v240 = vrot.slane %v25, %v239
    %242 = vbcast.lane.b32.xlu0 %v240, 256
    %v243 = vpop.permute.xlu0 %242
    %s245 = sor.u32 256, 8
    %246 = vbcast.lane.b32.xlu0 %v240, %s245
    %v247 = vpop.permute.xlu0 %246
    %v248 = vlaneseq
    %v249 = vshrl.u32 %v248, 7
    %v250 = vsub.s32 3, %v249
    %v251 = vrot.slane %v25, %v250
    %253 = vbcast.lane.b32.xlu0 %v251, 256
    %v254 = vpop.permute.xlu0 %253
    %s256 = sor.u32 256, 8
    %257 = vbcast.lane.b32.xlu0 %v251, %s256
    %v258 = vpop.permute.xlu0 %257
    %v259 = vlaneseq
    %v260 = vshrl.u32 %v259, 7
    %v261 = vsub.s32 4, %v260
    %v262 = vrot.slane %v25, %v261
    %264 = vbcast.lane.b32.xlu0 %v262, 256
    %v265 = vpop.permute.xlu0 %264
    %s267 = sor.u32 256, 8
    %268 = vbcast.lane.b32.xlu0 %v262, %s267
    %v269 = vpop.permute.xlu0 %268
    %v270 = vlaneseq
    %v271 = vshrl.u32 %v270, 7
    %v272 = vsub.s32 5, %v271
    %v273 = vrot.slane %v25, %v272
    %275 = vbcast.lane.b32.xlu0 %v273, 256
    %v276 = vpop.permute.xlu0 %275
    %s278 = sor.u32 256, 8
    %279 = vbcast.lane.b32.xlu0 %v273, %s278
    %v280 = vpop.permute.xlu0 %279
    %v281 = vlaneseq
    %v282 = vshrl.u32 %v281, 7
    %v283 = vsub.s32 6, %v282
    %v284 = vrot.slane %v25, %v283
    %286 = vbcast.lane.b32.xlu0 %v284, 256
    %v287 = vpop.permute.xlu0 %286
    %s289 = sor.u32 256, 8
    %290 = vbcast.lane.b32.xlu0 %v284, %s289
    %v291 = vpop.permute.xlu0 %290
    %v292 = vlaneseq
    %v293 = vshrl.u32 %v292, 7
    %v294 = vsub.s32 7, %v293
    %v295 = vrot.slane %v25, %v294
    %297 = vbcast.lane.b32.xlu0 %v295, 256
    %v298 = vpop.permute.xlu0 %297
    %s300 = sor.u32 256, 8
    %301 = vbcast.lane.b32.xlu0 %v295, %s300
    %v302 = vpop.permute.xlu0 %301
    %v303 = vlaneseq
    %v304 = vshrl.u32 %v303, 7
    %v305 = vsub.s32 0, %v304
    %v306 = vrot.slane %v26, %v305
    %308 = vbcast.lane.b32.xlu0 %v306, 256
    %v309 = vpop.permute.xlu0 %308
    %s311 = sor.u32 256, 8
    %312 = vbcast.lane.b32.xlu0 %v306, %s311
    %v313 = vpop.permute.xlu0 %312
    %v314 = vlaneseq
    %v315 = vshrl.u32 %v314, 7
    %v316 = vsub.s32 1, %v315
    %v317 = vrot.slane %v26, %v316
    %319 = vbcast.lane.b32.xlu0 %v317, 256
    %v320 = vpop.permute.xlu0 %319
    %s322 = sor.u32 256, 8
    %323 = vbcast.lane.b32.xlu0 %v317, %s322
    %v324 = vpop.permute.xlu0 %323
    %v325 = vlaneseq
    %v326 = vshrl.u32 %v325, 7
    %v327 = vsub.s32 2, %v326
    %v328 = vrot.slane %v26, %v327
    %330 = vbcast.lane.b32.xlu0 %v328, 256
    %v331 = vpop.permute.xlu0 %330
    %s333 = sor.u32 256, 8
    %334 = vbcast.lane.b32.xlu0 %v328, %s333
    %v335 = vpop.permute.xlu0 %334
    %v336 = vlaneseq
    %v337 = vshrl.u32 %v336, 7
    %v338 = vsub.s32 3, %v337
    %v339 = vrot.slane %v26, %v338
    %341 = vbcast.lane.b32.xlu0 %v339, 256
    %v342 = vpop.permute.xlu0 %341
    %s344 = sor.u32 256, 8
    %345 = vbcast.lane.b32.xlu0 %v339, %s344
    %v346 = vpop.permute.xlu0 %345
    %v347 = vlaneseq
    %v348 = vshrl.u32 %v347, 7
    %v349 = vsub.s32 4, %v348
    %v350 = vrot.slane %v26, %v349
    %352 = vbcast.lane.b32.xlu0 %v350, 256
    %v353 = vpop.permute.xlu0 %352
    %s355 = sor.u32 256, 8
    %356 = vbcast.lane.b32.xlu0 %v350, %s355
    %v357 = vpop.permute.xlu0 %356
    %v358 = vlaneseq
    %v359 = vshrl.u32 %v358, 7
    %v360 = vsub.s32 5, %v359
    %v361 = vrot.slane %v26, %v360
    %363 = vbcast.lane.b32.xlu0 %v361, 256
    %v364 = vpop.permute.xlu0 %363
    %s366 = sor.u32 256, 8
    %367 = vbcast.lane.b32.xlu0 %v361, %s366
    %v368 = vpop.permute.xlu0 %367
    %v369 = vlaneseq
    %v370 = vshrl.u32 %v369, 7
    %v371 = vsub.s32 6, %v370
    %v372 = vrot.slane %v26, %v371
    %374 = vbcast.lane.b32.xlu0 %v372, 256
    %v375 = vpop.permute.xlu0 %374
    %s377 = sor.u32 256, 8
    %378 = vbcast.lane.b32.xlu0 %v372, %s377
    %v379 = vpop.permute.xlu0 %378
    %v380 = vlaneseq
    %v381 = vshrl.u32 %v380, 7
    %v382 = vsub.s32 7, %v381
    %v383 = vrot.slane %v26, %v382
    %385 = vbcast.lane.b32.xlu0 %v383, 256
    %v386 = vpop.permute.xlu0 %385
    %s388 = sor.u32 256, 8
    %389 = vbcast.lane.b32.xlu0 %v383, %s388
    %v390 = vpop.permute.xlu0 %389
    %v391 = vlaneseq
    %v392 = vshrl.u32 %v391, 7
    %v393 = vsub.s32 0, %v392
    %v394 = vrot.slane %v27, %v393
    %396 = vbcast.lane.b32.xlu0 %v394, 256
    %v397 = vpop.permute.xlu0 %396
    %s399 = sor.u32 256, 8
    %400 = vbcast.lane.b32.xlu0 %v394, %s399
    %v401 = vpop.permute.xlu0 %400
    %v402 = vlaneseq
    %v403 = vshrl.u32 %v402, 7
    %v404 = vsub.s32 1, %v403
    %v405 = vrot.slane %v27, %v404
    %407 = vbcast.lane.b32.xlu0 %v405, 256
    %v408 = vpop.permute.xlu0 %407
    %s410 = sor.u32 256, 8
    %411 = vbcast.lane.b32.xlu0 %v405, %s410
    %v412 = vpop.permute.xlu0 %411
    %v413 = vlaneseq
    %v414 = vshrl.u32 %v413, 7
    %v415 = vsub.s32 2, %v414
    %v416 = vrot.slane %v27, %v415
    %418 = vbcast.lane.b32.xlu0 %v416, 256
    %v419 = vpop.permute.xlu0 %418
    %s421 = sor.u32 256, 8
    %422 = vbcast.lane.b32.xlu0 %v416, %s421
    %v423 = vpop.permute.xlu0 %422
    %v424 = vlaneseq
    %v425 = vshrl.u32 %v424, 7
    %v426 = vsub.s32 3, %v425
    %v427 = vrot.slane %v27, %v426
    %429 = vbcast.lane.b32.xlu0 %v427, 256
    %v430 = vpop.permute.xlu0 %429
    %s432 = sor.u32 256, 8
    %433 = vbcast.lane.b32.xlu0 %v427, %s432
    %v434 = vpop.permute.xlu0 %433
    %v435 = vlaneseq
    %v436 = vshrl.u32 %v435, 7
    %v437 = vsub.s32 4, %v436
    %v438 = vrot.slane %v27, %v437
    %440 = vbcast.lane.b32.xlu0 %v438, 256
    %v441 = vpop.permute.xlu0 %440
    %s443 = sor.u32 256, 8
    %444 = vbcast.lane.b32.xlu0 %v438, %s443
    %v445 = vpop.permute.xlu0 %444
    %v446 = vlaneseq
    %v447 = vshrl.u32 %v446, 7
    %v448 = vsub.s32 5, %v447
    %v449 = vrot.slane %v27, %v448
    %451 = vbcast.lane.b32.xlu0 %v449, 256
    %v452 = vpop.permute.xlu0 %451
    %s454 = sor.u32 256, 8
    %455 = vbcast.lane.b32.xlu0 %v449, %s454
    %v456 = vpop.permute.xlu0 %455
    %v457 = vlaneseq
    %v458 = vshrl.u32 %v457, 7
    %v459 = vsub.s32 6, %v458
    %v460 = vrot.slane %v27, %v459
    %462 = vbcast.lane.b32.xlu0 %v460, 256
    %v463 = vpop.permute.xlu0 %462
    %s465 = sor.u32 256, 8
    %466 = vbcast.lane.b32.xlu0 %v460, %s465
    %v467 = vpop.permute.xlu0 %466
    %v468 = vlaneseq
    %v469 = vshrl.u32 %v468, 7
    %v470 = vsub.s32 7, %v469
    %v471 = vrot.slane %v27, %v470
    %473 = vbcast.lane.b32.xlu0 %v471, 256
    %v474 = vpop.permute.xlu0 %473
    %s476 = sor.u32 256, 8
    %477 = vbcast.lane.b32.xlu0 %v471, %s476
    %v478 = vpop.permute.xlu0 %477
    %v479 = vlaneseq
    %v480 = vshrl.u32 %v479, 7
    %v481 = vsub.s32 0, %v480
    %v482 = vrot.slane %v28, %v481
    %484 = vbcast.lane.b32.xlu0 %v482, 256
    %v485 = vpop.permute.xlu0 %484
    %s487 = sor.u32 256, 8
    %488 = vbcast.lane.b32.xlu0 %v482, %s487
    %v489 = vpop.permute.xlu0 %488
    %v490 = vlaneseq
    %v491 = vshrl.u32 %v490, 7
    %v492 = vsub.s32 1, %v491
    %v493 = vrot.slane %v28, %v492
    %495 = vbcast.lane.b32.xlu0 %v493, 256
    %v496 = vpop.permute.xlu0 %495
    %s498 = sor.u32 256, 8
    %499 = vbcast.lane.b32.xlu0 %v493, %s498
    %v500 = vpop.permute.xlu0 %499
    %v501 = vlaneseq
    %v502 = vshrl.u32 %v501, 7
    %v503 = vsub.s32 2, %v502
    %v504 = vrot.slane %v28, %v503
    %506 = vbcast.lane.b32.xlu0 %v504, 256
    %v507 = vpop.permute.xlu0 %506
    %s509 = sor.u32 256, 8
    %510 = vbcast.lane.b32.xlu0 %v504, %s509
    %v511 = vpop.permute.xlu0 %510
    %v512 = vlaneseq
    %v513 = vshrl.u32 %v512, 7
    %v514 = vsub.s32 3, %v513
    %v515 = vrot.slane %v28, %v514
    %517 = vbcast.lane.b32.xlu0 %v515, 256
    %v518 = vpop.permute.xlu0 %517
    %s520 = sor.u32 256, 8
    %521 = vbcast.lane.b32.xlu0 %v515, %s520
    %v522 = vpop.permute.xlu0 %521
    %v523 = vlaneseq
    %v524 = vshrl.u32 %v523, 7
    %v525 = vsub.s32 4, %v524
    %v526 = vrot.slane %v28, %v525
    %528 = vbcast.lane.b32.xlu0 %v526, 256
    %v529 = vpop.permute.xlu0 %528
    %s531 = sor.u32 256, 8
    %532 = vbcast.lane.b32.xlu0 %v526, %s531
    %v533 = vpop.permute.xlu0 %532
    %v534 = vlaneseq
    %v535 = vshrl.u32 %v534, 7
    %v536 = vsub.s32 5, %v535
    %v537 = vrot.slane %v28, %v536
    %539 = vbcast.lane.b32.xlu0 %v537, 256
    %v540 = vpop.permute.xlu0 %539
    %s542 = sor.u32 256, 8
    %543 = vbcast.lane.b32.xlu0 %v537, %s542
    %v544 = vpop.permute.xlu0 %543
    %v545 = vlaneseq
    %v546 = vshrl.u32 %v545, 7
    %v547 = vsub.s32 6, %v546
    %v548 = vrot.slane %v28, %v547
    %550 = vbcast.lane.b32.xlu0 %v548, 256
    %v551 = vpop.permute.xlu0 %550
    %s553 = sor.u32 256, 8
    %554 = vbcast.lane.b32.xlu0 %v548, %s553
    %v555 = vpop.permute.xlu0 %554
    %v556 = vlaneseq
    %v557 = vshrl.u32 %v556, 7
    %v558 = vsub.s32 7, %v557
    %v559 = vrot.slane %v28, %v558
    %561 = vbcast.lane.b32.xlu0 %v559, 256
    %v562 = vpop.permute.xlu0 %561
    %s564 = sor.u32 256, 8
    %565 = vbcast.lane.b32.xlu0 %v559, %s564
    %v566 = vpop.permute.xlu0 %565
    %v567 = vlaneseq
    %v568 = vshrl.u32 %v567, 7
    %v569 = vsub.s32 0, %v568
    %v570 = vrot.slane %v29, %v569
    %572 = vbcast.lane.b32.xlu0 %v570, 256
    %v573 = vpop.permute.xlu0 %572
    %s575 = sor.u32 256, 8
    %576 = vbcast.lane.b32.xlu0 %v570, %s575
    %v577 = vpop.permute.xlu0 %576
    %v578 = vlaneseq
    %v579 = vshrl.u32 %v578, 7
    %v580 = vsub.s32 1, %v579
    %v581 = vrot.slane %v29, %v580
    %583 = vbcast.lane.b32.xlu0 %v581, 256
    %v584 = vpop.permute.xlu0 %583
    %s586 = sor.u32 256, 8
    %587 = vbcast.lane.b32.xlu0 %v581, %s586
    %v588 = vpop.permute.xlu0 %587
    %v589 = vlaneseq
    %v590 = vshrl.u32 %v589, 7
    %v591 = vsub.s32 2, %v590
    %v592 = vrot.slane %v29, %v591
    %594 = vbcast.lane.b32.xlu0 %v592, 256
    %v595 = vpop.permute.xlu0 %594
    %s597 = sor.u32 256, 8
    %598 = vbcast.lane.b32.xlu0 %v592, %s597
    %v599 = vpop.permute.xlu0 %598
    %v600 = vlaneseq
    %v601 = vshrl.u32 %v600, 7
    %v602 = vsub.s32 3, %v601
    %v603 = vrot.slane %v29, %v602
    %605 = vbcast.lane.b32.xlu0 %v603, 256
    %v606 = vpop.permute.xlu0 %605
    %s608 = sor.u32 256, 8
    %609 = vbcast.lane.b32.xlu0 %v603, %s608
    %v610 = vpop.permute.xlu0 %609
    %v611 = vlaneseq
    %v612 = vshrl.u32 %v611, 7
    %v613 = vsub.s32 4, %v612
    %v614 = vrot.slane %v29, %v613
    %616 = vbcast.lane.b32.xlu0 %v614, 256
    %v617 = vpop.permute.xlu0 %616
    %s619 = sor.u32 256, 8
    %620 = vbcast.lane.b32.xlu0 %v614, %s619
    %v621 = vpop.permute.xlu0 %620
    %v622 = vlaneseq
    %v623 = vshrl.u32 %v622, 7
    %v624 = vsub.s32 5, %v623
    %v625 = vrot.slane %v29, %v624
    %627 = vbcast.lane.b32.xlu0 %v625, 256
    %v628 = vpop.permute.xlu0 %627
    %s630 = sor.u32 256, 8
    %631 = vbcast.lane.b32.xlu0 %v625, %s630
    %v632 = vpop.permute.xlu0 %631
    %v633 = vlaneseq
    %v634 = vshrl.u32 %v633, 7
    %v635 = vsub.s32 6, %v634
    %v636 = vrot.slane %v29, %v635
    %638 = vbcast.lane.b32.xlu0 %v636, 256
    %v639 = vpop.permute.xlu0 %638
    %s641 = sor.u32 256, 8
    %642 = vbcast.lane.b32.xlu0 %v636, %s641
    %v643 = vpop.permute.xlu0 %642
    %v644 = vlaneseq
    %v645 = vshrl.u32 %v644, 7
    %v646 = vsub.s32 7, %v645
    %v647 = vrot.slane %v29, %v646
    %649 = vbcast.lane.b32.xlu0 %v647, 256
    %v650 = vpop.permute.xlu0 %649
    %s652 = sor.u32 256, 8
    %653 = vbcast.lane.b32.xlu0 %v647, %s652
    %v654 = vpop.permute.xlu0 %653
    %v655 = vlaneseq
    %v656 = vshrl.u32 %v655, 7
    %v657 = vsub.s32 0, %v656
    %v658 = vrot.slane %v30, %v657
    %660 = vbcast.lane.b32.xlu0 %v658, 256
    %v661 = vpop.permute.xlu0 %660
    %s663 = sor.u32 256, 8
    %664 = vbcast.lane.b32.xlu0 %v658, %s663
    %v665 = vpop.permute.xlu0 %664
    %v666 = vlaneseq
    %v667 = vshrl.u32 %v666, 7
    %v668 = vsub.s32 1, %v667
    %v669 = vrot.slane %v30, %v668
    %671 = vbcast.lane.b32.xlu0 %v669, 256
    %v672 = vpop.permute.xlu0 %671
    %s674 = sor.u32 256, 8
    %675 = vbcast.lane.b32.xlu0 %v669, %s674
    %v676 = vpop.permute.xlu0 %675
    %v677 = vlaneseq
    %v678 = vshrl.u32 %v677, 7
    %v679 = vsub.s32 2, %v678
    %v680 = vrot.slane %v30, %v679
    %682 = vbcast.lane.b32.xlu0 %v680, 256
    %v683 = vpop.permute.xlu0 %682
    %s685 = sor.u32 256, 8
    %686 = vbcast.lane.b32.xlu0 %v680, %s685
    %v687 = vpop.permute.xlu0 %686
    %v688 = vlaneseq
    %v689 = vshrl.u32 %v688, 7
    %v690 = vsub.s32 3, %v689
    %v691 = vrot.slane %v30, %v690
    %693 = vbcast.lane.b32.xlu0 %v691, 256
    %v694 = vpop.permute.xlu0 %693
    %s696 = sor.u32 256, 8
    %697 = vbcast.lane.b32.xlu0 %v691, %s696
    %v698 = vpop.permute.xlu0 %697
    %v699 = vlaneseq
    %v700 = vshrl.u32 %v699, 7
    %v701 = vsub.s32 4, %v700
    %v702 = vrot.slane %v30, %v701
    %704 = vbcast.lane.b32.xlu0 %v702, 256
    %v705 = vpop.permute.xlu0 %704
    %s707 = sor.u32 256, 8
    %708 = vbcast.lane.b32.xlu0 %v702, %s707
    %v709 = vpop.permute.xlu0 %708
    %v710 = vlaneseq
    %v711 = vshrl.u32 %v710, 7
    %v712 = vsub.s32 5, %v711
    %v713 = vrot.slane %v30, %v712
    %715 = vbcast.lane.b32.xlu0 %v713, 256
    %v716 = vpop.permute.xlu0 %715
    %s718 = sor.u32 256, 8
    %719 = vbcast.lane.b32.xlu0 %v713, %s718
    %v720 = vpop.permute.xlu0 %719
    %v721 = vlaneseq
    %v722 = vshrl.u32 %v721, 7
    %v723 = vsub.s32 6, %v722
    %v724 = vrot.slane %v30, %v723
    %726 = vbcast.lane.b32.xlu0 %v724, 256
    %v727 = vpop.permute.xlu0 %726
    %s729 = sor.u32 256, 8
    %730 = vbcast.lane.b32.xlu0 %v724, %s729
    %v731 = vpop.permute.xlu0 %730
    %v732 = vlaneseq
    %v733 = vshrl.u32 %v732, 7
    %v734 = vsub.s32 7, %v733
    %v735 = vrot.slane %v30, %v734
    %737 = vbcast.lane.b32.xlu0 %v735, 256
    %v738 = vpop.permute.xlu0 %737
    %s740 = sor.u32 256, 8
    %741 = vbcast.lane.b32.xlu0 %v735, %s740
    %v742 = vpop.permute.xlu0 %741
    %v743 = vlaneseq
    %v744 = vshrl.u32 %v743, 7
    %v745 = vsub.s32 0, %v744
    %v746 = vrot.slane %v31, %v745
    %748 = vbcast.lane.b32.xlu0 %v746, 256
    %v749 = vpop.permute.xlu0 %748
    %s751 = sor.u32 256, 8
    %752 = vbcast.lane.b32.xlu0 %v746, %s751
    %v753 = vpop.permute.xlu0 %752
    %v754 = vlaneseq
    %v755 = vshrl.u32 %v754, 7
    %v756 = vsub.s32 1, %v755
    %v757 = vrot.slane %v31, %v756
    %759 = vbcast.lane.b32.xlu0 %v757, 256
    %v760 = vpop.permute.xlu0 %759
    %s762 = sor.u32 256, 8
    %763 = vbcast.lane.b32.xlu0 %v757, %s762
    %v764 = vpop.permute.xlu0 %763
    %v765 = vlaneseq
    %v766 = vshrl.u32 %v765, 7
    %v767 = vsub.s32 2, %v766
    %v768 = vrot.slane %v31, %v767
    %770 = vbcast.lane.b32.xlu0 %v768, 256
    %v771 = vpop.permute.xlu0 %770
    %s773 = sor.u32 256, 8
    %774 = vbcast.lane.b32.xlu0 %v768, %s773
    %v775 = vpop.permute.xlu0 %774
    %v776 = vlaneseq
    %v777 = vshrl.u32 %v776, 7
    %v778 = vsub.s32 3, %v777
    %v779 = vrot.slane %v31, %v778
    %781 = vbcast.lane.b32.xlu0 %v779, 256
    %v782 = vpop.permute.xlu0 %781
    %s784 = sor.u32 256, 8
    %785 = vbcast.lane.b32.xlu0 %v779, %s784
    %v786 = vpop.permute.xlu0 %785
    %v787 = vlaneseq
    %v788 = vshrl.u32 %v787, 7
    %v789 = vsub.s32 4, %v788
    %v790 = vrot.slane %v31, %v789
    %792 = vbcast.lane.b32.xlu0 %v790, 256
    %v793 = vpop.permute.xlu0 %792
    %s795 = sor.u32 256, 8
    %796 = vbcast.lane.b32.xlu0 %v790, %s795
    %v797 = vpop.permute.xlu0 %796
    %v798 = vlaneseq
    %v799 = vshrl.u32 %v798, 7
    %v800 = vsub.s32 5, %v799
    %v801 = vrot.slane %v31, %v800
    %803 = vbcast.lane.b32.xlu0 %v801, 256
    %v804 = vpop.permute.xlu0 %803
    %s806 = sor.u32 256, 8
    %807 = vbcast.lane.b32.xlu0 %v801, %s806
    %v808 = vpop.permute.xlu0 %807
    %v809 = vlaneseq
    %v810 = vshrl.u32 %v809, 7
    %v811 = vsub.s32 6, %v810
    %v812 = vrot.slane %v31, %v811
    %814 = vbcast.lane.b32.xlu0 %v812, 256
    %v815 = vpop.permute.xlu0 %814
    %s817 = sor.u32 256, 8
    %818 = vbcast.lane.b32.xlu0 %v812, %s817
    %v819 = vpop.permute.xlu0 %818
    %v820 = vlaneseq
    %v821 = vshrl.u32 %v820, 7
    %v822 = vsub.s32 7, %v821
    %v823 = vrot.slane %v31, %v822
    %825 = vbcast.lane.b32.xlu0 %v823, 256
    %v826 = vpop.permute.xlu0 %825
    %s828 = sor.u32 256, 8
    %829 = vbcast.lane.b32.xlu0 %v823, %s828
    %v830 = vpop.permute.xlu0 %829
    %v831 = vlaneseq
    %v832 = vshrl.u32 %v831, 7
    %v833 = vsub.s32 0, %v832
    %v834 = vrot.slane %v32, %v833
    %836 = vbcast.lane.b32.xlu0 %v834, 256
    %v837 = vpop.permute.xlu0 %836
    %s839 = sor.u32 256, 8
    %840 = vbcast.lane.b32.xlu0 %v834, %s839
    %v841 = vpop.permute.xlu0 %840
    %v842 = vlaneseq
    %v843 = vshrl.u32 %v842, 7
    %v844 = vsub.s32 1, %v843
    %v845 = vrot.slane %v32, %v844
    %847 = vbcast.lane.b32.xlu0 %v845, 256
    %v848 = vpop.permute.xlu0 %847
    %s850 = sor.u32 256, 8
    %851 = vbcast.lane.b32.xlu0 %v845, %s850
    %v852 = vpop.permute.xlu0 %851
    %v853 = vlaneseq
    %v854 = vshrl.u32 %v853, 7
    %v855 = vsub.s32 2, %v854
    %v856 = vrot.slane %v32, %v855
    %858 = vbcast.lane.b32.xlu0 %v856, 256
    %v859 = vpop.permute.xlu0 %858
    %s861 = sor.u32 256, 8
    %862 = vbcast.lane.b32.xlu0 %v856, %s861
    %v863 = vpop.permute.xlu0 %862
    %v864 = vlaneseq
    %v865 = vshrl.u32 %v864, 7
    %v866 = vsub.s32 3, %v865
    %v867 = vrot.slane %v32, %v866
    %869 = vbcast.lane.b32.xlu0 %v867, 256
    %v870 = vpop.permute.xlu0 %869
    %s872 = sor.u32 256, 8
    %873 = vbcast.lane.b32.xlu0 %v867, %s872
    %v874 = vpop.permute.xlu0 %873
    %v875 = vlaneseq
    %v876 = vshrl.u32 %v875, 7
    %v877 = vsub.s32 4, %v876
    %v878 = vrot.slane %v32, %v877
    %880 = vbcast.lane.b32.xlu0 %v878, 256
    %v881 = vpop.permute.xlu0 %880
    %s883 = sor.u32 256, 8
    %884 = vbcast.lane.b32.xlu0 %v878, %s883
    %v885 = vpop.permute.xlu0 %884
    %v886 = vlaneseq
    %v887 = vshrl.u32 %v886, 7
    %v888 = vsub.s32 5, %v887
    %v889 = vrot.slane %v32, %v888
    %891 = vbcast.lane.b32.xlu0 %v889, 256
    %v892 = vpop.permute.xlu0 %891
    %s894 = sor.u32 256, 8
    %895 = vbcast.lane.b32.xlu0 %v889, %s894
    %v896 = vpop.permute.xlu0 %895
    %v897 = vlaneseq
    %v898 = vshrl.u32 %v897, 7
    %v899 = vsub.s32 6, %v898
    %v900 = vrot.slane %v32, %v899
    %902 = vbcast.lane.b32.xlu0 %v900, 256
    %v903 = vpop.permute.xlu0 %902
    %s905 = sor.u32 256, 8
    %906 = vbcast.lane.b32.xlu0 %v900, %s905
    %v907 = vpop.permute.xlu0 %906
    %v908 = vlaneseq
    %v909 = vshrl.u32 %v908, 7
    %v910 = vsub.s32 7, %v909
    %v911 = vrot.slane %v32, %v910
    %913 = vbcast.lane.b32.xlu0 %v911, 256
    %v914 = vpop.permute.xlu0 %913
    %s916 = sor.u32 256, 8
    %917 = vbcast.lane.b32.xlu0 %v911, %s916
    %v918 = vpop.permute.xlu0 %917
    %v919 = vlaneseq
    %v920 = vshrl.u32 %v919, 7
    %v921 = vsub.s32 0, %v920
    %v922 = vrot.slane %v33, %v921
    %924 = vbcast.lane.b32.xlu0 %v922, 256
    %v925 = vpop.permute.xlu0 %924
    %s927 = sor.u32 256, 8
    %928 = vbcast.lane.b32.xlu0 %v922, %s927
    %v929 = vpop.permute.xlu0 %928
    %v930 = vlaneseq
    %v931 = vshrl.u32 %v930, 7
    %v932 = vsub.s32 1, %v931
    %v933 = vrot.slane %v33, %v932
    %935 = vbcast.lane.b32.xlu0 %v933, 256
    %v936 = vpop.permute.xlu0 %935
    %s938 = sor.u32 256, 8
    %939 = vbcast.lane.b32.xlu0 %v933, %s938
    %v940 = vpop.permute.xlu0 %939
    %v941 = vlaneseq
    %v942 = vshrl.u32 %v941, 7
    %v943 = vsub.s32 2, %v942
    %v944 = vrot.slane %v33, %v943
    %946 = vbcast.lane.b32.xlu0 %v944, 256
    %v947 = vpop.permute.xlu0 %946
    %s949 = sor.u32 256, 8
    %950 = vbcast.lane.b32.xlu0 %v944, %s949
    %v951 = vpop.permute.xlu0 %950
    %v952 = vlaneseq
    %v953 = vshrl.u32 %v952, 7
    %v954 = vsub.s32 3, %v953
    %v955 = vrot.slane %v33, %v954
    %957 = vbcast.lane.b32.xlu0 %v955, 256
    %v958 = vpop.permute.xlu0 %957
    %s960 = sor.u32 256, 8
    %961 = vbcast.lane.b32.xlu0 %v955, %s960
    %v962 = vpop.permute.xlu0 %961
    %v963 = vlaneseq
    %v964 = vshrl.u32 %v963, 7
    %v965 = vsub.s32 4, %v964
    %v966 = vrot.slane %v33, %v965
    %968 = vbcast.lane.b32.xlu0 %v966, 256
    %v969 = vpop.permute.xlu0 %968
    %s971 = sor.u32 256, 8
    %972 = vbcast.lane.b32.xlu0 %v966, %s971
    %v973 = vpop.permute.xlu0 %972
    %v974 = vlaneseq
    %v975 = vshrl.u32 %v974, 7
    %v976 = vsub.s32 5, %v975
    %v977 = vrot.slane %v33, %v976
    %979 = vbcast.lane.b32.xlu0 %v977, 256
    %v980 = vpop.permute.xlu0 %979
    %s982 = sor.u32 256, 8
    %983 = vbcast.lane.b32.xlu0 %v977, %s982
    %v984 = vpop.permute.xlu0 %983
    %v985 = vlaneseq
    %v986 = vshrl.u32 %v985, 7
    %v987 = vsub.s32 6, %v986
    %v988 = vrot.slane %v33, %v987
    %990 = vbcast.lane.b32.xlu0 %v988, 256
    %v991 = vpop.permute.xlu0 %990
    %s993 = sor.u32 256, 8
    %994 = vbcast.lane.b32.xlu0 %v988, %s993
    %v995 = vpop.permute.xlu0 %994
    %v996 = vlaneseq
    %v997 = vshrl.u32 %v996, 7
    %v998 = vsub.s32 7, %v997
    %v999 = vrot.slane %v33, %v998
    %1001 = vbcast.lane.b32.xlu0 %v999, 256
    %v1002 = vpop.permute.xlu0 %1001
    %s1004 = sor.u32 256, 8
    %1005 = vbcast.lane.b32.xlu0 %v999, %s1004
    %v1006 = vpop.permute.xlu0 %1005
    %v1007 = vlaneseq
    %v1008 = vshrl.u32 %v1007, 7
    %v1009 = vsub.s32 0, %v1008
    %v1010 = vrot.slane %v34, %v1009
    %1012 = vbcast.lane.b32.xlu0 %v1010, 256
    %v1013 = vpop.permute.xlu0 %1012
    %s1015 = sor.u32 256, 8
    %1016 = vbcast.lane.b32.xlu0 %v1010, %s1015
    %v1017 = vpop.permute.xlu0 %1016
    %v1018 = vlaneseq
    %v1019 = vshrl.u32 %v1018, 7
    %v1020 = vsub.s32 1, %v1019
    %v1021 = vrot.slane %v34, %v1020
    %1023 = vbcast.lane.b32.xlu0 %v1021, 256
    %v1024 = vpop.permute.xlu0 %1023
    %s1026 = sor.u32 256, 8
    %1027 = vbcast.lane.b32.xlu0 %v1021, %s1026
    %v1028 = vpop.permute.xlu0 %1027
    %v1029 = vlaneseq
    %v1030 = vshrl.u32 %v1029, 7
    %v1031 = vsub.s32 2, %v1030
    %v1032 = vrot.slane %v34, %v1031
    %1034 = vbcast.lane.b32.xlu0 %v1032, 256
    %v1035 = vpop.permute.xlu0 %1034
    %s1037 = sor.u32 256, 8
    %1038 = vbcast.lane.b32.xlu0 %v1032, %s1037
    %v1039 = vpop.permute.xlu0 %1038
    %v1040 = vlaneseq
    %v1041 = vshrl.u32 %v1040, 7
    %v1042 = vsub.s32 3, %v1041
    %v1043 = vrot.slane %v34, %v1042
    %1045 = vbcast.lane.b32.xlu0 %v1043, 256
    %v1046 = vpop.permute.xlu0 %1045
    %s1048 = sor.u32 256, 8
    %1049 = vbcast.lane.b32.xlu0 %v1043, %s1048
    %v1050 = vpop.permute.xlu0 %1049
    %v1051 = vlaneseq
    %v1052 = vshrl.u32 %v1051, 7
    %v1053 = vsub.s32 4, %v1052
    %v1054 = vrot.slane %v34, %v1053
    %1056 = vbcast.lane.b32.xlu0 %v1054, 256
    %v1057 = vpop.permute.xlu0 %1056
    %s1059 = sor.u32 256, 8
    %1060 = vbcast.lane.b32.xlu0 %v1054, %s1059
    %v1061 = vpop.permute.xlu0 %1060
    %v1062 = vlaneseq
    %v1063 = vshrl.u32 %v1062, 7
    %v1064 = vsub.s32 5, %v1063
    %v1065 = vrot.slane %v34, %v1064
    %1067 = vbcast.lane.b32.xlu0 %v1065, 256
    %v1068 = vpop.permute.xlu0 %1067
    %s1070 = sor.u32 256, 8
    %1071 = vbcast.lane.b32.xlu0 %v1065, %s1070
    %v1072 = vpop.permute.xlu0 %1071
    %v1073 = vlaneseq
    %v1074 = vshrl.u32 %v1073, 7
    %v1075 = vsub.s32 6, %v1074
    %v1076 = vrot.slane %v34, %v1075
    %1078 = vbcast.lane.b32.xlu0 %v1076, 256
    %v1079 = vpop.permute.xlu0 %1078
    %s1081 = sor.u32 256, 8
    %1082 = vbcast.lane.b32.xlu0 %v1076, %s1081
    %v1083 = vpop.permute.xlu0 %1082
    %v1084 = vlaneseq
    %v1085 = vshrl.u32 %v1084, 7
    %v1086 = vsub.s32 7, %v1085
    %v1087 = vrot.slane %v34, %v1086
    %1089 = vbcast.lane.b32.xlu0 %v1087, 256
    %v1090 = vpop.permute.xlu0 %1089
    %s1092 = sor.u32 256, 8
    %1093 = vbcast.lane.b32.xlu0 %v1087, %s1092
    %v1094 = vpop.permute.xlu0 %1093
    %v1095 = vlaneseq
    %v1096 = vshrl.u32 %v1095, 7
    %v1097 = vsub.s32 0, %v1096
    %v1098 = vrot.slane %v35, %v1097
    %1100 = vbcast.lane.b32.xlu0 %v1098, 256
    %v1101 = vpop.permute.xlu0 %1100
    %s1103 = sor.u32 256, 8
    %1104 = vbcast.lane.b32.xlu0 %v1098, %s1103
    %v1105 = vpop.permute.xlu0 %1104
    %v1106 = vlaneseq
    %v1107 = vshrl.u32 %v1106, 7
    %v1108 = vsub.s32 1, %v1107
    %v1109 = vrot.slane %v35, %v1108
    %1111 = vbcast.lane.b32.xlu0 %v1109, 256
    %v1112 = vpop.permute.xlu0 %1111
    %s1114 = sor.u32 256, 8
    %1115 = vbcast.lane.b32.xlu0 %v1109, %s1114
    %v1116 = vpop.permute.xlu0 %1115
    %v1117 = vlaneseq
    %v1118 = vshrl.u32 %v1117, 7
    %v1119 = vsub.s32 2, %v1118
    %v1120 = vrot.slane %v35, %v1119
    %1122 = vbcast.lane.b32.xlu0 %v1120, 256
    %v1123 = vpop.permute.xlu0 %1122
    %s1125 = sor.u32 256, 8
    %1126 = vbcast.lane.b32.xlu0 %v1120, %s1125
    %v1127 = vpop.permute.xlu0 %1126
    %v1128 = vlaneseq
    %v1129 = vshrl.u32 %v1128, 7
    %v1130 = vsub.s32 3, %v1129
    %v1131 = vrot.slane %v35, %v1130
    %1133 = vbcast.lane.b32.xlu0 %v1131, 256
    %v1134 = vpop.permute.xlu0 %1133
    %s1136 = sor.u32 256, 8
    %1137 = vbcast.lane.b32.xlu0 %v1131, %s1136
    %v1138 = vpop.permute.xlu0 %1137
    %v1139 = vlaneseq
    %v1140 = vshrl.u32 %v1139, 7
    %v1141 = vsub.s32 4, %v1140
    %v1142 = vrot.slane %v35, %v1141
    %1144 = vbcast.lane.b32.xlu0 %v1142, 256
    %v1145 = vpop.permute.xlu0 %1144
    %s1147 = sor.u32 256, 8
    %1148 = vbcast.lane.b32.xlu0 %v1142, %s1147
    %v1149 = vpop.permute.xlu0 %1148
    %v1150 = vlaneseq
    %v1151 = vshrl.u32 %v1150, 7
    %v1152 = vsub.s32 5, %v1151
    %v1153 = vrot.slane %v35, %v1152
    %1155 = vbcast.lane.b32.xlu0 %v1153, 256
    %v1156 = vpop.permute.xlu0 %1155
    %s1158 = sor.u32 256, 8
    %1159 = vbcast.lane.b32.xlu0 %v1153, %s1158
    %v1160 = vpop.permute.xlu0 %1159
    %v1161 = vlaneseq
    %v1162 = vshrl.u32 %v1161, 7
    %v1163 = vsub.s32 6, %v1162
    %v1164 = vrot.slane %v35, %v1163
    %1166 = vbcast.lane.b32.xlu0 %v1164, 256
    %v1167 = vpop.permute.xlu0 %1166
    %s1169 = sor.u32 256, 8
    %1170 = vbcast.lane.b32.xlu0 %v1164, %s1169
    %v1171 = vpop.permute.xlu0 %1170
    %v1172 = vlaneseq
    %v1173 = vshrl.u32 %v1172, 7
    %v1174 = vsub.s32 7, %v1173
    %v1175 = vrot.slane %v35, %v1174
    %1177 = vbcast.lane.b32.xlu0 %v1175, 256
    %v1178 = vpop.permute.xlu0 %1177
    %s1180 = sor.u32 256, 8
    %1181 = vbcast.lane.b32.xlu0 %v1175, %s1180
    %v1182 = vpop.permute.xlu0 %1181
    %v1183 = vlaneseq
    %v1184 = vshrl.u32 %v1183, 7
    %v1185 = vsub.s32 0, %v1184
    %v1186 = vrot.slane %v36, %v1185
    %1188 = vbcast.lane.b32.xlu0 %v1186, 256
    %v1189 = vpop.permute.xlu0 %1188
    %s1191 = sor.u32 256, 8
    %1192 = vbcast.lane.b32.xlu0 %v1186, %s1191
    %v1193 = vpop.permute.xlu0 %1192
    %v1194 = vlaneseq
    %v1195 = vshrl.u32 %v1194, 7
    %v1196 = vsub.s32 1, %v1195
    %v1197 = vrot.slane %v36, %v1196
    %1199 = vbcast.lane.b32.xlu0 %v1197, 256
    %v1200 = vpop.permute.xlu0 %1199
    %s1202 = sor.u32 256, 8
    %1203 = vbcast.lane.b32.xlu0 %v1197, %s1202
    %v1204 = vpop.permute.xlu0 %1203
    %v1205 = vlaneseq
    %v1206 = vshrl.u32 %v1205, 7
    %v1207 = vsub.s32 2, %v1206
    %v1208 = vrot.slane %v36, %v1207
    %1210 = vbcast.lane.b32.xlu0 %v1208, 256
    %v1211 = vpop.permute.xlu0 %1210
    %s1213 = sor.u32 256, 8
    %1214 = vbcast.lane.b32.xlu0 %v1208, %s1213
    %v1215 = vpop.permute.xlu0 %1214
    %v1216 = vlaneseq
    %v1217 = vshrl.u32 %v1216, 7
    %v1218 = vsub.s32 3, %v1217
    %v1219 = vrot.slane %v36, %v1218
    %1221 = vbcast.lane.b32.xlu0 %v1219, 256
    %v1222 = vpop.permute.xlu0 %1221
    %s1224 = sor.u32 256, 8
    %1225 = vbcast.lane.b32.xlu0 %v1219, %s1224
    %v1226 = vpop.permute.xlu0 %1225
    %v1227 = vlaneseq
    %v1228 = vshrl.u32 %v1227, 7
    %v1229 = vsub.s32 4, %v1228
    %v1230 = vrot.slane %v36, %v1229
    %1232 = vbcast.lane.b32.xlu0 %v1230, 256
    %v1233 = vpop.permute.xlu0 %1232
    %s1235 = sor.u32 256, 8
    %1236 = vbcast.lane.b32.xlu0 %v1230, %s1235
    %v1237 = vpop.permute.xlu0 %1236
    %v1238 = vlaneseq
    %v1239 = vshrl.u32 %v1238, 7
    %v1240 = vsub.s32 5, %v1239
    %v1241 = vrot.slane %v36, %v1240
    %1243 = vbcast.lane.b32.xlu0 %v1241, 256
    %v1244 = vpop.permute.xlu0 %1243
    %s1246 = sor.u32 256, 8
    %1247 = vbcast.lane.b32.xlu0 %v1241, %s1246
    %v1248 = vpop.permute.xlu0 %1247
    %v1249 = vlaneseq
    %v1250 = vshrl.u32 %v1249, 7
    %v1251 = vsub.s32 6, %v1250
    %v1252 = vrot.slane %v36, %v1251
    %1254 = vbcast.lane.b32.xlu0 %v1252, 256
    %v1255 = vpop.permute.xlu0 %1254
    %s1257 = sor.u32 256, 8
    %1258 = vbcast.lane.b32.xlu0 %v1252, %s1257
    %v1259 = vpop.permute.xlu0 %1258
    %v1260 = vlaneseq
    %v1261 = vshrl.u32 %v1260, 7
    %v1262 = vsub.s32 7, %v1261
    %v1263 = vrot.slane %v36, %v1262
    %1265 = vbcast.lane.b32.xlu0 %v1263, 256
    %v1266 = vpop.permute.xlu0 %1265
    %s1268 = sor.u32 256, 8
    %1269 = vbcast.lane.b32.xlu0 %v1263, %s1268
    %v1270 = vpop.permute.xlu0 %1269
    %v1271 = vlaneseq
    %v1272 = vshrl.u32 %v1271, 7
    %v1273 = vsub.s32 0, %v1272
    %v1274 = vrot.slane %v37, %v1273
    %1276 = vbcast.lane.b32.xlu0 %v1274, 256
    %v1277 = vpop.permute.xlu0 %1276
    %s1279 = sor.u32 256, 8
    %1280 = vbcast.lane.b32.xlu0 %v1274, %s1279
    %v1281 = vpop.permute.xlu0 %1280
    %v1282 = vlaneseq
    %v1283 = vshrl.u32 %v1282, 7
    %v1284 = vsub.s32 1, %v1283
    %v1285 = vrot.slane %v37, %v1284
    %1287 = vbcast.lane.b32.xlu0 %v1285, 256
    %v1288 = vpop.permute.xlu0 %1287
    %s1290 = sor.u32 256, 8
    %1291 = vbcast.lane.b32.xlu0 %v1285, %s1290
    %v1292 = vpop.permute.xlu0 %1291
    %v1293 = vlaneseq
    %v1294 = vshrl.u32 %v1293, 7
    %v1295 = vsub.s32 2, %v1294
    %v1296 = vrot.slane %v37, %v1295
    %1298 = vbcast.lane.b32.xlu0 %v1296, 256
    %v1299 = vpop.permute.xlu0 %1298
    %s1301 = sor.u32 256, 8
    %1302 = vbcast.lane.b32.xlu0 %v1296, %s1301
    %v1303 = vpop.permute.xlu0 %1302
    %v1304 = vlaneseq
    %v1305 = vshrl.u32 %v1304, 7
    %v1306 = vsub.s32 3, %v1305
    %v1307 = vrot.slane %v37, %v1306
    %1309 = vbcast.lane.b32.xlu0 %v1307, 256
    %v1310 = vpop.permute.xlu0 %1309
    %s1312 = sor.u32 256, 8
    %1313 = vbcast.lane.b32.xlu0 %v1307, %s1312
    %v1314 = vpop.permute.xlu0 %1313
    %v1315 = vlaneseq
    %v1316 = vshrl.u32 %v1315, 7
    %v1317 = vsub.s32 4, %v1316
    %v1318 = vrot.slane %v37, %v1317
    %1320 = vbcast.lane.b32.xlu0 %v1318, 256
    %v1321 = vpop.permute.xlu0 %1320
    %s1323 = sor.u32 256, 8
    %1324 = vbcast.lane.b32.xlu0 %v1318, %s1323
    %v1325 = vpop.permute.xlu0 %1324
    %v1326 = vlaneseq
    %v1327 = vshrl.u32 %v1326, 7
    %v1328 = vsub.s32 5, %v1327
    %v1329 = vrot.slane %v37, %v1328
    %1331 = vbcast.lane.b32.xlu0 %v1329, 256
    %v1332 = vpop.permute.xlu0 %1331
    %s1334 = sor.u32 256, 8
    %1335 = vbcast.lane.b32.xlu0 %v1329, %s1334
    %v1336 = vpop.permute.xlu0 %1335
    %v1337 = vlaneseq
    %v1338 = vshrl.u32 %v1337, 7
    %v1339 = vsub.s32 6, %v1338
    %v1340 = vrot.slane %v37, %v1339
    %1342 = vbcast.lane.b32.xlu0 %v1340, 256
    %v1343 = vpop.permute.xlu0 %1342
    %s1345 = sor.u32 256, 8
    %1346 = vbcast.lane.b32.xlu0 %v1340, %s1345
    %v1347 = vpop.permute.xlu0 %1346
    %v1348 = vlaneseq
    %v1349 = vshrl.u32 %v1348, 7
    %v1350 = vsub.s32 7, %v1349
    %v1351 = vrot.slane %v37, %v1350
    %1353 = vbcast.lane.b32.xlu0 %v1351, 256
    %v1354 = vpop.permute.xlu0 %1353
    %s1356 = sor.u32 256, 8
    %1357 = vbcast.lane.b32.xlu0 %v1351, %s1356
    %v1358 = vpop.permute.xlu0 %1357
    %v1359 = vlaneseq
    %v1360 = vshrl.u32 %v1359, 7
    %v1361 = vsub.s32 0, %v1360
    %v1362 = vrot.slane %v38, %v1361
    %1364 = vbcast.lane.b32.xlu0 %v1362, 256
    %v1365 = vpop.permute.xlu0 %1364
    %s1367 = sor.u32 256, 8
    %1368 = vbcast.lane.b32.xlu0 %v1362, %s1367
    %v1369 = vpop.permute.xlu0 %1368
    %v1370 = vlaneseq
    %v1371 = vshrl.u32 %v1370, 7
    %v1372 = vsub.s32 1, %v1371
    %v1373 = vrot.slane %v38, %v1372
    %1375 = vbcast.lane.b32.xlu0 %v1373, 256
    %v1376 = vpop.permute.xlu0 %1375
    %s1378 = sor.u32 256, 8
    %1379 = vbcast.lane.b32.xlu0 %v1373, %s1378
    %v1380 = vpop.permute.xlu0 %1379
    %v1381 = vlaneseq
    %v1382 = vshrl.u32 %v1381, 7
    %v1383 = vsub.s32 2, %v1382
    %v1384 = vrot.slane %v38, %v1383
    %1386 = vbcast.lane.b32.xlu0 %v1384, 256
    %v1387 = vpop.permute.xlu0 %1386
    %s1389 = sor.u32 256, 8
    %1390 = vbcast.lane.b32.xlu0 %v1384, %s1389
    %v1391 = vpop.permute.xlu0 %1390
    %v1392 = vlaneseq
    %v1393 = vshrl.u32 %v1392, 7
    %v1394 = vsub.s32 3, %v1393
    %v1395 = vrot.slane %v38, %v1394
    %1397 = vbcast.lane.b32.xlu0 %v1395, 256
    %v1398 = vpop.permute.xlu0 %1397
    %s1400 = sor.u32 256, 8
    %1401 = vbcast.lane.b32.xlu0 %v1395, %s1400
    %v1402 = vpop.permute.xlu0 %1401
    %v1403 = vlaneseq
    %v1404 = vshrl.u32 %v1403, 7
    %v1405 = vsub.s32 4, %v1404
    %v1406 = vrot.slane %v38, %v1405
    %1408 = vbcast.lane.b32.xlu0 %v1406, 256
    %v1409 = vpop.permute.xlu0 %1408
    %s1411 = sor.u32 256, 8
    %1412 = vbcast.lane.b32.xlu0 %v1406, %s1411
    %v1413 = vpop.permute.xlu0 %1412
    %v1414 = vlaneseq
    %v1415 = vshrl.u32 %v1414, 7
    %v1416 = vsub.s32 5, %v1415
    %v1417 = vrot.slane %v38, %v1416
    %1419 = vbcast.lane.b32.xlu0 %v1417, 256
    %v1420 = vpop.permute.xlu0 %1419
    %s1422 = sor.u32 256, 8
    %1423 = vbcast.lane.b32.xlu0 %v1417, %s1422
    %v1424 = vpop.permute.xlu0 %1423
    %v1425 = vlaneseq
    %v1426 = vshrl.u32 %v1425, 7
    %v1427 = vsub.s32 6, %v1426
    %v1428 = vrot.slane %v38, %v1427
    %1430 = vbcast.lane.b32.xlu0 %v1428, 256
    %v1431 = vpop.permute.xlu0 %1430
    %s1433 = sor.u32 256, 8
    %1434 = vbcast.lane.b32.xlu0 %v1428, %s1433
    %v1435 = vpop.permute.xlu0 %1434
    %v1436 = vlaneseq
    %v1437 = vshrl.u32 %v1436, 7
    %v1438 = vsub.s32 7, %v1437
    %v1439 = vrot.slane %v38, %v1438
    %1441 = vbcast.lane.b32.xlu0 %v1439, 256
    %v1442 = vpop.permute.xlu0 %1441
    %s1444 = sor.u32 256, 8
    %1445 = vbcast.lane.b32.xlu0 %v1439, %s1444
    %v1446 = vpop.permute.xlu0 %1445
    %v1447 = vcombine.low %v45, %v67
    %v1448 = vcombine.high %v45, %v67
    %v1450 = vunpack.c.l.s4 1983009808
    %v1451 = vunpack.c.0.s8 %v1450
    %v1452 = vlaneseq
    %v1453 = vshrl.u32 %v1452, 7
    %v1454 = vsub.s32 %v1451, %v1453
    %v1455 = vrot.slane %v1447, %v1454
    %v1457 = vunpack.c.l.s4 1983009808
    %v1458 = vunpack.c.0.s8 %v1457
    %v1459 = vlaneseq
    %v1460 = vshrl.u32 %v1459, 7
    %v1461 = vsub.s32 %v1458, %v1460
    %v1462 = vrot.slane %v1448, %v1461
    %v1463 = vcombine.low %v56, %v78
    %v1464 = vcombine.high %v56, %v78
    %v1466 = vunpack.c.l.s4 1983009808
    %v1467 = vunpack.c.0.s8 %v1466
    %v1468 = vlaneseq
    %v1469 = vshrl.u32 %v1468, 7
    %v1470 = vsub.s32 %v1467, %v1469
    %v1471 = vrot.slane %v1463, %v1470
    %v1473 = vunpack.c.l.s4 1983009808
    %v1474 = vunpack.c.0.s8 %v1473
    %v1475 = vlaneseq
    %v1476 = vshrl.u32 %v1475, 7
    %v1477 = vsub.s32 %v1474, %v1476
    %v1478 = vrot.slane %v1464, %v1477
    %v1479 = vcombine.low %v89, %v111
    %v1480 = vcombine.high %v89, %v111
    %v1482 = vunpack.c.l.s4 1983009808
    %v1483 = vunpack.c.0.s8 %v1482
    %v1484 = vlaneseq
    %v1485 = vshrl.u32 %v1484, 7
    %v1486 = vsub.s32 %v1483, %v1485
    %v1487 = vrot.slane %v1479, %v1486
    %v1489 = vunpack.c.l.s4 1983009808
    %v1490 = vunpack.c.0.s8 %v1489
    %v1491 = vlaneseq
    %v1492 = vshrl.u32 %v1491, 7
    %v1493 = vsub.s32 %v1490, %v1492
    %v1494 = vrot.slane %v1480, %v1493
    %v1495 = vcombine.low %v100, %v122
    %v1496 = vcombine.high %v100, %v122
    %v1498 = vunpack.c.l.s4 1983009808
    %v1499 = vunpack.c.0.s8 %v1498
    %v1500 = vlaneseq
    %v1501 = vshrl.u32 %v1500, 7
    %v1502 = vsub.s32 %v1499, %v1501
    %v1503 = vrot.slane %v1495, %v1502
    %v1505 = vunpack.c.l.s4 1983009808
    %v1506 = vunpack.c.0.s8 %v1505
    %v1507 = vlaneseq
    %v1508 = vshrl.u32 %v1507, 7
    %v1509 = vsub.s32 %v1506, %v1508
    %v1510 = vrot.slane %v1496, %v1509
    %v1511 = vcombine.low %v1455, %v1471
    %v1512 = vcombine.high %v1455, %v1471
    %v1514 = vunpack.c.l.s4 1934713408
    %v1515 = vunpack.c.0.s8 %v1514
    %v1516 = vlaneseq
    %v1517 = vshrl.u32 %v1516, 7
    %v1518 = vsub.s32 %v1515, %v1517
    %v1519 = vrot.slane %v1511, %v1518
    %v1521 = vunpack.c.l.s4 1934713408
    %v1522 = vunpack.c.0.s8 %v1521
    %v1523 = vlaneseq
    %v1524 = vshrl.u32 %v1523, 7
    %v1525 = vsub.s32 %v1522, %v1524
    %v1526 = vrot.slane %v1512, %v1525
    %v1527 = vcombine.low %v1462, %v1478
    %v1528 = vcombine.high %v1462, %v1478
    %v1530 = vunpack.c.l.s4 1934713408
    %v1531 = vunpack.c.0.s8 %v1530
    %v1532 = vlaneseq
    %v1533 = vshrl.u32 %v1532, 7
    %v1534 = vsub.s32 %v1531, %v1533
    %v1535 = vrot.slane %v1527, %v1534
    %v1537 = vunpack.c.l.s4 1934713408
    %v1538 = vunpack.c.0.s8 %v1537
    %v1539 = vlaneseq
    %v1540 = vshrl.u32 %v1539, 7
    %v1541 = vsub.s32 %v1538, %v1540
    %v1542 = vrot.slane %v1528, %v1541
    %v1543 = vcombine.low %v1487, %v1503
    %v1544 = vcombine.high %v1487, %v1503
    %v1546 = vunpack.c.l.s4 1934713408
    %v1547 = vunpack.c.0.s8 %v1546
    %v1548 = vlaneseq
    %v1549 = vshrl.u32 %v1548, 7
    %v1550 = vsub.s32 %v1547, %v1549
    %v1551 = vrot.slane %v1543, %v1550
    %v1553 = vunpack.c.l.s4 1934713408
    %v1554 = vunpack.c.0.s8 %v1553
    %v1555 = vlaneseq
    %v1556 = vshrl.u32 %v1555, 7
    %v1557 = vsub.s32 %v1554, %v1556
    %v1558 = vrot.slane %v1544, %v1557
    %v1559 = vcombine.low %v1494, %v1510
    %v1560 = vcombine.high %v1494, %v1510
    %v1562 = vunpack.c.l.s4 1934713408
    %v1563 = vunpack.c.0.s8 %v1562
    %v1564 = vlaneseq
    %v1565 = vshrl.u32 %v1564, 7
    %v1566 = vsub.s32 %v1563, %v1565
    %v1567 = vrot.slane %v1559, %v1566
    %v1569 = vunpack.c.l.s4 1934713408
    %v1570 = vunpack.c.0.s8 %v1569
    %v1571 = vlaneseq
    %v1572 = vshrl.u32 %v1571, 7
    %v1573 = vsub.s32 %v1570, %v1572
    %v1574 = vrot.slane %v1560, %v1573
    %v1575 = vcombine.low %v1519, %v1551
    %v1576 = vcombine.high %v1519, %v1551
    %v1577 = vcombine.low %v1526, %v1558
    %v1578 = vcombine.high %v1526, %v1558
    %v1579 = vcombine.low %v1535, %v1567
    %v1580 = vcombine.high %v1535, %v1567
    %v1581 = vcombine.low %v1542, %v1574
    %v1582 = vcombine.high %v1542, %v1574
    %v1583 = vcombine.low %v133, %v155
    %v1584 = vcombine.high %v133, %v155
    %v1586 = vunpack.c.l.s4 1983009808
    %v1587 = vunpack.c.0.s8 %v1586
    %v1588 = vlaneseq
    %v1589 = vshrl.u32 %v1588, 7
    %v1590 = vsub.s32 %v1587, %v1589
    %v1591 = vrot.slane %v1583, %v1590
    %v1593 = vunpack.c.l.s4 1983009808
    %v1594 = vunpack.c.0.s8 %v1593
    %v1595 = vlaneseq
    %v1596 = vshrl.u32 %v1595, 7
    %v1597 = vsub.s32 %v1594, %v1596
    %v1598 = vrot.slane %v1584, %v1597
    %v1599 = vcombine.low %v144, %v166
    %v1600 = vcombine.high %v144, %v166
    %v1602 = vunpack.c.l.s4 1983009808
    %v1603 = vunpack.c.0.s8 %v1602
    %v1604 = vlaneseq
    %v1605 = vshrl.u32 %v1604, 7
    %v1606 = vsub.s32 %v1603, %v1605
    %v1607 = vrot.slane %v1599, %v1606
    %v1609 = vunpack.c.l.s4 1983009808
    %v1610 = vunpack.c.0.s8 %v1609
    %v1611 = vlaneseq
    %v1612 = vshrl.u32 %v1611, 7
    %v1613 = vsub.s32 %v1610, %v1612
    %v1614 = vrot.slane %v1600, %v1613
    %v1615 = vcombine.low %v177, %v199
    %v1616 = vcombine.high %v177, %v199
    %v1618 = vunpack.c.l.s4 1983009808
    %v1619 = vunpack.c.0.s8 %v1618
    %v1620 = vlaneseq
    %v1621 = vshrl.u32 %v1620, 7
    %v1622 = vsub.s32 %v1619, %v1621
    %v1623 = vrot.slane %v1615, %v1622
    %v1625 = vunpack.c.l.s4 1983009808
    %v1626 = vunpack.c.0.s8 %v1625
    %v1627 = vlaneseq
    %v1628 = vshrl.u32 %v1627, 7
    %v1629 = vsub.s32 %v1626, %v1628
    %v1630 = vrot.slane %v1616, %v1629
    %v1631 = vcombine.low %v188, %v210
    %v1632 = vcombine.high %v188, %v210
    %v1634 = vunpack.c.l.s4 1983009808
    %v1635 = vunpack.c.0.s8 %v1634
    %v1636 = vlaneseq
    %v1637 = vshrl.u32 %v1636, 7
    %v1638 = vsub.s32 %v1635, %v1637
    %v1639 = vrot.slane %v1631, %v1638
    %v1641 = vunpack.c.l.s4 1983009808
    %v1642 = vunpack.c.0.s8 %v1641
    %v1643 = vlaneseq
    %v1644 = vshrl.u32 %v1643, 7
    %v1645 = vsub.s32 %v1642, %v1644
    %v1646 = vrot.slane %v1632, %v1645
    %v1647 = vcombine.low %v1591, %v1607
    %v1648 = vcombine.high %v1591, %v1607
    %v1650 = vunpack.c.l.s4 1934713408
    %v1651 = vunpack.c.0.s8 %v1650
    %v1652 = vlaneseq
    %v1653 = vshrl.u32 %v1652, 7
    %v1654 = vsub.s32 %v1651, %v1653
    %v1655 = vrot.slane %v1647, %v1654
    %v1657 = vunpack.c.l.s4 1934713408
    %v1658 = vunpack.c.0.s8 %v1657
    %v1659 = vlaneseq
    %v1660 = vshrl.u32 %v1659, 7
    %v1661 = vsub.s32 %v1658, %v1660
    %v1662 = vrot.slane %v1648, %v1661
    %v1663 = vcombine.low %v1598, %v1614
    %v1664 = vcombine.high %v1598, %v1614
    %v1666 = vunpack.c.l.s4 1934713408
    %v1667 = vunpack.c.0.s8 %v1666
    %v1668 = vlaneseq
    %v1669 = vshrl.u32 %v1668, 7
    %v1670 = vsub.s32 %v1667, %v1669
    %v1671 = vrot.slane %v1663, %v1670
    %v1673 = vunpack.c.l.s4 1934713408
    %v1674 = vunpack.c.0.s8 %v1673
    %v1675 = vlaneseq
    %v1676 = vshrl.u32 %v1675, 7
    %v1677 = vsub.s32 %v1674, %v1676
    %v1678 = vrot.slane %v1664, %v1677
    %v1679 = vcombine.low %v1623, %v1639
    %v1680 = vcombine.high %v1623, %v1639
    %v1682 = vunpack.c.l.s4 1934713408
    %v1683 = vunpack.c.0.s8 %v1682
    %v1684 = vlaneseq
    %v1685 = vshrl.u32 %v1684, 7
    %v1686 = vsub.s32 %v1683, %v1685
    %v1687 = vrot.slane %v1679, %v1686
    %v1689 = vunpack.c.l.s4 1934713408
    %v1690 = vunpack.c.0.s8 %v1689
    %v1691 = vlaneseq
    %v1692 = vshrl.u32 %v1691, 7
    %v1693 = vsub.s32 %v1690, %v1692
    %v1694 = vrot.slane %v1680, %v1693
    %v1695 = vcombine.low %v1630, %v1646
    %v1696 = vcombine.high %v1630, %v1646
    %v1698 = vunpack.c.l.s4 1934713408
    %v1699 = vunpack.c.0.s8 %v1698
    %v1700 = vlaneseq
    %v1701 = vshrl.u32 %v1700, 7
    %v1702 = vsub.s32 %v1699, %v1701
    %v1703 = vrot.slane %v1695, %v1702
    %v1705 = vunpack.c.l.s4 1934713408
    %v1706 = vunpack.c.0.s8 %v1705
    %v1707 = vlaneseq
    %v1708 = vshrl.u32 %v1707, 7
    %v1709 = vsub.s32 %v1706, %v1708
    %v1710 = vrot.slane %v1696, %v1709
    %v1711 = vcombine.low %v1655, %v1687
    %v1712 = vcombine.high %v1655, %v1687
    %v1713 = vcombine.low %v1662, %v1694
    %v1714 = vcombine.high %v1662, %v1694
    %v1715 = vcombine.low %v1671, %v1703
    %v1716 = vcombine.high %v1671, %v1703
    %v1717 = vcombine.low %v1678, %v1710
    %v1718 = vcombine.high %v1678, %v1710
    %v1719 = vcombine.low %v49, %v71
    %v1720 = vcombine.high %v49, %v71
    %v1722 = vunpack.c.l.s4 1983009808
    %v1723 = vunpack.c.0.s8 %v1722
    %v1724 = vlaneseq
    %v1725 = vshrl.u32 %v1724, 7
    %v1726 = vsub.s32 %v1723, %v1725
    %v1727 = vrot.slane %v1719, %v1726
    %v1729 = vunpack.c.l.s4 1983009808
    %v1730 = vunpack.c.0.s8 %v1729
    %v1731 = vlaneseq
    %v1732 = vshrl.u32 %v1731, 7
    %v1733 = vsub.s32 %v1730, %v1732
    %v1734 = vrot.slane %v1720, %v1733
    %v1735 = vcombine.low %v60, %v82
    %v1736 = vcombine.high %v60, %v82
    %v1738 = vunpack.c.l.s4 1983009808
    %v1739 = vunpack.c.0.s8 %v1738
    %v1740 = vlaneseq
    %v1741 = vshrl.u32 %v1740, 7
    %v1742 = vsub.s32 %v1739, %v1741
    %v1743 = vrot.slane %v1735, %v1742
    %v1745 = vunpack.c.l.s4 1983009808
    %v1746 = vunpack.c.0.s8 %v1745
    %v1747 = vlaneseq
    %v1748 = vshrl.u32 %v1747, 7
    %v1749 = vsub.s32 %v1746, %v1748
    %v1750 = vrot.slane %v1736, %v1749
    %v1751 = vcombine.low %v93, %v115
    %v1752 = vcombine.high %v93, %v115
    %v1754 = vunpack.c.l.s4 1983009808
    %v1755 = vunpack.c.0.s8 %v1754
    %v1756 = vlaneseq
    %v1757 = vshrl.u32 %v1756, 7
    %v1758 = vsub.s32 %v1755, %v1757
    %v1759 = vrot.slane %v1751, %v1758
    %v1761 = vunpack.c.l.s4 1983009808
    %v1762 = vunpack.c.0.s8 %v1761
    %v1763 = vlaneseq
    %v1764 = vshrl.u32 %v1763, 7
    %v1765 = vsub.s32 %v1762, %v1764
    %v1766 = vrot.slane %v1752, %v1765
    %v1767 = vcombine.low %v104, %v126
    %v1768 = vcombine.high %v104, %v126
    %v1770 = vunpack.c.l.s4 1983009808
    %v1771 = vunpack.c.0.s8 %v1770
    %v1772 = vlaneseq
    %v1773 = vshrl.u32 %v1772, 7
    %v1774 = vsub.s32 %v1771, %v1773
    %v1775 = vrot.slane %v1767, %v1774
    %v1777 = vunpack.c.l.s4 1983009808
    %v1778 = vunpack.c.0.s8 %v1777
    %v1779 = vlaneseq
    %v1780 = vshrl.u32 %v1779, 7
    %v1781 = vsub.s32 %v1778, %v1780
    %v1782 = vrot.slane %v1768, %v1781
    %v1783 = vcombine.low %v1727, %v1743
    %v1784 = vcombine.high %v1727, %v1743
    %v1786 = vunpack.c.l.s4 1934713408
    %v1787 = vunpack.c.0.s8 %v1786
    %v1788 = vlaneseq
    %v1789 = vshrl.u32 %v1788, 7
    %v1790 = vsub.s32 %v1787, %v1789
    %v1791 = vrot.slane %v1783, %v1790
    %v1793 = vunpack.c.l.s4 1934713408
    %v1794 = vunpack.c.0.s8 %v1793
    %v1795 = vlaneseq
    %v1796 = vshrl.u32 %v1795, 7
    %v1797 = vsub.s32 %v1794, %v1796
    %v1798 = vrot.slane %v1784, %v1797
    %v1799 = vcombine.low %v1734, %v1750
    %v1800 = vcombine.high %v1734, %v1750
    %v1802 = vunpack.c.l.s4 1934713408
    %v1803 = vunpack.c.0.s8 %v1802
    %v1804 = vlaneseq
    %v1805 = vshrl.u32 %v1804, 7
    %v1806 = vsub.s32 %v1803, %v1805
    %v1807 = vrot.slane %v1799, %v1806
    %v1809 = vunpack.c.l.s4 1934713408
    %v1810 = vunpack.c.0.s8 %v1809
    %v1811 = vlaneseq
    %v1812 = vshrl.u32 %v1811, 7
    %v1813 = vsub.s32 %v1810, %v1812
    %v1814 = vrot.slane %v1800, %v1813
    %v1815 = vcombine.low %v1759, %v1775
    %v1816 = vcombine.high %v1759, %v1775
    %v1818 = vunpack.c.l.s4 1934713408
    %v1819 = vunpack.c.0.s8 %v1818
    %v1820 = vlaneseq
    %v1821 = vshrl.u32 %v1820, 7
    %v1822 = vsub.s32 %v1819, %v1821
    %v1823 = vrot.slane %v1815, %v1822
    %v1825 = vunpack.c.l.s4 1934713408
    %v1826 = vunpack.c.0.s8 %v1825
    %v1827 = vlaneseq
    %v1828 = vshrl.u32 %v1827, 7
    %v1829 = vsub.s32 %v1826, %v1828
    %v1830 = vrot.slane %v1816, %v1829
    %v1831 = vcombine.low %v1766, %v1782
    %v1832 = vcombine.high %v1766, %v1782
    %v1834 = vunpack.c.l.s4 1934713408
    %v1835 = vunpack.c.0.s8 %v1834
    %v1836 = vlaneseq
    %v1837 = vshrl.u32 %v1836, 7
    %v1838 = vsub.s32 %v1835, %v1837
    %v1839 = vrot.slane %v1831, %v1838
    %v1841 = vunpack.c.l.s4 1934713408
    %v1842 = vunpack.c.0.s8 %v1841
    %v1843 = vlaneseq
    %v1844 = vshrl.u32 %v1843, 7
    %v1845 = vsub.s32 %v1842, %v1844
    %v1846 = vrot.slane %v1832, %v1845
    %v1847 = vcombine.low %v1791, %v1823
    %v1848 = vcombine.high %v1791, %v1823
    %v1849 = vcombine.low %v1798, %v1830
    %v1850 = vcombine.high %v1798, %v1830
    %v1851 = vcombine.low %v1807, %v1839
    %v1852 = vcombine.high %v1807, %v1839
    %v1853 = vcombine.low %v1814, %v1846
    %v1854 = vcombine.high %v1814, %v1846
    %v1855 = vcombine.low %v137, %v159
    %v1856 = vcombine.high %v137, %v159
    %v1858 = vunpack.c.l.s4 1983009808
    %v1859 = vunpack.c.0.s8 %v1858
    %v1860 = vlaneseq
    %v1861 = vshrl.u32 %v1860, 7
    %v1862 = vsub.s32 %v1859, %v1861
    %v1863 = vrot.slane %v1855, %v1862
    %v1865 = vunpack.c.l.s4 1983009808
    %v1866 = vunpack.c.0.s8 %v1865
    %v1867 = vlaneseq
    %v1868 = vshrl.u32 %v1867, 7
    %v1869 = vsub.s32 %v1866, %v1868
    %v1870 = vrot.slane %v1856, %v1869
    %v1871 = vcombine.low %v148, %v170
    %v1872 = vcombine.high %v148, %v170
    %v1874 = vunpack.c.l.s4 1983009808
    %v1875 = vunpack.c.0.s8 %v1874
    %v1876 = vlaneseq
    %v1877 = vshrl.u32 %v1876, 7
    %v1878 = vsub.s32 %v1875, %v1877
    %v1879 = vrot.slane %v1871, %v1878
    %v1881 = vunpack.c.l.s4 1983009808
    %v1882 = vunpack.c.0.s8 %v1881
    %v1883 = vlaneseq
    %v1884 = vshrl.u32 %v1883, 7
    %v1885 = vsub.s32 %v1882, %v1884
    %v1886 = vrot.slane %v1872, %v1885
    %v1887 = vcombine.low %v181, %v203
    %v1888 = vcombine.high %v181, %v203
    %v1890 = vunpack.c.l.s4 1983009808
    %v1891 = vunpack.c.0.s8 %v1890
    %v1892 = vlaneseq
    %v1893 = vshrl.u32 %v1892, 7
    %v1894 = vsub.s32 %v1891, %v1893
    %v1895 = vrot.slane %v1887, %v1894
    %v1897 = vunpack.c.l.s4 1983009808
    %v1898 = vunpack.c.0.s8 %v1897
    %v1899 = vlaneseq
    %v1900 = vshrl.u32 %v1899, 7
    %v1901 = vsub.s32 %v1898, %v1900
    %v1902 = vrot.slane %v1888, %v1901
    %v1903 = vcombine.low %v192, %v214
    %v1904 = vcombine.high %v192, %v214
    %v1906 = vunpack.c.l.s4 1983009808
    %v1907 = vunpack.c.0.s8 %v1906
    %v1908 = vlaneseq
    %v1909 = vshrl.u32 %v1908, 7
    %v1910 = vsub.s32 %v1907, %v1909
    %v1911 = vrot.slane %v1903, %v1910
    %v1913 = vunpack.c.l.s4 1983009808
    %v1914 = vunpack.c.0.s8 %v1913
    %v1915 = vlaneseq
    %v1916 = vshrl.u32 %v1915, 7
    %v1917 = vsub.s32 %v1914, %v1916
    %v1918 = vrot.slane %v1904, %v1917
    %v1919 = vcombine.low %v1863, %v1879
    %v1920 = vcombine.high %v1863, %v1879
    %v1922 = vunpack.c.l.s4 1934713408
    %v1923 = vunpack.c.0.s8 %v1922
    %v1924 = vlaneseq
    %v1925 = vshrl.u32 %v1924, 7
    %v1926 = vsub.s32 %v1923, %v1925
    %v1927 = vrot.slane %v1919, %v1926
    %v1929 = vunpack.c.l.s4 1934713408
    %v1930 = vunpack.c.0.s8 %v1929
    %v1931 = vlaneseq
    %v1932 = vshrl.u32 %v1931, 7
    %v1933 = vsub.s32 %v1930, %v1932
    %v1934 = vrot.slane %v1920, %v1933
    %v1935 = vcombine.low %v1870, %v1886
    %v1936 = vcombine.high %v1870, %v1886
    %v1938 = vunpack.c.l.s4 1934713408
    %v1939 = vunpack.c.0.s8 %v1938
    %v1940 = vlaneseq
    %v1941 = vshrl.u32 %v1940, 7
    %v1942 = vsub.s32 %v1939, %v1941
    %v1943 = vrot.slane %v1935, %v1942
    %v1945 = vunpack.c.l.s4 1934713408
    %v1946 = vunpack.c.0.s8 %v1945
    %v1947 = vlaneseq
    %v1948 = vshrl.u32 %v1947, 7
    %v1949 = vsub.s32 %v1946, %v1948
    %v1950 = vrot.slane %v1936, %v1949
    %v1951 = vcombine.low %v1895, %v1911
    %v1952 = vcombine.high %v1895, %v1911
    %v1954 = vunpack.c.l.s4 1934713408
    %v1955 = vunpack.c.0.s8 %v1954
    %v1956 = vlaneseq
    %v1957 = vshrl.u32 %v1956, 7
    %v1958 = vsub.s32 %v1955, %v1957
    %v1959 = vrot.slane %v1951, %v1958
    %v1961 = vunpack.c.l.s4 1934713408
    %v1962 = vunpack.c.0.s8 %v1961
    %v1963 = vlaneseq
    %v1964 = vshrl.u32 %v1963, 7
    %v1965 = vsub.s32 %v1962, %v1964
    %v1966 = vrot.slane %v1952, %v1965
    %v1967 = vcombine.low %v1902, %v1918
    %v1968 = vcombine.high %v1902, %v1918
    %v1970 = vunpack.c.l.s4 1934713408
    %v1971 = vunpack.c.0.s8 %v1970
    %v1972 = vlaneseq
    %v1973 = vshrl.u32 %v1972, 7
    %v1974 = vsub.s32 %v1971, %v1973
    %v1975 = vrot.slane %v1967, %v1974
    %v1977 = vunpack.c.l.s4 1934713408
    %v1978 = vunpack.c.0.s8 %v1977
    %v1979 = vlaneseq
    %v1980 = vshrl.u32 %v1979, 7
    %v1981 = vsub.s32 %v1978, %v1980
    %v1982 = vrot.slane %v1968, %v1981
    %v1983 = vcombine.low %v1927, %v1959
    %v1984 = vcombine.high %v1927, %v1959
    %v1985 = vcombine.low %v1934, %v1966
    %v1986 = vcombine.high %v1934, %v1966
    %v1987 = vcombine.low %v1943, %v1975
    %v1988 = vcombine.high %v1943, %v1975
    %v1989 = vcombine.low %v1950, %v1982
    %v1990 = vcombine.high %v1950, %v1982
    %v1991 = vcombine.low %v221, %v243
    %v1992 = vcombine.high %v221, %v243
    %v1994 = vunpack.c.l.s4 1983009808
    %v1995 = vunpack.c.0.s8 %v1994
    %v1996 = vlaneseq
    %v1997 = vshrl.u32 %v1996, 7
    %v1998 = vsub.s32 %v1995, %v1997
    %v1999 = vrot.slane %v1991, %v1998
    %v2001 = vunpack.c.l.s4 1983009808
    %v2002 = vunpack.c.0.s8 %v2001
    %v2003 = vlaneseq
    %v2004 = vshrl.u32 %v2003, 7
    %v2005 = vsub.s32 %v2002, %v2004
    %v2006 = vrot.slane %v1992, %v2005
    %v2007 = vcombine.low %v232, %v254
    %v2008 = vcombine.high %v232, %v254
    %v2010 = vunpack.c.l.s4 1983009808
    %v2011 = vunpack.c.0.s8 %v2010
    %v2012 = vlaneseq
    %v2013 = vshrl.u32 %v2012, 7
    %v2014 = vsub.s32 %v2011, %v2013
    %v2015 = vrot.slane %v2007, %v2014
    %v2017 = vunpack.c.l.s4 1983009808
    %v2018 = vunpack.c.0.s8 %v2017
    %v2019 = vlaneseq
    %v2020 = vshrl.u32 %v2019, 7
    %v2021 = vsub.s32 %v2018, %v2020
    %v2022 = vrot.slane %v2008, %v2021
    %v2023 = vcombine.low %v265, %v287
    %v2024 = vcombine.high %v265, %v287
    %v2026 = vunpack.c.l.s4 1983009808
    %v2027 = vunpack.c.0.s8 %v2026
    %v2028 = vlaneseq
    %v2029 = vshrl.u32 %v2028, 7
    %v2030 = vsub.s32 %v2027, %v2029
    %v2031 = vrot.slane %v2023, %v2030
    %v2033 = vunpack.c.l.s4 1983009808
    %v2034 = vunpack.c.0.s8 %v2033
    %v2035 = vlaneseq
    %v2036 = vshrl.u32 %v2035, 7
    %v2037 = vsub.s32 %v2034, %v2036
    %v2038 = vrot.slane %v2024, %v2037
    %v2039 = vcombine.low %v276, %v298
    %v2040 = vcombine.high %v276, %v298
    %v2042 = vunpack.c.l.s4 1983009808
    %v2043 = vunpack.c.0.s8 %v2042
    %v2044 = vlaneseq
    %v2045 = vshrl.u32 %v2044, 7
    %v2046 = vsub.s32 %v2043, %v2045
    %v2047 = vrot.slane %v2039, %v2046
    %v2049 = vunpack.c.l.s4 1983009808
    %v2050 = vunpack.c.0.s8 %v2049
    %v2051 = vlaneseq
    %v2052 = vshrl.u32 %v2051, 7
    %v2053 = vsub.s32 %v2050, %v2052
    %v2054 = vrot.slane %v2040, %v2053
    %v2055 = vcombine.low %v1999, %v2015
    %v2056 = vcombine.high %v1999, %v2015
    %v2058 = vunpack.c.l.s4 1934713408
    %v2059 = vunpack.c.0.s8 %v2058
    %v2060 = vlaneseq
    %v2061 = vshrl.u32 %v2060, 7
    %v2062 = vsub.s32 %v2059, %v2061
    %v2063 = vrot.slane %v2055, %v2062
    %v2065 = vunpack.c.l.s4 1934713408
    %v2066 = vunpack.c.0.s8 %v2065
    %v2067 = vlaneseq
    %v2068 = vshrl.u32 %v2067, 7
    %v2069 = vsub.s32 %v2066, %v2068
    %v2070 = vrot.slane %v2056, %v2069
    %v2071 = vcombine.low %v2006, %v2022
    %v2072 = vcombine.high %v2006, %v2022
    %v2074 = vunpack.c.l.s4 1934713408
    %v2075 = vunpack.c.0.s8 %v2074
    %v2076 = vlaneseq
    %v2077 = vshrl.u32 %v2076, 7
    %v2078 = vsub.s32 %v2075, %v2077
    %v2079 = vrot.slane %v2071, %v2078
    %v2081 = vunpack.c.l.s4 1934713408
    %v2082 = vunpack.c.0.s8 %v2081
    %v2083 = vlaneseq
    %v2084 = vshrl.u32 %v2083, 7
    %v2085 = vsub.s32 %v2082, %v2084
    %v2086 = vrot.slane %v2072, %v2085
    %v2087 = vcombine.low %v2031, %v2047
    %v2088 = vcombine.high %v2031, %v2047
    %v2090 = vunpack.c.l.s4 1934713408
    %v2091 = vunpack.c.0.s8 %v2090
    %v2092 = vlaneseq
    %v2093 = vshrl.u32 %v2092, 7
    %v2094 = vsub.s32 %v2091, %v2093
    %v2095 = vrot.slane %v2087, %v2094
    %v2097 = vunpack.c.l.s4 1934713408
    %v2098 = vunpack.c.0.s8 %v2097
    %v2099 = vlaneseq
    %v2100 = vshrl.u32 %v2099, 7
    %v2101 = vsub.s32 %v2098, %v2100
    %v2102 = vrot.slane %v2088, %v2101
    %v2103 = vcombine.low %v2038, %v2054
    %v2104 = vcombine.high %v2038, %v2054
    %v2106 = vunpack.c.l.s4 1934713408
    %v2107 = vunpack.c.0.s8 %v2106
    %v2108 = vlaneseq
    %v2109 = vshrl.u32 %v2108, 7
    %v2110 = vsub.s32 %v2107, %v2109
    %v2111 = vrot.slane %v2103, %v2110
    %v2113 = vunpack.c.l.s4 1934713408
    %v2114 = vunpack.c.0.s8 %v2113
    %v2115 = vlaneseq
    %v2116 = vshrl.u32 %v2115, 7
    %v2117 = vsub.s32 %v2114, %v2116
    %v2118 = vrot.slane %v2104, %v2117
    %v2119 = vcombine.low %v2063, %v2095
    %v2120 = vcombine.high %v2063, %v2095
    %v2121 = vcombine.low %v2070, %v2102
    %v2122 = vcombine.high %v2070, %v2102
    %v2123 = vcombine.low %v2079, %v2111
    %v2124 = vcombine.high %v2079, %v2111
    %v2125 = vcombine.low %v2086, %v2118
    %v2126 = vcombine.high %v2086, %v2118
    %v2127 = vcombine.low %v309, %v331
    %v2128 = vcombine.high %v309, %v331
    %v2130 = vunpack.c.l.s4 1983009808
    %v2131 = vunpack.c.0.s8 %v2130
    %v2132 = vlaneseq
    %v2133 = vshrl.u32 %v2132, 7
    %v2134 = vsub.s32 %v2131, %v2133
    %v2135 = vrot.slane %v2127, %v2134
    %v2137 = vunpack.c.l.s4 1983009808
    %v2138 = vunpack.c.0.s8 %v2137
    %v2139 = vlaneseq
    %v2140 = vshrl.u32 %v2139, 7
    %v2141 = vsub.s32 %v2138, %v2140
    %v2142 = vrot.slane %v2128, %v2141
    %v2143 = vcombine.low %v320, %v342
    %v2144 = vcombine.high %v320, %v342
    %v2146 = vunpack.c.l.s4 1983009808
    %v2147 = vunpack.c.0.s8 %v2146
    %v2148 = vlaneseq
    %v2149 = vshrl.u32 %v2148, 7
    %v2150 = vsub.s32 %v2147, %v2149
    %v2151 = vrot.slane %v2143, %v2150
    %v2153 = vunpack.c.l.s4 1983009808
    %v2154 = vunpack.c.0.s8 %v2153
    %v2155 = vlaneseq
    %v2156 = vshrl.u32 %v2155, 7
    %v2157 = vsub.s32 %v2154, %v2156
    %v2158 = vrot.slane %v2144, %v2157
    %v2159 = vcombine.low %v353, %v375
    %v2160 = vcombine.high %v353, %v375
    %v2162 = vunpack.c.l.s4 1983009808
    %v2163 = vunpack.c.0.s8 %v2162
    %v2164 = vlaneseq
    %v2165 = vshrl.u32 %v2164, 7
    %v2166 = vsub.s32 %v2163, %v2165
    %v2167 = vrot.slane %v2159, %v2166
    %v2169 = vunpack.c.l.s4 1983009808
    %v2170 = vunpack.c.0.s8 %v2169
    %v2171 = vlaneseq
    %v2172 = vshrl.u32 %v2171, 7
    %v2173 = vsub.s32 %v2170, %v2172
    %v2174 = vrot.slane %v2160, %v2173
    %v2175 = vcombine.low %v364, %v386
    %v2176 = vcombine.high %v364, %v386
    %v2178 = vunpack.c.l.s4 1983009808
    %v2179 = vunpack.c.0.s8 %v2178
    %v2180 = vlaneseq
    %v2181 = vshrl.u32 %v2180, 7
    %v2182 = vsub.s32 %v2179, %v2181
    %v2183 = vrot.slane %v2175, %v2182
    %v2185 = vunpack.c.l.s4 1983009808
    %v2186 = vunpack.c.0.s8 %v2185
    %v2187 = vlaneseq
    %v2188 = vshrl.u32 %v2187, 7
    %v2189 = vsub.s32 %v2186, %v2188
    %v2190 = vrot.slane %v2176, %v2189
    %v2191 = vcombine.low %v2135, %v2151
    %v2192 = vcombine.high %v2135, %v2151
    %v2194 = vunpack.c.l.s4 1934713408
    %v2195 = vunpack.c.0.s8 %v2194
    %v2196 = vlaneseq
    %v2197 = vshrl.u32 %v2196, 7
    %v2198 = vsub.s32 %v2195, %v2197
    %v2199 = vrot.slane %v2191, %v2198
    %v2201 = vunpack.c.l.s4 1934713408
    %v2202 = vunpack.c.0.s8 %v2201
    %v2203 = vlaneseq
    %v2204 = vshrl.u32 %v2203, 7
    %v2205 = vsub.s32 %v2202, %v2204
    %v2206 = vrot.slane %v2192, %v2205
    %v2207 = vcombine.low %v2142, %v2158
    %v2208 = vcombine.high %v2142, %v2158
    %v2210 = vunpack.c.l.s4 1934713408
    %v2211 = vunpack.c.0.s8 %v2210
    %v2212 = vlaneseq
    %v2213 = vshrl.u32 %v2212, 7
    %v2214 = vsub.s32 %v2211, %v2213
    %v2215 = vrot.slane %v2207, %v2214
    %v2217 = vunpack.c.l.s4 1934713408
    %v2218 = vunpack.c.0.s8 %v2217
    %v2219 = vlaneseq
    %v2220 = vshrl.u32 %v2219, 7
    %v2221 = vsub.s32 %v2218, %v2220
    %v2222 = vrot.slane %v2208, %v2221
    %v2223 = vcombine.low %v2167, %v2183
    %v2224 = vcombine.high %v2167, %v2183
    %v2226 = vunpack.c.l.s4 1934713408
    %v2227 = vunpack.c.0.s8 %v2226
    %v2228 = vlaneseq
    %v2229 = vshrl.u32 %v2228, 7
    %v2230 = vsub.s32 %v2227, %v2229
    %v2231 = vrot.slane %v2223, %v2230
    %v2233 = vunpack.c.l.s4 1934713408
    %v2234 = vunpack.c.0.s8 %v2233
    %v2235 = vlaneseq
    %v2236 = vshrl.u32 %v2235, 7
    %v2237 = vsub.s32 %v2234, %v2236
    %v2238 = vrot.slane %v2224, %v2237
    %v2239 = vcombine.low %v2174, %v2190
    %v2240 = vcombine.high %v2174, %v2190
    %v2242 = vunpack.c.l.s4 1934713408
    %v2243 = vunpack.c.0.s8 %v2242
    %v2244 = vlaneseq
    %v2245 = vshrl.u32 %v2244, 7
    %v2246 = vsub.s32 %v2243, %v2245
    %v2247 = vrot.slane %v2239, %v2246
    %v2249 = vunpack.c.l.s4 1934713408
    %v2250 = vunpack.c.0.s8 %v2249
    %v2251 = vlaneseq
    %v2252 = vshrl.u32 %v2251, 7
    %v2253 = vsub.s32 %v2250, %v2252
    %v2254 = vrot.slane %v2240, %v2253
    %v2255 = vcombine.low %v2199, %v2231
    %v2256 = vcombine.high %v2199, %v2231
    %v2257 = vcombine.low %v2206, %v2238
    %v2258 = vcombine.high %v2206, %v2238
    %v2259 = vcombine.low %v2215, %v2247
    %v2260 = vcombine.high %v2215, %v2247
    %v2261 = vcombine.low %v2222, %v2254
    %v2262 = vcombine.high %v2222, %v2254
    %v2263 = vcombine.low %v225, %v247
    %v2264 = vcombine.high %v225, %v247
    %v2266 = vunpack.c.l.s4 1983009808
    %v2267 = vunpack.c.0.s8 %v2266
    %v2268 = vlaneseq
    %v2269 = vshrl.u32 %v2268, 7
    %v2270 = vsub.s32 %v2267, %v2269
    %v2271 = vrot.slane %v2263, %v2270
    %v2273 = vunpack.c.l.s4 1983009808
    %v2274 = vunpack.c.0.s8 %v2273
    %v2275 = vlaneseq
    %v2276 = vshrl.u32 %v2275, 7
    %v2277 = vsub.s32 %v2274, %v2276
    %v2278 = vrot.slane %v2264, %v2277
    %v2279 = vcombine.low %v236, %v258
    %v2280 = vcombine.high %v236, %v258
    %v2282 = vunpack.c.l.s4 1983009808
    %v2283 = vunpack.c.0.s8 %v2282
    %v2284 = vlaneseq
    %v2285 = vshrl.u32 %v2284, 7
    %v2286 = vsub.s32 %v2283, %v2285
    %v2287 = vrot.slane %v2279, %v2286
    %v2289 = vunpack.c.l.s4 1983009808
    %v2290 = vunpack.c.0.s8 %v2289
    %v2291 = vlaneseq
    %v2292 = vshrl.u32 %v2291, 7
    %v2293 = vsub.s32 %v2290, %v2292
    %v2294 = vrot.slane %v2280, %v2293
    %v2295 = vcombine.low %v269, %v291
    %v2296 = vcombine.high %v269, %v291
    %v2298 = vunpack.c.l.s4 1983009808
    %v2299 = vunpack.c.0.s8 %v2298
    %v2300 = vlaneseq
    %v2301 = vshrl.u32 %v2300, 7
    %v2302 = vsub.s32 %v2299, %v2301
    %v2303 = vrot.slane %v2295, %v2302
    %v2305 = vunpack.c.l.s4 1983009808
    %v2306 = vunpack.c.0.s8 %v2305
    %v2307 = vlaneseq
    %v2308 = vshrl.u32 %v2307, 7
    %v2309 = vsub.s32 %v2306, %v2308
    %v2310 = vrot.slane %v2296, %v2309
    %v2311 = vcombine.low %v280, %v302
    %v2312 = vcombine.high %v280, %v302
    %v2314 = vunpack.c.l.s4 1983009808
    %v2315 = vunpack.c.0.s8 %v2314
    %v2316 = vlaneseq
    %v2317 = vshrl.u32 %v2316, 7
    %v2318 = vsub.s32 %v2315, %v2317
    %v2319 = vrot.slane %v2311, %v2318
    %v2321 = vunpack.c.l.s4 1983009808
    %v2322 = vunpack.c.0.s8 %v2321
    %v2323 = vlaneseq
    %v2324 = vshrl.u32 %v2323, 7
    %v2325 = vsub.s32 %v2322, %v2324
    %v2326 = vrot.slane %v2312, %v2325
    %v2327 = vcombine.low %v2271, %v2287
    %v2328 = vcombine.high %v2271, %v2287
    %v2330 = vunpack.c.l.s4 1934713408
    %v2331 = vunpack.c.0.s8 %v2330
    %v2332 = vlaneseq
    %v2333 = vshrl.u32 %v2332, 7
    %v2334 = vsub.s32 %v2331, %v2333
    %v2335 = vrot.slane %v2327, %v2334
    %v2337 = vunpack.c.l.s4 1934713408
    %v2338 = vunpack.c.0.s8 %v2337
    %v2339 = vlaneseq
    %v2340 = vshrl.u32 %v2339, 7
    %v2341 = vsub.s32 %v2338, %v2340
    %v2342 = vrot.slane %v2328, %v2341
    %v2343 = vcombine.low %v2278, %v2294
    %v2344 = vcombine.high %v2278, %v2294
    %v2346 = vunpack.c.l.s4 1934713408
    %v2347 = vunpack.c.0.s8 %v2346
    %v2348 = vlaneseq
    %v2349 = vshrl.u32 %v2348, 7
    %v2350 = vsub.s32 %v2347, %v2349
    %v2351 = vrot.slane %v2343, %v2350
    %v2353 = vunpack.c.l.s4 1934713408
    %v2354 = vunpack.c.0.s8 %v2353
    %v2355 = vlaneseq
    %v2356 = vshrl.u32 %v2355, 7
    %v2357 = vsub.s32 %v2354, %v2356
    %v2358 = vrot.slane %v2344, %v2357
    %v2359 = vcombine.low %v2303, %v2319
    %v2360 = vcombine.high %v2303, %v2319
    %v2362 = vunpack.c.l.s4 1934713408
    %v2363 = vunpack.c.0.s8 %v2362
    %v2364 = vlaneseq
    %v2365 = vshrl.u32 %v2364, 7
    %v2366 = vsub.s32 %v2363, %v2365
    %v2367 = vrot.slane %v2359, %v2366
    %v2369 = vunpack.c.l.s4 1934713408
    %v2370 = vunpack.c.0.s8 %v2369
    %v2371 = vlaneseq
    %v2372 = vshrl.u32 %v2371, 7
    %v2373 = vsub.s32 %v2370, %v2372
    %v2374 = vrot.slane %v2360, %v2373
    %v2375 = vcombine.low %v2310, %v2326
    %v2376 = vcombine.high %v2310, %v2326
    %v2378 = vunpack.c.l.s4 1934713408
    %v2379 = vunpack.c.0.s8 %v2378
    %v2380 = vlaneseq
    %v2381 = vshrl.u32 %v2380, 7
    %v2382 = vsub.s32 %v2379, %v2381
    %v2383 = vrot.slane %v2375, %v2382
    %v2385 = vunpack.c.l.s4 1934713408
    %v2386 = vunpack.c.0.s8 %v2385
    %v2387 = vlaneseq
    %v2388 = vshrl.u32 %v2387, 7
    %v2389 = vsub.s32 %v2386, %v2388
    %v2390 = vrot.slane %v2376, %v2389
    %v2391 = vcombine.low %v2335, %v2367
    %v2392 = vcombine.high %v2335, %v2367
    %v2393 = vcombine.low %v2342, %v2374
    %v2394 = vcombine.high %v2342, %v2374
    %v2395 = vcombine.low %v2351, %v2383
    %v2396 = vcombine.high %v2351, %v2383
    %v2397 = vcombine.low %v2358, %v2390
    %v2398 = vcombine.high %v2358, %v2390
    %v2399 = vcombine.low %v313, %v335
    %v2400 = vcombine.high %v313, %v335
    %v2402 = vunpack.c.l.s4 1983009808
    %v2403 = vunpack.c.0.s8 %v2402
    %v2404 = vlaneseq
    %v2405 = vshrl.u32 %v2404, 7
    %v2406 = vsub.s32 %v2403, %v2405
    %v2407 = vrot.slane %v2399, %v2406
    %v2409 = vunpack.c.l.s4 1983009808
    %v2410 = vunpack.c.0.s8 %v2409
    %v2411 = vlaneseq
    %v2412 = vshrl.u32 %v2411, 7
    %v2413 = vsub.s32 %v2410, %v2412
    %v2414 = vrot.slane %v2400, %v2413
    %v2415 = vcombine.low %v324, %v346
    %v2416 = vcombine.high %v324, %v346
    %v2418 = vunpack.c.l.s4 1983009808
    %v2419 = vunpack.c.0.s8 %v2418
    %v2420 = vlaneseq
    %v2421 = vshrl.u32 %v2420, 7
    %v2422 = vsub.s32 %v2419, %v2421
    %v2423 = vrot.slane %v2415, %v2422
    %v2425 = vunpack.c.l.s4 1983009808
    %v2426 = vunpack.c.0.s8 %v2425
    %v2427 = vlaneseq
    %v2428 = vshrl.u32 %v2427, 7
    %v2429 = vsub.s32 %v2426, %v2428
    %v2430 = vrot.slane %v2416, %v2429
    %v2431 = vcombine.low %v357, %v379
    %v2432 = vcombine.high %v357, %v379
    %v2434 = vunpack.c.l.s4 1983009808
    %v2435 = vunpack.c.0.s8 %v2434
    %v2436 = vlaneseq
    %v2437 = vshrl.u32 %v2436, 7
    %v2438 = vsub.s32 %v2435, %v2437
    %v2439 = vrot.slane %v2431, %v2438
    %v2441 = vunpack.c.l.s4 1983009808
    %v2442 = vunpack.c.0.s8 %v2441
    %v2443 = vlaneseq
    %v2444 = vshrl.u32 %v2443, 7
    %v2445 = vsub.s32 %v2442, %v2444
    %v2446 = vrot.slane %v2432, %v2445
    %v2447 = vcombine.low %v368, %v390
    %v2448 = vcombine.high %v368, %v390
    %v2450 = vunpack.c.l.s4 1983009808
    %v2451 = vunpack.c.0.s8 %v2450
    %v2452 = vlaneseq
    %v2453 = vshrl.u32 %v2452, 7
    %v2454 = vsub.s32 %v2451, %v2453
    %v2455 = vrot.slane %v2447, %v2454
    %v2457 = vunpack.c.l.s4 1983009808
    %v2458 = vunpack.c.0.s8 %v2457
    %v2459 = vlaneseq
    %v2460 = vshrl.u32 %v2459, 7
    %v2461 = vsub.s32 %v2458, %v2460
    %v2462 = vrot.slane %v2448, %v2461
    %v2463 = vcombine.low %v2407, %v2423
    %v2464 = vcombine.high %v2407, %v2423
    %v2466 = vunpack.c.l.s4 1934713408
    %v2467 = vunpack.c.0.s8 %v2466
    %v2468 = vlaneseq
    %v2469 = vshrl.u32 %v2468, 7
    %v2470 = vsub.s32 %v2467, %v2469
    %v2471 = vrot.slane %v2463, %v2470
    %v2473 = vunpack.c.l.s4 1934713408
    %v2474 = vunpack.c.0.s8 %v2473
    %v2475 = vlaneseq
    %v2476 = vshrl.u32 %v2475, 7
    %v2477 = vsub.s32 %v2474, %v2476
    %v2478 = vrot.slane %v2464, %v2477
    %v2479 = vcombine.low %v2414, %v2430
    %v2480 = vcombine.high %v2414, %v2430
    %v2482 = vunpack.c.l.s4 1934713408
    %v2483 = vunpack.c.0.s8 %v2482
    %v2484 = vlaneseq
    %v2485 = vshrl.u32 %v2484, 7
    %v2486 = vsub.s32 %v2483, %v2485
    %v2487 = vrot.slane %v2479, %v2486
    %v2489 = vunpack.c.l.s4 1934713408
    %v2490 = vunpack.c.0.s8 %v2489
    %v2491 = vlaneseq
    %v2492 = vshrl.u32 %v2491, 7
    %v2493 = vsub.s32 %v2490, %v2492
    %v2494 = vrot.slane %v2480, %v2493
    %v2495 = vcombine.low %v2439, %v2455
    %v2496 = vcombine.high %v2439, %v2455
    %v2498 = vunpack.c.l.s4 1934713408
    %v2499 = vunpack.c.0.s8 %v2498
    %v2500 = vlaneseq
    %v2501 = vshrl.u32 %v2500, 7
    %v2502 = vsub.s32 %v2499, %v2501
    %v2503 = vrot.slane %v2495, %v2502
    %v2505 = vunpack.c.l.s4 1934713408
    %v2506 = vunpack.c.0.s8 %v2505
    %v2507 = vlaneseq
    %v2508 = vshrl.u32 %v2507, 7
    %v2509 = vsub.s32 %v2506, %v2508
    %v2510 = vrot.slane %v2496, %v2509
    %v2511 = vcombine.low %v2446, %v2462
    %v2512 = vcombine.high %v2446, %v2462
    %v2514 = vunpack.c.l.s4 1934713408
    %v2515 = vunpack.c.0.s8 %v2514
    %v2516 = vlaneseq
    %v2517 = vshrl.u32 %v2516, 7
    %v2518 = vsub.s32 %v2515, %v2517
    %v2519 = vrot.slane %v2511, %v2518
    %v2521 = vunpack.c.l.s4 1934713408
    %v2522 = vunpack.c.0.s8 %v2521
    %v2523 = vlaneseq
    %v2524 = vshrl.u32 %v2523, 7
    %v2525 = vsub.s32 %v2522, %v2524
    %v2526 = vrot.slane %v2512, %v2525
    %v2527 = vcombine.low %v2471, %v2503
    %v2528 = vcombine.high %v2471, %v2503
    %v2529 = vcombine.low %v2478, %v2510
    %v2530 = vcombine.high %v2478, %v2510
    %v2531 = vcombine.low %v2487, %v2519
    %v2532 = vcombine.high %v2487, %v2519
    %v2533 = vcombine.low %v2494, %v2526
    %v2534 = vcombine.high %v2494, %v2526
    %v2535 = vcombine.low %v397, %v419
    %v2536 = vcombine.high %v397, %v419
    %v2538 = vunpack.c.l.s4 1983009808
    %v2539 = vunpack.c.0.s8 %v2538
    %v2540 = vlaneseq
    %v2541 = vshrl.u32 %v2540, 7
    %v2542 = vsub.s32 %v2539, %v2541
    %v2543 = vrot.slane %v2535, %v2542
    %v2545 = vunpack.c.l.s4 1983009808
    %v2546 = vunpack.c.0.s8 %v2545
    %v2547 = vlaneseq
    %v2548 = vshrl.u32 %v2547, 7
    %v2549 = vsub.s32 %v2546, %v2548
    %v2550 = vrot.slane %v2536, %v2549
    %v2551 = vcombine.low %v408, %v430
    %v2552 = vcombine.high %v408, %v430
    %v2554 = vunpack.c.l.s4 1983009808
    %v2555 = vunpack.c.0.s8 %v2554
    %v2556 = vlaneseq
    %v2557 = vshrl.u32 %v2556, 7
    %v2558 = vsub.s32 %v2555, %v2557
    %v2559 = vrot.slane %v2551, %v2558
    %v2561 = vunpack.c.l.s4 1983009808
    %v2562 = vunpack.c.0.s8 %v2561
    %v2563 = vlaneseq
    %v2564 = vshrl.u32 %v2563, 7
    %v2565 = vsub.s32 %v2562, %v2564
    %v2566 = vrot.slane %v2552, %v2565
    %v2567 = vcombine.low %v441, %v463
    %v2568 = vcombine.high %v441, %v463
    %v2570 = vunpack.c.l.s4 1983009808
    %v2571 = vunpack.c.0.s8 %v2570
    %v2572 = vlaneseq
    %v2573 = vshrl.u32 %v2572, 7
    %v2574 = vsub.s32 %v2571, %v2573
    %v2575 = vrot.slane %v2567, %v2574
    %v2577 = vunpack.c.l.s4 1983009808
    %v2578 = vunpack.c.0.s8 %v2577
    %v2579 = vlaneseq
    %v2580 = vshrl.u32 %v2579, 7
    %v2581 = vsub.s32 %v2578, %v2580
    %v2582 = vrot.slane %v2568, %v2581
    %v2583 = vcombine.low %v452, %v474
    %v2584 = vcombine.high %v452, %v474
    %v2586 = vunpack.c.l.s4 1983009808
    %v2587 = vunpack.c.0.s8 %v2586
    %v2588 = vlaneseq
    %v2589 = vshrl.u32 %v2588, 7
    %v2590 = vsub.s32 %v2587, %v2589
    %v2591 = vrot.slane %v2583, %v2590
    %v2593 = vunpack.c.l.s4 1983009808
    %v2594 = vunpack.c.0.s8 %v2593
    %v2595 = vlaneseq
    %v2596 = vshrl.u32 %v2595, 7
    %v2597 = vsub.s32 %v2594, %v2596
    %v2598 = vrot.slane %v2584, %v2597
    %v2599 = vcombine.low %v2543, %v2559
    %v2600 = vcombine.high %v2543, %v2559
    %v2602 = vunpack.c.l.s4 1934713408
    %v2603 = vunpack.c.0.s8 %v2602
    %v2604 = vlaneseq
    %v2605 = vshrl.u32 %v2604, 7
    %v2606 = vsub.s32 %v2603, %v2605
    %v2607 = vrot.slane %v2599, %v2606
    %v2609 = vunpack.c.l.s4 1934713408
    %v2610 = vunpack.c.0.s8 %v2609
    %v2611 = vlaneseq
    %v2612 = vshrl.u32 %v2611, 7
    %v2613 = vsub.s32 %v2610, %v2612
    %v2614 = vrot.slane %v2600, %v2613
    %v2615 = vcombine.low %v2550, %v2566
    %v2616 = vcombine.high %v2550, %v2566
    %v2618 = vunpack.c.l.s4 1934713408
    %v2619 = vunpack.c.0.s8 %v2618
    %v2620 = vlaneseq
    %v2621 = vshrl.u32 %v2620, 7
    %v2622 = vsub.s32 %v2619, %v2621
    %v2623 = vrot.slane %v2615, %v2622
    %v2625 = vunpack.c.l.s4 1934713408
    %v2626 = vunpack.c.0.s8 %v2625
    %v2627 = vlaneseq
    %v2628 = vshrl.u32 %v2627, 7
    %v2629 = vsub.s32 %v2626, %v2628
    %v2630 = vrot.slane %v2616, %v2629
    %v2631 = vcombine.low %v2575, %v2591
    %v2632 = vcombine.high %v2575, %v2591
    %v2634 = vunpack.c.l.s4 1934713408
    %v2635 = vunpack.c.0.s8 %v2634
    %v2636 = vlaneseq
    %v2637 = vshrl.u32 %v2636, 7
    %v2638 = vsub.s32 %v2635, %v2637
    %v2639 = vrot.slane %v2631, %v2638
    %v2641 = vunpack.c.l.s4 1934713408
    %v2642 = vunpack.c.0.s8 %v2641
    %v2643 = vlaneseq
    %v2644 = vshrl.u32 %v2643, 7
    %v2645 = vsub.s32 %v2642, %v2644
    %v2646 = vrot.slane %v2632, %v2645
    %v2647 = vcombine.low %v2582, %v2598
    %v2648 = vcombine.high %v2582, %v2598
    %v2650 = vunpack.c.l.s4 1934713408
    %v2651 = vunpack.c.0.s8 %v2650
    %v2652 = vlaneseq
    %v2653 = vshrl.u32 %v2652, 7
    %v2654 = vsub.s32 %v2651, %v2653
    %v2655 = vrot.slane %v2647, %v2654
    %v2657 = vunpack.c.l.s4 1934713408
    %v2658 = vunpack.c.0.s8 %v2657
    %v2659 = vlaneseq
    %v2660 = vshrl.u32 %v2659, 7
    %v2661 = vsub.s32 %v2658, %v2660
    %v2662 = vrot.slane %v2648, %v2661
    %v2663 = vcombine.low %v2607, %v2639
    %v2664 = vcombine.high %v2607, %v2639
    %v2665 = vcombine.low %v2614, %v2646
    %v2666 = vcombine.high %v2614, %v2646
    %v2667 = vcombine.low %v2623, %v2655
    %v2668 = vcombine.high %v2623, %v2655
    %v2669 = vcombine.low %v2630, %v2662
    %v2670 = vcombine.high %v2630, %v2662
    %v2671 = vcombine.low %v485, %v507
    %v2672 = vcombine.high %v485, %v507
    %v2674 = vunpack.c.l.s4 1983009808
    %v2675 = vunpack.c.0.s8 %v2674
    %v2676 = vlaneseq
    %v2677 = vshrl.u32 %v2676, 7
    %v2678 = vsub.s32 %v2675, %v2677
    %v2679 = vrot.slane %v2671, %v2678
    %v2681 = vunpack.c.l.s4 1983009808
    %v2682 = vunpack.c.0.s8 %v2681
    %v2683 = vlaneseq
    %v2684 = vshrl.u32 %v2683, 7
    %v2685 = vsub.s32 %v2682, %v2684
    %v2686 = vrot.slane %v2672, %v2685
    %v2687 = vcombine.low %v496, %v518
    %v2688 = vcombine.high %v496, %v518
    %v2690 = vunpack.c.l.s4 1983009808
    %v2691 = vunpack.c.0.s8 %v2690
    %v2692 = vlaneseq
    %v2693 = vshrl.u32 %v2692, 7
    %v2694 = vsub.s32 %v2691, %v2693
    %v2695 = vrot.slane %v2687, %v2694
    %v2697 = vunpack.c.l.s4 1983009808
    %v2698 = vunpack.c.0.s8 %v2697
    %v2699 = vlaneseq
    %v2700 = vshrl.u32 %v2699, 7
    %v2701 = vsub.s32 %v2698, %v2700
    %v2702 = vrot.slane %v2688, %v2701
    %v2703 = vcombine.low %v529, %v551
    %v2704 = vcombine.high %v529, %v551
    %v2706 = vunpack.c.l.s4 1983009808
    %v2707 = vunpack.c.0.s8 %v2706
    %v2708 = vlaneseq
    %v2709 = vshrl.u32 %v2708, 7
    %v2710 = vsub.s32 %v2707, %v2709
    %v2711 = vrot.slane %v2703, %v2710
    %v2713 = vunpack.c.l.s4 1983009808
    %v2714 = vunpack.c.0.s8 %v2713
    %v2715 = vlaneseq
    %v2716 = vshrl.u32 %v2715, 7
    %v2717 = vsub.s32 %v2714, %v2716
    %v2718 = vrot.slane %v2704, %v2717
    %v2719 = vcombine.low %v540, %v562
    %v2720 = vcombine.high %v540, %v562
    %v2722 = vunpack.c.l.s4 1983009808
    %v2723 = vunpack.c.0.s8 %v2722
    %v2724 = vlaneseq
    %v2725 = vshrl.u32 %v2724, 7
    %v2726 = vsub.s32 %v2723, %v2725
    %v2727 = vrot.slane %v2719, %v2726
    %v2729 = vunpack.c.l.s4 1983009808
    %v2730 = vunpack.c.0.s8 %v2729
    %v2731 = vlaneseq
    %v2732 = vshrl.u32 %v2731, 7
    %v2733 = vsub.s32 %v2730, %v2732
    %v2734 = vrot.slane %v2720, %v2733
    %v2735 = vcombine.low %v2679, %v2695
    %v2736 = vcombine.high %v2679, %v2695
    %v2738 = vunpack.c.l.s4 1934713408
    %v2739 = vunpack.c.0.s8 %v2738
    %v2740 = vlaneseq
    %v2741 = vshrl.u32 %v2740, 7
    %v2742 = vsub.s32 %v2739, %v2741
    %v2743 = vrot.slane %v2735, %v2742
    %v2745 = vunpack.c.l.s4 1934713408
    %v2746 = vunpack.c.0.s8 %v2745
    %v2747 = vlaneseq
    %v2748 = vshrl.u32 %v2747, 7
    %v2749 = vsub.s32 %v2746, %v2748
    %v2750 = vrot.slane %v2736, %v2749
    %v2751 = vcombine.low %v2686, %v2702
    %v2752 = vcombine.high %v2686, %v2702
    %v2754 = vunpack.c.l.s4 1934713408
    %v2755 = vunpack.c.0.s8 %v2754
    %v2756 = vlaneseq
    %v2757 = vshrl.u32 %v2756, 7
    %v2758 = vsub.s32 %v2755, %v2757
    %v2759 = vrot.slane %v2751, %v2758
    %v2761 = vunpack.c.l.s4 1934713408
    %v2762 = vunpack.c.0.s8 %v2761
    %v2763 = vlaneseq
    %v2764 = vshrl.u32 %v2763, 7
    %v2765 = vsub.s32 %v2762, %v2764
    %v2766 = vrot.slane %v2752, %v2765
    %v2767 = vcombine.low %v2711, %v2727
    %v2768 = vcombine.high %v2711, %v2727
    %v2770 = vunpack.c.l.s4 1934713408
    %v2771 = vunpack.c.0.s8 %v2770
    %v2772 = vlaneseq
    %v2773 = vshrl.u32 %v2772, 7
    %v2774 = vsub.s32 %v2771, %v2773
    %v2775 = vrot.slane %v2767, %v2774
    %v2777 = vunpack.c.l.s4 1934713408
    %v2778 = vunpack.c.0.s8 %v2777
    %v2779 = vlaneseq
    %v2780 = vshrl.u32 %v2779, 7
    %v2781 = vsub.s32 %v2778, %v2780
    %v2782 = vrot.slane %v2768, %v2781
    %v2783 = vcombine.low %v2718, %v2734
    %v2784 = vcombine.high %v2718, %v2734
    %v2786 = vunpack.c.l.s4 1934713408
    %v2787 = vunpack.c.0.s8 %v2786
    %v2788 = vlaneseq
    %v2789 = vshrl.u32 %v2788, 7
    %v2790 = vsub.s32 %v2787, %v2789
    %v2791 = vrot.slane %v2783, %v2790
    %v2793 = vunpack.c.l.s4 1934713408
    %v2794 = vunpack.c.0.s8 %v2793
    %v2795 = vlaneseq
    %v2796 = vshrl.u32 %v2795, 7
    %v2797 = vsub.s32 %v2794, %v2796
    %v2798 = vrot.slane %v2784, %v2797
    %v2799 = vcombine.low %v2743, %v2775
    %v2800 = vcombine.high %v2743, %v2775
    %v2801 = vcombine.low %v2750, %v2782
    %v2802 = vcombine.high %v2750, %v2782
    %v2803 = vcombine.low %v2759, %v2791
    %v2804 = vcombine.high %v2759, %v2791
    %v2805 = vcombine.low %v2766, %v2798
    %v2806 = vcombine.high %v2766, %v2798
    %v2807 = vcombine.low %v401, %v423
    %v2808 = vcombine.high %v401, %v423
    %v2810 = vunpack.c.l.s4 1983009808
    %v2811 = vunpack.c.0.s8 %v2810
    %v2812 = vlaneseq
    %v2813 = vshrl.u32 %v2812, 7
    %v2814 = vsub.s32 %v2811, %v2813
    %v2815 = vrot.slane %v2807, %v2814
    %v2817 = vunpack.c.l.s4 1983009808
    %v2818 = vunpack.c.0.s8 %v2817
    %v2819 = vlaneseq
    %v2820 = vshrl.u32 %v2819, 7
    %v2821 = vsub.s32 %v2818, %v2820
    %v2822 = vrot.slane %v2808, %v2821
    %v2823 = vcombine.low %v412, %v434
    %v2824 = vcombine.high %v412, %v434
    %v2826 = vunpack.c.l.s4 1983009808
    %v2827 = vunpack.c.0.s8 %v2826
    %v2828 = vlaneseq
    %v2829 = vshrl.u32 %v2828, 7
    %v2830 = vsub.s32 %v2827, %v2829
    %v2831 = vrot.slane %v2823, %v2830
    %v2833 = vunpack.c.l.s4 1983009808
    %v2834 = vunpack.c.0.s8 %v2833
    %v2835 = vlaneseq
    %v2836 = vshrl.u32 %v2835, 7
    %v2837 = vsub.s32 %v2834, %v2836
    %v2838 = vrot.slane %v2824, %v2837
    %v2839 = vcombine.low %v445, %v467
    %v2840 = vcombine.high %v445, %v467
    %v2842 = vunpack.c.l.s4 1983009808
    %v2843 = vunpack.c.0.s8 %v2842
    %v2844 = vlaneseq
    %v2845 = vshrl.u32 %v2844, 7
    %v2846 = vsub.s32 %v2843, %v2845
    %v2847 = vrot.slane %v2839, %v2846
    %v2849 = vunpack.c.l.s4 1983009808
    %v2850 = vunpack.c.0.s8 %v2849
    %v2851 = vlaneseq
    %v2852 = vshrl.u32 %v2851, 7
    %v2853 = vsub.s32 %v2850, %v2852
    %v2854 = vrot.slane %v2840, %v2853
    %v2855 = vcombine.low %v456, %v478
    %v2856 = vcombine.high %v456, %v478
    %v2858 = vunpack.c.l.s4 1983009808
    %v2859 = vunpack.c.0.s8 %v2858
    %v2860 = vlaneseq
    %v2861 = vshrl.u32 %v2860, 7
    %v2862 = vsub.s32 %v2859, %v2861
    %v2863 = vrot.slane %v2855, %v2862
    %v2865 = vunpack.c.l.s4 1983009808
    %v2866 = vunpack.c.0.s8 %v2865
    %v2867 = vlaneseq
    %v2868 = vshrl.u32 %v2867, 7
    %v2869 = vsub.s32 %v2866, %v2868
    %v2870 = vrot.slane %v2856, %v2869
    %v2871 = vcombine.low %v2815, %v2831
    %v2872 = vcombine.high %v2815, %v2831
    %v2874 = vunpack.c.l.s4 1934713408
    %v2875 = vunpack.c.0.s8 %v2874
    %v2876 = vlaneseq
    %v2877 = vshrl.u32 %v2876, 7
    %v2878 = vsub.s32 %v2875, %v2877
    %v2879 = vrot.slane %v2871, %v2878
    %v2881 = vunpack.c.l.s4 1934713408
    %v2882 = vunpack.c.0.s8 %v2881
    %v2883 = vlaneseq
    %v2884 = vshrl.u32 %v2883, 7
    %v2885 = vsub.s32 %v2882, %v2884
    %v2886 = vrot.slane %v2872, %v2885
    %v2887 = vcombine.low %v2822, %v2838
    %v2888 = vcombine.high %v2822, %v2838
    %v2890 = vunpack.c.l.s4 1934713408
    %v2891 = vunpack.c.0.s8 %v2890
    %v2892 = vlaneseq
    %v2893 = vshrl.u32 %v2892, 7
    %v2894 = vsub.s32 %v2891, %v2893
    %v2895 = vrot.slane %v2887, %v2894
    %v2897 = vunpack.c.l.s4 1934713408
    %v2898 = vunpack.c.0.s8 %v2897
    %v2899 = vlaneseq
    %v2900 = vshrl.u32 %v2899, 7
    %v2901 = vsub.s32 %v2898, %v2900
    %v2902 = vrot.slane %v2888, %v2901
    %v2903 = vcombine.low %v2847, %v2863
    %v2904 = vcombine.high %v2847, %v2863
    %v2906 = vunpack.c.l.s4 1934713408
    %v2907 = vunpack.c.0.s8 %v2906
    %v2908 = vlaneseq
    %v2909 = vshrl.u32 %v2908, 7
    %v2910 = vsub.s32 %v2907, %v2909
    %v2911 = vrot.slane %v2903, %v2910
    %v2913 = vunpack.c.l.s4 1934713408
    %v2914 = vunpack.c.0.s8 %v2913
    %v2915 = vlaneseq
    %v2916 = vshrl.u32 %v2915, 7
    %v2917 = vsub.s32 %v2914, %v2916
    %v2918 = vrot.slane %v2904, %v2917
    %v2919 = vcombine.low %v2854, %v2870
    %v2920 = vcombine.high %v2854, %v2870
    %v2922 = vunpack.c.l.s4 1934713408
    %v2923 = vunpack.c.0.s8 %v2922
    %v2924 = vlaneseq
    %v2925 = vshrl.u32 %v2924, 7
    %v2926 = vsub.s32 %v2923, %v2925
    %v2927 = vrot.slane %v2919, %v2926
    %v2929 = vunpack.c.l.s4 1934713408
    %v2930 = vunpack.c.0.s8 %v2929
    %v2931 = vlaneseq
    %v2932 = vshrl.u32 %v2931, 7
    %v2933 = vsub.s32 %v2930, %v2932
    %v2934 = vrot.slane %v2920, %v2933
    %v2935 = vcombine.low %v2879, %v2911
    %v2936 = vcombine.high %v2879, %v2911
    %v2937 = vcombine.low %v2886, %v2918
    %v2938 = vcombine.high %v2886, %v2918
    %v2939 = vcombine.low %v2895, %v2927
    %v2940 = vcombine.high %v2895, %v2927
    %v2941 = vcombine.low %v2902, %v2934
    %v2942 = vcombine.high %v2902, %v2934
    %v2943 = vcombine.low %v489, %v511
    %v2944 = vcombine.high %v489, %v511
    %v2946 = vunpack.c.l.s4 1983009808
    %v2947 = vunpack.c.0.s8 %v2946
    %v2948 = vlaneseq
    %v2949 = vshrl.u32 %v2948, 7
    %v2950 = vsub.s32 %v2947, %v2949
    %v2951 = vrot.slane %v2943, %v2950
    %v2953 = vunpack.c.l.s4 1983009808
    %v2954 = vunpack.c.0.s8 %v2953
    %v2955 = vlaneseq
    %v2956 = vshrl.u32 %v2955, 7
    %v2957 = vsub.s32 %v2954, %v2956
    %v2958 = vrot.slane %v2944, %v2957
    %v2959 = vcombine.low %v500, %v522
    %v2960 = vcombine.high %v500, %v522
    %v2962 = vunpack.c.l.s4 1983009808
    %v2963 = vunpack.c.0.s8 %v2962
    %v2964 = vlaneseq
    %v2965 = vshrl.u32 %v2964, 7
    %v2966 = vsub.s32 %v2963, %v2965
    %v2967 = vrot.slane %v2959, %v2966
    %v2969 = vunpack.c.l.s4 1983009808
    %v2970 = vunpack.c.0.s8 %v2969
    %v2971 = vlaneseq
    %v2972 = vshrl.u32 %v2971, 7
    %v2973 = vsub.s32 %v2970, %v2972
    %v2974 = vrot.slane %v2960, %v2973
    %v2975 = vcombine.low %v533, %v555
    %v2976 = vcombine.high %v533, %v555
    %v2978 = vunpack.c.l.s4 1983009808
    %v2979 = vunpack.c.0.s8 %v2978
    %v2980 = vlaneseq
    %v2981 = vshrl.u32 %v2980, 7
    %v2982 = vsub.s32 %v2979, %v2981
    %v2983 = vrot.slane %v2975, %v2982
    %v2985 = vunpack.c.l.s4 1983009808
    %v2986 = vunpack.c.0.s8 %v2985
    %v2987 = vlaneseq
    %v2988 = vshrl.u32 %v2987, 7
    %v2989 = vsub.s32 %v2986, %v2988
    %v2990 = vrot.slane %v2976, %v2989
    %v2991 = vcombine.low %v544, %v566
    %v2992 = vcombine.high %v544, %v566
    %v2994 = vunpack.c.l.s4 1983009808
    %v2995 = vunpack.c.0.s8 %v2994
    %v2996 = vlaneseq
    %v2997 = vshrl.u32 %v2996, 7
    %v2998 = vsub.s32 %v2995, %v2997
    %v2999 = vrot.slane %v2991, %v2998
    %v3001 = vunpack.c.l.s4 1983009808
    %v3002 = vunpack.c.0.s8 %v3001
    %v3003 = vlaneseq
    %v3004 = vshrl.u32 %v3003, 7
    %v3005 = vsub.s32 %v3002, %v3004
    %v3006 = vrot.slane %v2992, %v3005
    %v3007 = vcombine.low %v2951, %v2967
    %v3008 = vcombine.high %v2951, %v2967
    %v3010 = vunpack.c.l.s4 1934713408
    %v3011 = vunpack.c.0.s8 %v3010
    %v3012 = vlaneseq
    %v3013 = vshrl.u32 %v3012, 7
    %v3014 = vsub.s32 %v3011, %v3013
    %v3015 = vrot.slane %v3007, %v3014
    %v3017 = vunpack.c.l.s4 1934713408
    %v3018 = vunpack.c.0.s8 %v3017
    %v3019 = vlaneseq
    %v3020 = vshrl.u32 %v3019, 7
    %v3021 = vsub.s32 %v3018, %v3020
    %v3022 = vrot.slane %v3008, %v3021
    %v3023 = vcombine.low %v2958, %v2974
    %v3024 = vcombine.high %v2958, %v2974
    %v3026 = vunpack.c.l.s4 1934713408
    %v3027 = vunpack.c.0.s8 %v3026
    %v3028 = vlaneseq
    %v3029 = vshrl.u32 %v3028, 7
    %v3030 = vsub.s32 %v3027, %v3029
    %v3031 = vrot.slane %v3023, %v3030
    %v3033 = vunpack.c.l.s4 1934713408
    %v3034 = vunpack.c.0.s8 %v3033
    %v3035 = vlaneseq
    %v3036 = vshrl.u32 %v3035, 7
    %v3037 = vsub.s32 %v3034, %v3036
    %v3038 = vrot.slane %v3024, %v3037
    %v3039 = vcombine.low %v2983, %v2999
    %v3040 = vcombine.high %v2983, %v2999
    %v3042 = vunpack.c.l.s4 1934713408
    %v3043 = vunpack.c.0.s8 %v3042
    %v3044 = vlaneseq
    %v3045 = vshrl.u32 %v3044, 7
    %v3046 = vsub.s32 %v3043, %v3045
    %v3047 = vrot.slane %v3039, %v3046
    %v3049 = vunpack.c.l.s4 1934713408
    %v3050 = vunpack.c.0.s8 %v3049
    %v3051 = vlaneseq
    %v3052 = vshrl.u32 %v3051, 7
    %v3053 = vsub.s32 %v3050, %v3052
    %v3054 = vrot.slane %v3040, %v3053
    %v3055 = vcombine.low %v2990, %v3006
    %v3056 = vcombine.high %v2990, %v3006
    %v3058 = vunpack.c.l.s4 1934713408
    %v3059 = vunpack.c.0.s8 %v3058
    %v3060 = vlaneseq
    %v3061 = vshrl.u32 %v3060, 7
    %v3062 = vsub.s32 %v3059, %v3061
    %v3063 = vrot.slane %v3055, %v3062
    %v3065 = vunpack.c.l.s4 1934713408
    %v3066 = vunpack.c.0.s8 %v3065
    %v3067 = vlaneseq
    %v3068 = vshrl.u32 %v3067, 7
    %v3069 = vsub.s32 %v3066, %v3068
    %v3070 = vrot.slane %v3056, %v3069
    %v3071 = vcombine.low %v3015, %v3047
    %v3072 = vcombine.high %v3015, %v3047
    %v3073 = vcombine.low %v3022, %v3054
    %v3074 = vcombine.high %v3022, %v3054
    %v3075 = vcombine.low %v3031, %v3063
    %v3076 = vcombine.high %v3031, %v3063
    %v3077 = vcombine.low %v3038, %v3070
    %v3078 = vcombine.high %v3038, %v3070
    %v3079 = vcombine.low %v573, %v595
    %v3080 = vcombine.high %v573, %v595
    %v3082 = vunpack.c.l.s4 1983009808
    %v3083 = vunpack.c.0.s8 %v3082
    %v3084 = vlaneseq
    %v3085 = vshrl.u32 %v3084, 7
    %v3086 = vsub.s32 %v3083, %v3085
    %v3087 = vrot.slane %v3079, %v3086
    %v3089 = vunpack.c.l.s4 1983009808
    %v3090 = vunpack.c.0.s8 %v3089
    %v3091 = vlaneseq
    %v3092 = vshrl.u32 %v3091, 7
    %v3093 = vsub.s32 %v3090, %v3092
    %v3094 = vrot.slane %v3080, %v3093
    %v3095 = vcombine.low %v584, %v606
    %v3096 = vcombine.high %v584, %v606
    %v3098 = vunpack.c.l.s4 1983009808
    %v3099 = vunpack.c.0.s8 %v3098
    %v3100 = vlaneseq
    %v3101 = vshrl.u32 %v3100, 7
    %v3102 = vsub.s32 %v3099, %v3101
    %v3103 = vrot.slane %v3095, %v3102
    %v3105 = vunpack.c.l.s4 1983009808
    %v3106 = vunpack.c.0.s8 %v3105
    %v3107 = vlaneseq
    %v3108 = vshrl.u32 %v3107, 7
    %v3109 = vsub.s32 %v3106, %v3108
    %v3110 = vrot.slane %v3096, %v3109
    %v3111 = vcombine.low %v617, %v639
    %v3112 = vcombine.high %v617, %v639
    %v3114 = vunpack.c.l.s4 1983009808
    %v3115 = vunpack.c.0.s8 %v3114
    %v3116 = vlaneseq
    %v3117 = vshrl.u32 %v3116, 7
    %v3118 = vsub.s32 %v3115, %v3117
    %v3119 = vrot.slane %v3111, %v3118
    %v3121 = vunpack.c.l.s4 1983009808
    %v3122 = vunpack.c.0.s8 %v3121
    %v3123 = vlaneseq
    %v3124 = vshrl.u32 %v3123, 7
    %v3125 = vsub.s32 %v3122, %v3124
    %v3126 = vrot.slane %v3112, %v3125
    %v3127 = vcombine.low %v628, %v650
    %v3128 = vcombine.high %v628, %v650
    %v3130 = vunpack.c.l.s4 1983009808
    %v3131 = vunpack.c.0.s8 %v3130
    %v3132 = vlaneseq
    %v3133 = vshrl.u32 %v3132, 7
    %v3134 = vsub.s32 %v3131, %v3133
    %v3135 = vrot.slane %v3127, %v3134
    %v3137 = vunpack.c.l.s4 1983009808
    %v3138 = vunpack.c.0.s8 %v3137
    %v3139 = vlaneseq
    %v3140 = vshrl.u32 %v3139, 7
    %v3141 = vsub.s32 %v3138, %v3140
    %v3142 = vrot.slane %v3128, %v3141
    %v3143 = vcombine.low %v3087, %v3103
    %v3144 = vcombine.high %v3087, %v3103
    %v3146 = vunpack.c.l.s4 1934713408
    %v3147 = vunpack.c.0.s8 %v3146
    %v3148 = vlaneseq
    %v3149 = vshrl.u32 %v3148, 7
    %v3150 = vsub.s32 %v3147, %v3149
    %v3151 = vrot.slane %v3143, %v3150
    %v3153 = vunpack.c.l.s4 1934713408
    %v3154 = vunpack.c.0.s8 %v3153
    %v3155 = vlaneseq
    %v3156 = vshrl.u32 %v3155, 7
    %v3157 = vsub.s32 %v3154, %v3156
    %v3158 = vrot.slane %v3144, %v3157
    %v3159 = vcombine.low %v3094, %v3110
    %v3160 = vcombine.high %v3094, %v3110
    %v3162 = vunpack.c.l.s4 1934713408
    %v3163 = vunpack.c.0.s8 %v3162
    %v3164 = vlaneseq
    %v3165 = vshrl.u32 %v3164, 7
    %v3166 = vsub.s32 %v3163, %v3165
    %v3167 = vrot.slane %v3159, %v3166
    %v3169 = vunpack.c.l.s4 1934713408
    %v3170 = vunpack.c.0.s8 %v3169
    %v3171 = vlaneseq
    %v3172 = vshrl.u32 %v3171, 7
    %v3173 = vsub.s32 %v3170, %v3172
    %v3174 = vrot.slane %v3160, %v3173
    %v3175 = vcombine.low %v3119, %v3135
    %v3176 = vcombine.high %v3119, %v3135
    %v3178 = vunpack.c.l.s4 1934713408
    %v3179 = vunpack.c.0.s8 %v3178
    %v3180 = vlaneseq
    %v3181 = vshrl.u32 %v3180, 7
    %v3182 = vsub.s32 %v3179, %v3181
    %v3183 = vrot.slane %v3175, %v3182
    %v3185 = vunpack.c.l.s4 1934713408
    %v3186 = vunpack.c.0.s8 %v3185
    %v3187 = vlaneseq
    %v3188 = vshrl.u32 %v3187, 7
    %v3189 = vsub.s32 %v3186, %v3188
    %v3190 = vrot.slane %v3176, %v3189
    %v3191 = vcombine.low %v3126, %v3142
    %v3192 = vcombine.high %v3126, %v3142
    %v3194 = vunpack.c.l.s4 1934713408
    %v3195 = vunpack.c.0.s8 %v3194
    %v3196 = vlaneseq
    %v3197 = vshrl.u32 %v3196, 7
    %v3198 = vsub.s32 %v3195, %v3197
    %v3199 = vrot.slane %v3191, %v3198
    %v3201 = vunpack.c.l.s4 1934713408
    %v3202 = vunpack.c.0.s8 %v3201
    %v3203 = vlaneseq
    %v3204 = vshrl.u32 %v3203, 7
    %v3205 = vsub.s32 %v3202, %v3204
    %v3206 = vrot.slane %v3192, %v3205
    %v3207 = vcombine.low %v3151, %v3183
    %v3208 = vcombine.high %v3151, %v3183
    %v3209 = vcombine.low %v3158, %v3190
    %v3210 = vcombine.high %v3158, %v3190
    %v3211 = vcombine.low %v3167, %v3199
    %v3212 = vcombine.high %v3167, %v3199
    %v3213 = vcombine.low %v3174, %v3206
    %v3214 = vcombine.high %v3174, %v3206
    %v3215 = vcombine.low %v661, %v683
    %v3216 = vcombine.high %v661, %v683
    %v3218 = vunpack.c.l.s4 1983009808
    %v3219 = vunpack.c.0.s8 %v3218
    %v3220 = vlaneseq
    %v3221 = vshrl.u32 %v3220, 7
    %v3222 = vsub.s32 %v3219, %v3221
    %v3223 = vrot.slane %v3215, %v3222
    %v3225 = vunpack.c.l.s4 1983009808
    %v3226 = vunpack.c.0.s8 %v3225
    %v3227 = vlaneseq
    %v3228 = vshrl.u32 %v3227, 7
    %v3229 = vsub.s32 %v3226, %v3228
    %v3230 = vrot.slane %v3216, %v3229
    %v3231 = vcombine.low %v672, %v694
    %v3232 = vcombine.high %v672, %v694
    %v3234 = vunpack.c.l.s4 1983009808
    %v3235 = vunpack.c.0.s8 %v3234
    %v3236 = vlaneseq
    %v3237 = vshrl.u32 %v3236, 7
    %v3238 = vsub.s32 %v3235, %v3237
    %v3239 = vrot.slane %v3231, %v3238
    %v3241 = vunpack.c.l.s4 1983009808
    %v3242 = vunpack.c.0.s8 %v3241
    %v3243 = vlaneseq
    %v3244 = vshrl.u32 %v3243, 7
    %v3245 = vsub.s32 %v3242, %v3244
    %v3246 = vrot.slane %v3232, %v3245
    %v3247 = vcombine.low %v705, %v727
    %v3248 = vcombine.high %v705, %v727
    %v3250 = vunpack.c.l.s4 1983009808
    %v3251 = vunpack.c.0.s8 %v3250
    %v3252 = vlaneseq
    %v3253 = vshrl.u32 %v3252, 7
    %v3254 = vsub.s32 %v3251, %v3253
    %v3255 = vrot.slane %v3247, %v3254
    %v3257 = vunpack.c.l.s4 1983009808
    %v3258 = vunpack.c.0.s8 %v3257
    %v3259 = vlaneseq
    %v3260 = vshrl.u32 %v3259, 7
    %v3261 = vsub.s32 %v3258, %v3260
    %v3262 = vrot.slane %v3248, %v3261
    %v3263 = vcombine.low %v716, %v738
    %v3264 = vcombine.high %v716, %v738
    %v3266 = vunpack.c.l.s4 1983009808
    %v3267 = vunpack.c.0.s8 %v3266
    %v3268 = vlaneseq
    %v3269 = vshrl.u32 %v3268, 7
    %v3270 = vsub.s32 %v3267, %v3269
    %v3271 = vrot.slane %v3263, %v3270
    %v3273 = vunpack.c.l.s4 1983009808
    %v3274 = vunpack.c.0.s8 %v3273
    %v3275 = vlaneseq
    %v3276 = vshrl.u32 %v3275, 7
    %v3277 = vsub.s32 %v3274, %v3276
    %v3278 = vrot.slane %v3264, %v3277
    %v3279 = vcombine.low %v3223, %v3239
    %v3280 = vcombine.high %v3223, %v3239
    %v3282 = vunpack.c.l.s4 1934713408
    %v3283 = vunpack.c.0.s8 %v3282
    %v3284 = vlaneseq
    %v3285 = vshrl.u32 %v3284, 7
    %v3286 = vsub.s32 %v3283, %v3285
    %v3287 = vrot.slane %v3279, %v3286
    %v3289 = vunpack.c.l.s4 1934713408
    %v3290 = vunpack.c.0.s8 %v3289
    %v3291 = vlaneseq
    %v3292 = vshrl.u32 %v3291, 7
    %v3293 = vsub.s32 %v3290, %v3292
    %v3294 = vrot.slane %v3280, %v3293
    %v3295 = vcombine.low %v3230, %v3246
    %v3296 = vcombine.high %v3230, %v3246
    %v3298 = vunpack.c.l.s4 1934713408
    %v3299 = vunpack.c.0.s8 %v3298
    %v3300 = vlaneseq
    %v3301 = vshrl.u32 %v3300, 7
    %v3302 = vsub.s32 %v3299, %v3301
    %v3303 = vrot.slane %v3295, %v3302
    %v3305 = vunpack.c.l.s4 1934713408
    %v3306 = vunpack.c.0.s8 %v3305
    %v3307 = vlaneseq
    %v3308 = vshrl.u32 %v3307, 7
    %v3309 = vsub.s32 %v3306, %v3308
    %v3310 = vrot.slane %v3296, %v3309
    %v3311 = vcombine.low %v3255, %v3271
    %v3312 = vcombine.high %v3255, %v3271
    %v3314 = vunpack.c.l.s4 1934713408
    %v3315 = vunpack.c.0.s8 %v3314
    %v3316 = vlaneseq
    %v3317 = vshrl.u32 %v3316, 7
    %v3318 = vsub.s32 %v3315, %v3317
    %v3319 = vrot.slane %v3311, %v3318
    %v3321 = vunpack.c.l.s4 1934713408
    %v3322 = vunpack.c.0.s8 %v3321
    %v3323 = vlaneseq
    %v3324 = vshrl.u32 %v3323, 7
    %v3325 = vsub.s32 %v3322, %v3324
    %v3326 = vrot.slane %v3312, %v3325
    %v3327 = vcombine.low %v3262, %v3278
    %v3328 = vcombine.high %v3262, %v3278
    %v3330 = vunpack.c.l.s4 1934713408
    %v3331 = vunpack.c.0.s8 %v3330
    %v3332 = vlaneseq
    %v3333 = vshrl.u32 %v3332, 7
    %v3334 = vsub.s32 %v3331, %v3333
    %v3335 = vrot.slane %v3327, %v3334
    %v3337 = vunpack.c.l.s4 1934713408
    %v3338 = vunpack.c.0.s8 %v3337
    %v3339 = vlaneseq
    %v3340 = vshrl.u32 %v3339, 7
    %v3341 = vsub.s32 %v3338, %v3340
    %v3342 = vrot.slane %v3328, %v3341
    %v3343 = vcombine.low %v3287, %v3319
    %v3344 = vcombine.high %v3287, %v3319
    %v3345 = vcombine.low %v3294, %v3326
    %v3346 = vcombine.high %v3294, %v3326
    %v3347 = vcombine.low %v3303, %v3335
    %v3348 = vcombine.high %v3303, %v3335
    %v3349 = vcombine.low %v3310, %v3342
    %v3350 = vcombine.high %v3310, %v3342
    %v3351 = vcombine.low %v577, %v599
    %v3352 = vcombine.high %v577, %v599
    %v3354 = vunpack.c.l.s4 1983009808
    %v3355 = vunpack.c.0.s8 %v3354
    %v3356 = vlaneseq
    %v3357 = vshrl.u32 %v3356, 7
    %v3358 = vsub.s32 %v3355, %v3357
    %v3359 = vrot.slane %v3351, %v3358
    %v3361 = vunpack.c.l.s4 1983009808
    %v3362 = vunpack.c.0.s8 %v3361
    %v3363 = vlaneseq
    %v3364 = vshrl.u32 %v3363, 7
    %v3365 = vsub.s32 %v3362, %v3364
    %v3366 = vrot.slane %v3352, %v3365
    %v3367 = vcombine.low %v588, %v610
    %v3368 = vcombine.high %v588, %v610
    %v3370 = vunpack.c.l.s4 1983009808
    %v3371 = vunpack.c.0.s8 %v3370
    %v3372 = vlaneseq
    %v3373 = vshrl.u32 %v3372, 7
    %v3374 = vsub.s32 %v3371, %v3373
    %v3375 = vrot.slane %v3367, %v3374
    %v3377 = vunpack.c.l.s4 1983009808
    %v3378 = vunpack.c.0.s8 %v3377
    %v3379 = vlaneseq
    %v3380 = vshrl.u32 %v3379, 7
    %v3381 = vsub.s32 %v3378, %v3380
    %v3382 = vrot.slane %v3368, %v3381
    %v3383 = vcombine.low %v621, %v643
    %v3384 = vcombine.high %v621, %v643
    %v3386 = vunpack.c.l.s4 1983009808
    %v3387 = vunpack.c.0.s8 %v3386
    %v3388 = vlaneseq
    %v3389 = vshrl.u32 %v3388, 7
    %v3390 = vsub.s32 %v3387, %v3389
    %v3391 = vrot.slane %v3383, %v3390
    %v3393 = vunpack.c.l.s4 1983009808
    %v3394 = vunpack.c.0.s8 %v3393
    %v3395 = vlaneseq
    %v3396 = vshrl.u32 %v3395, 7
    %v3397 = vsub.s32 %v3394, %v3396
    %v3398 = vrot.slane %v3384, %v3397
    %v3399 = vcombine.low %v632, %v654
    %v3400 = vcombine.high %v632, %v654
    %v3402 = vunpack.c.l.s4 1983009808
    %v3403 = vunpack.c.0.s8 %v3402
    %v3404 = vlaneseq
    %v3405 = vshrl.u32 %v3404, 7
    %v3406 = vsub.s32 %v3403, %v3405
    %v3407 = vrot.slane %v3399, %v3406
    %v3409 = vunpack.c.l.s4 1983009808
    %v3410 = vunpack.c.0.s8 %v3409
    %v3411 = vlaneseq
    %v3412 = vshrl.u32 %v3411, 7
    %v3413 = vsub.s32 %v3410, %v3412
    %v3414 = vrot.slane %v3400, %v3413
    %v3415 = vcombine.low %v3359, %v3375
    %v3416 = vcombine.high %v3359, %v3375
    %v3418 = vunpack.c.l.s4 1934713408
    %v3419 = vunpack.c.0.s8 %v3418
    %v3420 = vlaneseq
    %v3421 = vshrl.u32 %v3420, 7
    %v3422 = vsub.s32 %v3419, %v3421
    %v3423 = vrot.slane %v3415, %v3422
    %v3425 = vunpack.c.l.s4 1934713408
    %v3426 = vunpack.c.0.s8 %v3425
    %v3427 = vlaneseq
    %v3428 = vshrl.u32 %v3427, 7
    %v3429 = vsub.s32 %v3426, %v3428
    %v3430 = vrot.slane %v3416, %v3429
    %v3431 = vcombine.low %v3366, %v3382
    %v3432 = vcombine.high %v3366, %v3382
    %v3434 = vunpack.c.l.s4 1934713408
    %v3435 = vunpack.c.0.s8 %v3434
    %v3436 = vlaneseq
    %v3437 = vshrl.u32 %v3436, 7
    %v3438 = vsub.s32 %v3435, %v3437
    %v3439 = vrot.slane %v3431, %v3438
    %v3441 = vunpack.c.l.s4 1934713408
    %v3442 = vunpack.c.0.s8 %v3441
    %v3443 = vlaneseq
    %v3444 = vshrl.u32 %v3443, 7
    %v3445 = vsub.s32 %v3442, %v3444
    %v3446 = vrot.slane %v3432, %v3445
    %v3447 = vcombine.low %v3391, %v3407
    %v3448 = vcombine.high %v3391, %v3407
    %v3450 = vunpack.c.l.s4 1934713408
    %v3451 = vunpack.c.0.s8 %v3450
    %v3452 = vlaneseq
    %v3453 = vshrl.u32 %v3452, 7
    %v3454 = vsub.s32 %v3451, %v3453
    %v3455 = vrot.slane %v3447, %v3454
    %v3457 = vunpack.c.l.s4 1934713408
    %v3458 = vunpack.c.0.s8 %v3457
    %v3459 = vlaneseq
    %v3460 = vshrl.u32 %v3459, 7
    %v3461 = vsub.s32 %v3458, %v3460
    %v3462 = vrot.slane %v3448, %v3461
    %v3463 = vcombine.low %v3398, %v3414
    %v3464 = vcombine.high %v3398, %v3414
    %v3466 = vunpack.c.l.s4 1934713408
    %v3467 = vunpack.c.0.s8 %v3466
    %v3468 = vlaneseq
    %v3469 = vshrl.u32 %v3468, 7
    %v3470 = vsub.s32 %v3467, %v3469
    %v3471 = vrot.slane %v3463, %v3470
    %v3473 = vunpack.c.l.s4 1934713408
    %v3474 = vunpack.c.0.s8 %v3473
    %v3475 = vlaneseq
    %v3476 = vshrl.u32 %v3475, 7
    %v3477 = vsub.s32 %v3474, %v3476
    %v3478 = vrot.slane %v3464, %v3477
    %v3479 = vcombine.low %v3423, %v3455
    %v3480 = vcombine.high %v3423, %v3455
    %v3481 = vcombine.low %v3430, %v3462
    %v3482 = vcombine.high %v3430, %v3462
    %v3483 = vcombine.low %v3439, %v3471
    %v3484 = vcombine.high %v3439, %v3471
    %v3485 = vcombine.low %v3446, %v3478
    %v3486 = vcombine.high %v3446, %v3478
    %v3487 = vcombine.low %v665, %v687
    %v3488 = vcombine.high %v665, %v687
    %v3490 = vunpack.c.l.s4 1983009808
    %v3491 = vunpack.c.0.s8 %v3490
    %v3492 = vlaneseq
    %v3493 = vshrl.u32 %v3492, 7
    %v3494 = vsub.s32 %v3491, %v3493
    %v3495 = vrot.slane %v3487, %v3494
    %v3497 = vunpack.c.l.s4 1983009808
    %v3498 = vunpack.c.0.s8 %v3497
    %v3499 = vlaneseq
    %v3500 = vshrl.u32 %v3499, 7
    %v3501 = vsub.s32 %v3498, %v3500
    %v3502 = vrot.slane %v3488, %v3501
    %v3503 = vcombine.low %v676, %v698
    %v3504 = vcombine.high %v676, %v698
    %v3506 = vunpack.c.l.s4 1983009808
    %v3507 = vunpack.c.0.s8 %v3506
    %v3508 = vlaneseq
    %v3509 = vshrl.u32 %v3508, 7
    %v3510 = vsub.s32 %v3507, %v3509
    %v3511 = vrot.slane %v3503, %v3510
    %v3513 = vunpack.c.l.s4 1983009808
    %v3514 = vunpack.c.0.s8 %v3513
    %v3515 = vlaneseq
    %v3516 = vshrl.u32 %v3515, 7
    %v3517 = vsub.s32 %v3514, %v3516
    %v3518 = vrot.slane %v3504, %v3517
    %v3519 = vcombine.low %v709, %v731
    %v3520 = vcombine.high %v709, %v731
    %v3522 = vunpack.c.l.s4 1983009808
    %v3523 = vunpack.c.0.s8 %v3522
    %v3524 = vlaneseq
    %v3525 = vshrl.u32 %v3524, 7
    %v3526 = vsub.s32 %v3523, %v3525
    %v3527 = vrot.slane %v3519, %v3526
    %v3529 = vunpack.c.l.s4 1983009808
    %v3530 = vunpack.c.0.s8 %v3529
    %v3531 = vlaneseq
    %v3532 = vshrl.u32 %v3531, 7
    %v3533 = vsub.s32 %v3530, %v3532
    %v3534 = vrot.slane %v3520, %v3533
    %v3535 = vcombine.low %v720, %v742
    %v3536 = vcombine.high %v720, %v742
    %v3538 = vunpack.c.l.s4 1983009808
    %v3539 = vunpack.c.0.s8 %v3538
    %v3540 = vlaneseq
    %v3541 = vshrl.u32 %v3540, 7
    %v3542 = vsub.s32 %v3539, %v3541
    %v3543 = vrot.slane %v3535, %v3542
    %v3545 = vunpack.c.l.s4 1983009808
    %v3546 = vunpack.c.0.s8 %v3545
    %v3547 = vlaneseq
    %v3548 = vshrl.u32 %v3547, 7
    %v3549 = vsub.s32 %v3546, %v3548
    %v3550 = vrot.slane %v3536, %v3549
    %v3551 = vcombine.low %v3495, %v3511
    %v3552 = vcombine.high %v3495, %v3511
    %v3554 = vunpack.c.l.s4 1934713408
    %v3555 = vunpack.c.0.s8 %v3554
    %v3556 = vlaneseq
    %v3557 = vshrl.u32 %v3556, 7
    %v3558 = vsub.s32 %v3555, %v3557
    %v3559 = vrot.slane %v3551, %v3558
    %v3561 = vunpack.c.l.s4 1934713408
    %v3562 = vunpack.c.0.s8 %v3561
    %v3563 = vlaneseq
    %v3564 = vshrl.u32 %v3563, 7
    %v3565 = vsub.s32 %v3562, %v3564
    %v3566 = vrot.slane %v3552, %v3565
    %v3567 = vcombine.low %v3502, %v3518
    %v3568 = vcombine.high %v3502, %v3518
    %v3570 = vunpack.c.l.s4 1934713408
    %v3571 = vunpack.c.0.s8 %v3570
    %v3572 = vlaneseq
    %v3573 = vshrl.u32 %v3572, 7
    %v3574 = vsub.s32 %v3571, %v3573
    %v3575 = vrot.slane %v3567, %v3574
    %v3577 = vunpack.c.l.s4 1934713408
    %v3578 = vunpack.c.0.s8 %v3577
    %v3579 = vlaneseq
    %v3580 = vshrl.u32 %v3579, 7
    %v3581 = vsub.s32 %v3578, %v3580
    %v3582 = vrot.slane %v3568, %v3581
    %v3583 = vcombine.low %v3527, %v3543
    %v3584 = vcombine.high %v3527, %v3543
    %v3586 = vunpack.c.l.s4 1934713408
    %v3587 = vunpack.c.0.s8 %v3586
    %v3588 = vlaneseq
    %v3589 = vshrl.u32 %v3588, 7
    %v3590 = vsub.s32 %v3587, %v3589
    %v3591 = vrot.slane %v3583, %v3590
    %v3593 = vunpack.c.l.s4 1934713408
    %v3594 = vunpack.c.0.s8 %v3593
    %v3595 = vlaneseq
    %v3596 = vshrl.u32 %v3595, 7
    %v3597 = vsub.s32 %v3594, %v3596
    %v3598 = vrot.slane %v3584, %v3597
    %v3599 = vcombine.low %v3534, %v3550
    %v3600 = vcombine.high %v3534, %v3550
    %v3602 = vunpack.c.l.s4 1934713408
    %v3603 = vunpack.c.0.s8 %v3602
    %v3604 = vlaneseq
    %v3605 = vshrl.u32 %v3604, 7
    %v3606 = vsub.s32 %v3603, %v3605
    %v3607 = vrot.slane %v3599, %v3606
    %v3609 = vunpack.c.l.s4 1934713408
    %v3610 = vunpack.c.0.s8 %v3609
    %v3611 = vlaneseq
    %v3612 = vshrl.u32 %v3611, 7
    %v3613 = vsub.s32 %v3610, %v3612
    %v3614 = vrot.slane %v3600, %v3613
    %v3615 = vcombine.low %v3559, %v3591
    %v3616 = vcombine.high %v3559, %v3591
    %v3617 = vcombine.low %v3566, %v3598
    %v3618 = vcombine.high %v3566, %v3598
    %v3619 = vcombine.low %v3575, %v3607
    %v3620 = vcombine.high %v3575, %v3607
    %v3621 = vcombine.low %v3582, %v3614
    %v3622 = vcombine.high %v3582, %v3614
    %v3623 = vcombine.low %v749, %v771
    %v3624 = vcombine.high %v749, %v771
    %v3626 = vunpack.c.l.s4 1983009808
    %v3627 = vunpack.c.0.s8 %v3626
    %v3628 = vlaneseq
    %v3629 = vshrl.u32 %v3628, 7
    %v3630 = vsub.s32 %v3627, %v3629
    %v3631 = vrot.slane %v3623, %v3630
    %v3633 = vunpack.c.l.s4 1983009808
    %v3634 = vunpack.c.0.s8 %v3633
    %v3635 = vlaneseq
    %v3636 = vshrl.u32 %v3635, 7
    %v3637 = vsub.s32 %v3634, %v3636
    %v3638 = vrot.slane %v3624, %v3637
    %v3639 = vcombine.low %v760, %v782
    %v3640 = vcombine.high %v760, %v782
    %v3642 = vunpack.c.l.s4 1983009808
    %v3643 = vunpack.c.0.s8 %v3642
    %v3644 = vlaneseq
    %v3645 = vshrl.u32 %v3644, 7
    %v3646 = vsub.s32 %v3643, %v3645
    %v3647 = vrot.slane %v3639, %v3646
    %v3649 = vunpack.c.l.s4 1983009808
    %v3650 = vunpack.c.0.s8 %v3649
    %v3651 = vlaneseq
    %v3652 = vshrl.u32 %v3651, 7
    %v3653 = vsub.s32 %v3650, %v3652
    %v3654 = vrot.slane %v3640, %v3653
    %v3655 = vcombine.low %v793, %v815
    %v3656 = vcombine.high %v793, %v815
    %v3658 = vunpack.c.l.s4 1983009808
    %v3659 = vunpack.c.0.s8 %v3658
    %v3660 = vlaneseq
    %v3661 = vshrl.u32 %v3660, 7
    %v3662 = vsub.s32 %v3659, %v3661
    %v3663 = vrot.slane %v3655, %v3662
    %v3665 = vunpack.c.l.s4 1983009808
    %v3666 = vunpack.c.0.s8 %v3665
    %v3667 = vlaneseq
    %v3668 = vshrl.u32 %v3667, 7
    %v3669 = vsub.s32 %v3666, %v3668
    %v3670 = vrot.slane %v3656, %v3669
    %v3671 = vcombine.low %v804, %v826
    %v3672 = vcombine.high %v804, %v826
    %v3674 = vunpack.c.l.s4 1983009808
    %v3675 = vunpack.c.0.s8 %v3674
    %v3676 = vlaneseq
    %v3677 = vshrl.u32 %v3676, 7
    %v3678 = vsub.s32 %v3675, %v3677
    %v3679 = vrot.slane %v3671, %v3678
    %v3681 = vunpack.c.l.s4 1983009808
    %v3682 = vunpack.c.0.s8 %v3681
    %v3683 = vlaneseq
    %v3684 = vshrl.u32 %v3683, 7
    %v3685 = vsub.s32 %v3682, %v3684
    %v3686 = vrot.slane %v3672, %v3685
    %v3687 = vcombine.low %v3631, %v3647
    %v3688 = vcombine.high %v3631, %v3647
    %v3690 = vunpack.c.l.s4 1934713408
    %v3691 = vunpack.c.0.s8 %v3690
    %v3692 = vlaneseq
    %v3693 = vshrl.u32 %v3692, 7
    %v3694 = vsub.s32 %v3691, %v3693
    %v3695 = vrot.slane %v3687, %v3694
    %v3697 = vunpack.c.l.s4 1934713408
    %v3698 = vunpack.c.0.s8 %v3697
    %v3699 = vlaneseq
    %v3700 = vshrl.u32 %v3699, 7
    %v3701 = vsub.s32 %v3698, %v3700
    %v3702 = vrot.slane %v3688, %v3701
    %v3703 = vcombine.low %v3638, %v3654
    %v3704 = vcombine.high %v3638, %v3654
    %v3706 = vunpack.c.l.s4 1934713408
    %v3707 = vunpack.c.0.s8 %v3706
    %v3708 = vlaneseq
    %v3709 = vshrl.u32 %v3708, 7
    %v3710 = vsub.s32 %v3707, %v3709
    %v3711 = vrot.slane %v3703, %v3710
    %v3713 = vunpack.c.l.s4 1934713408
    %v3714 = vunpack.c.0.s8 %v3713
    %v3715 = vlaneseq
    %v3716 = vshrl.u32 %v3715, 7
    %v3717 = vsub.s32 %v3714, %v3716
    %v3718 = vrot.slane %v3704, %v3717
    %v3719 = vcombine.low %v3663, %v3679
    %v3720 = vcombine.high %v3663, %v3679
    %v3722 = vunpack.c.l.s4 1934713408
    %v3723 = vunpack.c.0.s8 %v3722
    %v3724 = vlaneseq
    %v3725 = vshrl.u32 %v3724, 7
    %v3726 = vsub.s32 %v3723, %v3725
    %v3727 = vrot.slane %v3719, %v3726
    %v3729 = vunpack.c.l.s4 1934713408
    %v3730 = vunpack.c.0.s8 %v3729
    %v3731 = vlaneseq
    %v3732 = vshrl.u32 %v3731, 7
    %v3733 = vsub.s32 %v3730, %v3732
    %v3734 = vrot.slane %v3720, %v3733
    %v3735 = vcombine.low %v3670, %v3686
    %v3736 = vcombine.high %v3670, %v3686
    %v3738 = vunpack.c.l.s4 1934713408
    %v3739 = vunpack.c.0.s8 %v3738
    %v3740 = vlaneseq
    %v3741 = vshrl.u32 %v3740, 7
    %v3742 = vsub.s32 %v3739, %v3741
    %v3743 = vrot.slane %v3735, %v3742
    %v3745 = vunpack.c.l.s4 1934713408
    %v3746 = vunpack.c.0.s8 %v3745
    %v3747 = vlaneseq
    %v3748 = vshrl.u32 %v3747, 7
    %v3749 = vsub.s32 %v3746, %v3748
    %v3750 = vrot.slane %v3736, %v3749
    %v3751 = vcombine.low %v3695, %v3727
    %v3752 = vcombine.high %v3695, %v3727
    %v3753 = vcombine.low %v3702, %v3734
    %v3754 = vcombine.high %v3702, %v3734
    %v3755 = vcombine.low %v3711, %v3743
    %v3756 = vcombine.high %v3711, %v3743
    %v3757 = vcombine.low %v3718, %v3750
    %v3758 = vcombine.high %v3718, %v3750
    %v3759 = vcombine.low %v837, %v859
    %v3760 = vcombine.high %v837, %v859
    %v3762 = vunpack.c.l.s4 1983009808
    %v3763 = vunpack.c.0.s8 %v3762
    %v3764 = vlaneseq
    %v3765 = vshrl.u32 %v3764, 7
    %v3766 = vsub.s32 %v3763, %v3765
    %v3767 = vrot.slane %v3759, %v3766
    %v3769 = vunpack.c.l.s4 1983009808
    %v3770 = vunpack.c.0.s8 %v3769
    %v3771 = vlaneseq
    %v3772 = vshrl.u32 %v3771, 7
    %v3773 = vsub.s32 %v3770, %v3772
    %v3774 = vrot.slane %v3760, %v3773
    %v3775 = vcombine.low %v848, %v870
    %v3776 = vcombine.high %v848, %v870
    %v3778 = vunpack.c.l.s4 1983009808
    %v3779 = vunpack.c.0.s8 %v3778
    %v3780 = vlaneseq
    %v3781 = vshrl.u32 %v3780, 7
    %v3782 = vsub.s32 %v3779, %v3781
    %v3783 = vrot.slane %v3775, %v3782
    %v3785 = vunpack.c.l.s4 1983009808
    %v3786 = vunpack.c.0.s8 %v3785
    %v3787 = vlaneseq
    %v3788 = vshrl.u32 %v3787, 7
    %v3789 = vsub.s32 %v3786, %v3788
    %v3790 = vrot.slane %v3776, %v3789
    %v3791 = vcombine.low %v881, %v903
    %v3792 = vcombine.high %v881, %v903
    %v3794 = vunpack.c.l.s4 1983009808
    %v3795 = vunpack.c.0.s8 %v3794
    %v3796 = vlaneseq
    %v3797 = vshrl.u32 %v3796, 7
    %v3798 = vsub.s32 %v3795, %v3797
    %v3799 = vrot.slane %v3791, %v3798
    %v3801 = vunpack.c.l.s4 1983009808
    %v3802 = vunpack.c.0.s8 %v3801
    %v3803 = vlaneseq
    %v3804 = vshrl.u32 %v3803, 7
    %v3805 = vsub.s32 %v3802, %v3804
    %v3806 = vrot.slane %v3792, %v3805
    %v3807 = vcombine.low %v892, %v914
    %v3808 = vcombine.high %v892, %v914
    %v3810 = vunpack.c.l.s4 1983009808
    %v3811 = vunpack.c.0.s8 %v3810
    %v3812 = vlaneseq
    %v3813 = vshrl.u32 %v3812, 7
    %v3814 = vsub.s32 %v3811, %v3813
    %v3815 = vrot.slane %v3807, %v3814
    %v3817 = vunpack.c.l.s4 1983009808
    %v3818 = vunpack.c.0.s8 %v3817
    %v3819 = vlaneseq
    %v3820 = vshrl.u32 %v3819, 7
    %v3821 = vsub.s32 %v3818, %v3820
    %v3822 = vrot.slane %v3808, %v3821
    %v3823 = vcombine.low %v3767, %v3783
    %v3824 = vcombine.high %v3767, %v3783
    %v3826 = vunpack.c.l.s4 1934713408
    %v3827 = vunpack.c.0.s8 %v3826
    %v3828 = vlaneseq
    %v3829 = vshrl.u32 %v3828, 7
    %v3830 = vsub.s32 %v3827, %v3829
    %v3831 = vrot.slane %v3823, %v3830
    %v3833 = vunpack.c.l.s4 1934713408
    %v3834 = vunpack.c.0.s8 %v3833
    %v3835 = vlaneseq
    %v3836 = vshrl.u32 %v3835, 7
    %v3837 = vsub.s32 %v3834, %v3836
    %v3838 = vrot.slane %v3824, %v3837
    %v3839 = vcombine.low %v3774, %v3790
    %v3840 = vcombine.high %v3774, %v3790
    %v3842 = vunpack.c.l.s4 1934713408
    %v3843 = vunpack.c.0.s8 %v3842
    %v3844 = vlaneseq
    %v3845 = vshrl.u32 %v3844, 7
    %v3846 = vsub.s32 %v3843, %v3845
    %v3847 = vrot.slane %v3839, %v3846
    %v3849 = vunpack.c.l.s4 1934713408
    %v3850 = vunpack.c.0.s8 %v3849
    %v3851 = vlaneseq
    %v3852 = vshrl.u32 %v3851, 7
    %v3853 = vsub.s32 %v3850, %v3852
    %v3854 = vrot.slane %v3840, %v3853
    %v3855 = vcombine.low %v3799, %v3815
    %v3856 = vcombine.high %v3799, %v3815
    %v3858 = vunpack.c.l.s4 1934713408
    %v3859 = vunpack.c.0.s8 %v3858
    %v3860 = vlaneseq
    %v3861 = vshrl.u32 %v3860, 7
    %v3862 = vsub.s32 %v3859, %v3861
    %v3863 = vrot.slane %v3855, %v3862
    %v3865 = vunpack.c.l.s4 1934713408
    %v3866 = vunpack.c.0.s8 %v3865
    %v3867 = vlaneseq
    %v3868 = vshrl.u32 %v3867, 7
    %v3869 = vsub.s32 %v3866, %v3868
    %v3870 = vrot.slane %v3856, %v3869
    %v3871 = vcombine.low %v3806, %v3822
    %v3872 = vcombine.high %v3806, %v3822
    %v3874 = vunpack.c.l.s4 1934713408
    %v3875 = vunpack.c.0.s8 %v3874
    %v3876 = vlaneseq
    %v3877 = vshrl.u32 %v3876, 7
    %v3878 = vsub.s32 %v3875, %v3877
    %v3879 = vrot.slane %v3871, %v3878
    %v3881 = vunpack.c.l.s4 1934713408
    %v3882 = vunpack.c.0.s8 %v3881
    %v3883 = vlaneseq
    %v3884 = vshrl.u32 %v3883, 7
    %v3885 = vsub.s32 %v3882, %v3884
    %v3886 = vrot.slane %v3872, %v3885
    %v3887 = vcombine.low %v3831, %v3863
    %v3888 = vcombine.high %v3831, %v3863
    %v3889 = vcombine.low %v3838, %v3870
    %v3890 = vcombine.high %v3838, %v3870
    %v3891 = vcombine.low %v3847, %v3879
    %v3892 = vcombine.high %v3847, %v3879
    %v3893 = vcombine.low %v3854, %v3886
    %v3894 = vcombine.high %v3854, %v3886
    %v3895 = vcombine.low %v753, %v775
    %v3896 = vcombine.high %v753, %v775
    %v3898 = vunpack.c.l.s4 1983009808
    %v3899 = vunpack.c.0.s8 %v3898
    %v3900 = vlaneseq
    %v3901 = vshrl.u32 %v3900, 7
    %v3902 = vsub.s32 %v3899, %v3901
    %v3903 = vrot.slane %v3895, %v3902
    %v3905 = vunpack.c.l.s4 1983009808
    %v3906 = vunpack.c.0.s8 %v3905
    %v3907 = vlaneseq
    %v3908 = vshrl.u32 %v3907, 7
    %v3909 = vsub.s32 %v3906, %v3908
    %v3910 = vrot.slane %v3896, %v3909
    %v3911 = vcombine.low %v764, %v786
    %v3912 = vcombine.high %v764, %v786
    %v3914 = vunpack.c.l.s4 1983009808
    %v3915 = vunpack.c.0.s8 %v3914
    %v3916 = vlaneseq
    %v3917 = vshrl.u32 %v3916, 7
    %v3918 = vsub.s32 %v3915, %v3917
    %v3919 = vrot.slane %v3911, %v3918
    %v3921 = vunpack.c.l.s4 1983009808
    %v3922 = vunpack.c.0.s8 %v3921
    %v3923 = vlaneseq
    %v3924 = vshrl.u32 %v3923, 7
    %v3925 = vsub.s32 %v3922, %v3924
    %v3926 = vrot.slane %v3912, %v3925
    %v3927 = vcombine.low %v797, %v819
    %v3928 = vcombine.high %v797, %v819
    %v3930 = vunpack.c.l.s4 1983009808
    %v3931 = vunpack.c.0.s8 %v3930
    %v3932 = vlaneseq
    %v3933 = vshrl.u32 %v3932, 7
    %v3934 = vsub.s32 %v3931, %v3933
    %v3935 = vrot.slane %v3927, %v3934
    %v3937 = vunpack.c.l.s4 1983009808
    %v3938 = vunpack.c.0.s8 %v3937
    %v3939 = vlaneseq
    %v3940 = vshrl.u32 %v3939, 7
    %v3941 = vsub.s32 %v3938, %v3940
    %v3942 = vrot.slane %v3928, %v3941
    %v3943 = vcombine.low %v808, %v830
    %v3944 = vcombine.high %v808, %v830
    %v3946 = vunpack.c.l.s4 1983009808
    %v3947 = vunpack.c.0.s8 %v3946
    %v3948 = vlaneseq
    %v3949 = vshrl.u32 %v3948, 7
    %v3950 = vsub.s32 %v3947, %v3949
    %v3951 = vrot.slane %v3943, %v3950
    %v3953 = vunpack.c.l.s4 1983009808
    %v3954 = vunpack.c.0.s8 %v3953
    %v3955 = vlaneseq
    %v3956 = vshrl.u32 %v3955, 7
    %v3957 = vsub.s32 %v3954, %v3956
    %v3958 = vrot.slane %v3944, %v3957
    %v3959 = vcombine.low %v3903, %v3919
    %v3960 = vcombine.high %v3903, %v3919
    %v3962 = vunpack.c.l.s4 1934713408
    %v3963 = vunpack.c.0.s8 %v3962
    %v3964 = vlaneseq
    %v3965 = vshrl.u32 %v3964, 7
    %v3966 = vsub.s32 %v3963, %v3965
    %v3967 = vrot.slane %v3959, %v3966
    %v3969 = vunpack.c.l.s4 1934713408
    %v3970 = vunpack.c.0.s8 %v3969
    %v3971 = vlaneseq
    %v3972 = vshrl.u32 %v3971, 7
    %v3973 = vsub.s32 %v3970, %v3972
    %v3974 = vrot.slane %v3960, %v3973
    %v3975 = vcombine.low %v3910, %v3926
    %v3976 = vcombine.high %v3910, %v3926
    %v3978 = vunpack.c.l.s4 1934713408
    %v3979 = vunpack.c.0.s8 %v3978
    %v3980 = vlaneseq
    %v3981 = vshrl.u32 %v3980, 7
    %v3982 = vsub.s32 %v3979, %v3981
    %v3983 = vrot.slane %v3975, %v3982
    %v3985 = vunpack.c.l.s4 1934713408
    %v3986 = vunpack.c.0.s8 %v3985
    %v3987 = vlaneseq
    %v3988 = vshrl.u32 %v3987, 7
    %v3989 = vsub.s32 %v3986, %v3988
    %v3990 = vrot.slane %v3976, %v3989
    %v3991 = vcombine.low %v3935, %v3951
    %v3992 = vcombine.high %v3935, %v3951
    %v3994 = vunpack.c.l.s4 1934713408
    %v3995 = vunpack.c.0.s8 %v3994
    %v3996 = vlaneseq
    %v3997 = vshrl.u32 %v3996, 7
    %v3998 = vsub.s32 %v3995, %v3997
    %v3999 = vrot.slane %v3991, %v3998
    %v4001 = vunpack.c.l.s4 1934713408
    %v4002 = vunpack.c.0.s8 %v4001
    %v4003 = vlaneseq
    %v4004 = vshrl.u32 %v4003, 7
    %v4005 = vsub.s32 %v4002, %v4004
    %v4006 = vrot.slane %v3992, %v4005
    %v4007 = vcombine.low %v3942, %v3958
    %v4008 = vcombine.high %v3942, %v3958
    %v4010 = vunpack.c.l.s4 1934713408
    %v4011 = vunpack.c.0.s8 %v4010
    %v4012 = vlaneseq
    %v4013 = vshrl.u32 %v4012, 7
    %v4014 = vsub.s32 %v4011, %v4013
    %v4015 = vrot.slane %v4007, %v4014
    %v4017 = vunpack.c.l.s4 1934713408
    %v4018 = vunpack.c.0.s8 %v4017
    %v4019 = vlaneseq
    %v4020 = vshrl.u32 %v4019, 7
    %v4021 = vsub.s32 %v4018, %v4020
    %v4022 = vrot.slane %v4008, %v4021
    %v4023 = vcombine.low %v3967, %v3999
    %v4024 = vcombine.high %v3967, %v3999
    %v4025 = vcombine.low %v3974, %v4006
    %v4026 = vcombine.high %v3974, %v4006
    %v4027 = vcombine.low %v3983, %v4015
    %v4028 = vcombine.high %v3983, %v4015
    %v4029 = vcombine.low %v3990, %v4022
    %v4030 = vcombine.high %v3990, %v4022
    %v4031 = vcombine.low %v841, %v863
    %v4032 = vcombine.high %v841, %v863
    %v4034 = vunpack.c.l.s4 1983009808
    %v4035 = vunpack.c.0.s8 %v4034
    %v4036 = vlaneseq
    %v4037 = vshrl.u32 %v4036, 7
    %v4038 = vsub.s32 %v4035, %v4037
    %v4039 = vrot.slane %v4031, %v4038
    %v4041 = vunpack.c.l.s4 1983009808
    %v4042 = vunpack.c.0.s8 %v4041
    %v4043 = vlaneseq
    %v4044 = vshrl.u32 %v4043, 7
    %v4045 = vsub.s32 %v4042, %v4044
    %v4046 = vrot.slane %v4032, %v4045
    %v4047 = vcombine.low %v852, %v874
    %v4048 = vcombine.high %v852, %v874
    %v4050 = vunpack.c.l.s4 1983009808
    %v4051 = vunpack.c.0.s8 %v4050
    %v4052 = vlaneseq
    %v4053 = vshrl.u32 %v4052, 7
    %v4054 = vsub.s32 %v4051, %v4053
    %v4055 = vrot.slane %v4047, %v4054
    %v4057 = vunpack.c.l.s4 1983009808
    %v4058 = vunpack.c.0.s8 %v4057
    %v4059 = vlaneseq
    %v4060 = vshrl.u32 %v4059, 7
    %v4061 = vsub.s32 %v4058, %v4060
    %v4062 = vrot.slane %v4048, %v4061
    %v4063 = vcombine.low %v885, %v907
    %v4064 = vcombine.high %v885, %v907
    %v4066 = vunpack.c.l.s4 1983009808
    %v4067 = vunpack.c.0.s8 %v4066
    %v4068 = vlaneseq
    %v4069 = vshrl.u32 %v4068, 7
    %v4070 = vsub.s32 %v4067, %v4069
    %v4071 = vrot.slane %v4063, %v4070
    %v4073 = vunpack.c.l.s4 1983009808
    %v4074 = vunpack.c.0.s8 %v4073
    %v4075 = vlaneseq
    %v4076 = vshrl.u32 %v4075, 7
    %v4077 = vsub.s32 %v4074, %v4076
    %v4078 = vrot.slane %v4064, %v4077
    %v4079 = vcombine.low %v896, %v918
    %v4080 = vcombine.high %v896, %v918
    %v4082 = vunpack.c.l.s4 1983009808
    %v4083 = vunpack.c.0.s8 %v4082
    %v4084 = vlaneseq
    %v4085 = vshrl.u32 %v4084, 7
    %v4086 = vsub.s32 %v4083, %v4085
    %v4087 = vrot.slane %v4079, %v4086
    %v4089 = vunpack.c.l.s4 1983009808
    %v4090 = vunpack.c.0.s8 %v4089
    %v4091 = vlaneseq
    %v4092 = vshrl.u32 %v4091, 7
    %v4093 = vsub.s32 %v4090, %v4092
    %v4094 = vrot.slane %v4080, %v4093
    %v4095 = vcombine.low %v4039, %v4055
    %v4096 = vcombine.high %v4039, %v4055
    %v4098 = vunpack.c.l.s4 1934713408
    %v4099 = vunpack.c.0.s8 %v4098
    %v4100 = vlaneseq
    %v4101 = vshrl.u32 %v4100, 7
    %v4102 = vsub.s32 %v4099, %v4101
    %v4103 = vrot.slane %v4095, %v4102
    %v4105 = vunpack.c.l.s4 1934713408
    %v4106 = vunpack.c.0.s8 %v4105
    %v4107 = vlaneseq
    %v4108 = vshrl.u32 %v4107, 7
    %v4109 = vsub.s32 %v4106, %v4108
    %v4110 = vrot.slane %v4096, %v4109
    %v4111 = vcombine.low %v4046, %v4062
    %v4112 = vcombine.high %v4046, %v4062
    %v4114 = vunpack.c.l.s4 1934713408
    %v4115 = vunpack.c.0.s8 %v4114
    %v4116 = vlaneseq
    %v4117 = vshrl.u32 %v4116, 7
    %v4118 = vsub.s32 %v4115, %v4117
    %v4119 = vrot.slane %v4111, %v4118
    %v4121 = vunpack.c.l.s4 1934713408
    %v4122 = vunpack.c.0.s8 %v4121
    %v4123 = vlaneseq
    %v4124 = vshrl.u32 %v4123, 7
    %v4125 = vsub.s32 %v4122, %v4124
    %v4126 = vrot.slane %v4112, %v4125
    %v4127 = vcombine.low %v4071, %v4087
    %v4128 = vcombine.high %v4071, %v4087
    %v4130 = vunpack.c.l.s4 1934713408
    %v4131 = vunpack.c.0.s8 %v4130
    %v4132 = vlaneseq
    %v4133 = vshrl.u32 %v4132, 7
    %v4134 = vsub.s32 %v4131, %v4133
    %v4135 = vrot.slane %v4127, %v4134
    %v4137 = vunpack.c.l.s4 1934713408
    %v4138 = vunpack.c.0.s8 %v4137
    %v4139 = vlaneseq
    %v4140 = vshrl.u32 %v4139, 7
    %v4141 = vsub.s32 %v4138, %v4140
    %v4142 = vrot.slane %v4128, %v4141
    %v4143 = vcombine.low %v4078, %v4094
    %v4144 = vcombine.high %v4078, %v4094
    %v4146 = vunpack.c.l.s4 1934713408
    %v4147 = vunpack.c.0.s8 %v4146
    %v4148 = vlaneseq
    %v4149 = vshrl.u32 %v4148, 7
    %v4150 = vsub.s32 %v4147, %v4149
    %v4151 = vrot.slane %v4143, %v4150
    %v4153 = vunpack.c.l.s4 1934713408
    %v4154 = vunpack.c.0.s8 %v4153
    %v4155 = vlaneseq
    %v4156 = vshrl.u32 %v4155, 7
    %v4157 = vsub.s32 %v4154, %v4156
    %v4158 = vrot.slane %v4144, %v4157
    %v4159 = vcombine.low %v4103, %v4135
    %v4160 = vcombine.high %v4103, %v4135
    %v4161 = vcombine.low %v4110, %v4142
    %v4162 = vcombine.high %v4110, %v4142
    %v4163 = vcombine.low %v4119, %v4151
    %v4164 = vcombine.high %v4119, %v4151
    %v4165 = vcombine.low %v4126, %v4158
    %v4166 = vcombine.high %v4126, %v4158
    %v4167 = vcombine.low %v925, %v947
    %v4168 = vcombine.high %v925, %v947
    %v4170 = vunpack.c.l.s4 1983009808
    %v4171 = vunpack.c.0.s8 %v4170
    %v4172 = vlaneseq
    %v4173 = vshrl.u32 %v4172, 7
    %v4174 = vsub.s32 %v4171, %v4173
    %v4175 = vrot.slane %v4167, %v4174
    %v4177 = vunpack.c.l.s4 1983009808
    %v4178 = vunpack.c.0.s8 %v4177
    %v4179 = vlaneseq
    %v4180 = vshrl.u32 %v4179, 7
    %v4181 = vsub.s32 %v4178, %v4180
    %v4182 = vrot.slane %v4168, %v4181
    %v4183 = vcombine.low %v936, %v958
    %v4184 = vcombine.high %v936, %v958
    %v4186 = vunpack.c.l.s4 1983009808
    %v4187 = vunpack.c.0.s8 %v4186
    %v4188 = vlaneseq
    %v4189 = vshrl.u32 %v4188, 7
    %v4190 = vsub.s32 %v4187, %v4189
    %v4191 = vrot.slane %v4183, %v4190
    %v4193 = vunpack.c.l.s4 1983009808
    %v4194 = vunpack.c.0.s8 %v4193
    %v4195 = vlaneseq
    %v4196 = vshrl.u32 %v4195, 7
    %v4197 = vsub.s32 %v4194, %v4196
    %v4198 = vrot.slane %v4184, %v4197
    %v4199 = vcombine.low %v969, %v991
    %v4200 = vcombine.high %v969, %v991
    %v4202 = vunpack.c.l.s4 1983009808
    %v4203 = vunpack.c.0.s8 %v4202
    %v4204 = vlaneseq
    %v4205 = vshrl.u32 %v4204, 7
    %v4206 = vsub.s32 %v4203, %v4205
    %v4207 = vrot.slane %v4199, %v4206
    %v4209 = vunpack.c.l.s4 1983009808
    %v4210 = vunpack.c.0.s8 %v4209
    %v4211 = vlaneseq
    %v4212 = vshrl.u32 %v4211, 7
    %v4213 = vsub.s32 %v4210, %v4212
    %v4214 = vrot.slane %v4200, %v4213
    %v4215 = vcombine.low %v980, %v1002
    %v4216 = vcombine.high %v980, %v1002
    %v4218 = vunpack.c.l.s4 1983009808
    %v4219 = vunpack.c.0.s8 %v4218
    %v4220 = vlaneseq
    %v4221 = vshrl.u32 %v4220, 7
    %v4222 = vsub.s32 %v4219, %v4221
    %v4223 = vrot.slane %v4215, %v4222
    %v4225 = vunpack.c.l.s4 1983009808
    %v4226 = vunpack.c.0.s8 %v4225
    %v4227 = vlaneseq
    %v4228 = vshrl.u32 %v4227, 7
    %v4229 = vsub.s32 %v4226, %v4228
    %v4230 = vrot.slane %v4216, %v4229
    %v4231 = vcombine.low %v4175, %v4191
    %v4232 = vcombine.high %v4175, %v4191
    %v4234 = vunpack.c.l.s4 1934713408
    %v4235 = vunpack.c.0.s8 %v4234
    %v4236 = vlaneseq
    %v4237 = vshrl.u32 %v4236, 7
    %v4238 = vsub.s32 %v4235, %v4237
    %v4239 = vrot.slane %v4231, %v4238
    %v4241 = vunpack.c.l.s4 1934713408
    %v4242 = vunpack.c.0.s8 %v4241
    %v4243 = vlaneseq
    %v4244 = vshrl.u32 %v4243, 7
    %v4245 = vsub.s32 %v4242, %v4244
    %v4246 = vrot.slane %v4232, %v4245
    %v4247 = vcombine.low %v4182, %v4198
    %v4248 = vcombine.high %v4182, %v4198
    %v4250 = vunpack.c.l.s4 1934713408
    %v4251 = vunpack.c.0.s8 %v4250
    %v4252 = vlaneseq
    %v4253 = vshrl.u32 %v4252, 7
    %v4254 = vsub.s32 %v4251, %v4253
    %v4255 = vrot.slane %v4247, %v4254
    %v4257 = vunpack.c.l.s4 1934713408
    %v4258 = vunpack.c.0.s8 %v4257
    %v4259 = vlaneseq
    %v4260 = vshrl.u32 %v4259, 7
    %v4261 = vsub.s32 %v4258, %v4260
    %v4262 = vrot.slane %v4248, %v4261
    %v4263 = vcombine.low %v4207, %v4223
    %v4264 = vcombine.high %v4207, %v4223
    %v4266 = vunpack.c.l.s4 1934713408
    %v4267 = vunpack.c.0.s8 %v4266
    %v4268 = vlaneseq
    %v4269 = vshrl.u32 %v4268, 7
    %v4270 = vsub.s32 %v4267, %v4269
    %v4271 = vrot.slane %v4263, %v4270
    %v4273 = vunpack.c.l.s4 1934713408
    %v4274 = vunpack.c.0.s8 %v4273
    %v4275 = vlaneseq
    %v4276 = vshrl.u32 %v4275, 7
    %v4277 = vsub.s32 %v4274, %v4276
    %v4278 = vrot.slane %v4264, %v4277
    %v4279 = vcombine.low %v4214, %v4230
    %v4280 = vcombine.high %v4214, %v4230
    %v4282 = vunpack.c.l.s4 1934713408
    %v4283 = vunpack.c.0.s8 %v4282
    %v4284 = vlaneseq
    %v4285 = vshrl.u32 %v4284, 7
    %v4286 = vsub.s32 %v4283, %v4285
    %v4287 = vrot.slane %v4279, %v4286
    %v4289 = vunpack.c.l.s4 1934713408
    %v4290 = vunpack.c.0.s8 %v4289
    %v4291 = vlaneseq
    %v4292 = vshrl.u32 %v4291, 7
    %v4293 = vsub.s32 %v4290, %v4292
    %v4294 = vrot.slane %v4280, %v4293
    %v4295 = vcombine.low %v4239, %v4271
    %v4296 = vcombine.high %v4239, %v4271
    %v4297 = vcombine.low %v4246, %v4278
    %v4298 = vcombine.high %v4246, %v4278
    %v4299 = vcombine.low %v4255, %v4287
    %v4300 = vcombine.high %v4255, %v4287
    %v4301 = vcombine.low %v4262, %v4294
    %v4302 = vcombine.high %v4262, %v4294
    %v4303 = vcombine.low %v1013, %v1035
    %v4304 = vcombine.high %v1013, %v1035
    %v4306 = vunpack.c.l.s4 1983009808
    %v4307 = vunpack.c.0.s8 %v4306
    %v4308 = vlaneseq
    %v4309 = vshrl.u32 %v4308, 7
    %v4310 = vsub.s32 %v4307, %v4309
    %v4311 = vrot.slane %v4303, %v4310
    %v4313 = vunpack.c.l.s4 1983009808
    %v4314 = vunpack.c.0.s8 %v4313
    %v4315 = vlaneseq
    %v4316 = vshrl.u32 %v4315, 7
    %v4317 = vsub.s32 %v4314, %v4316
    %v4318 = vrot.slane %v4304, %v4317
    %v4319 = vcombine.low %v1024, %v1046
    %v4320 = vcombine.high %v1024, %v1046
    %v4322 = vunpack.c.l.s4 1983009808
    %v4323 = vunpack.c.0.s8 %v4322
    %v4324 = vlaneseq
    %v4325 = vshrl.u32 %v4324, 7
    %v4326 = vsub.s32 %v4323, %v4325
    %v4327 = vrot.slane %v4319, %v4326
    %v4329 = vunpack.c.l.s4 1983009808
    %v4330 = vunpack.c.0.s8 %v4329
    %v4331 = vlaneseq
    %v4332 = vshrl.u32 %v4331, 7
    %v4333 = vsub.s32 %v4330, %v4332
    %v4334 = vrot.slane %v4320, %v4333
    %v4335 = vcombine.low %v1057, %v1079
    %v4336 = vcombine.high %v1057, %v1079
    %v4338 = vunpack.c.l.s4 1983009808
    %v4339 = vunpack.c.0.s8 %v4338
    %v4340 = vlaneseq
    %v4341 = vshrl.u32 %v4340, 7
    %v4342 = vsub.s32 %v4339, %v4341
    %v4343 = vrot.slane %v4335, %v4342
    %v4345 = vunpack.c.l.s4 1983009808
    %v4346 = vunpack.c.0.s8 %v4345
    %v4347 = vlaneseq
    %v4348 = vshrl.u32 %v4347, 7
    %v4349 = vsub.s32 %v4346, %v4348
    %v4350 = vrot.slane %v4336, %v4349
    %v4351 = vcombine.low %v1068, %v1090
    %v4352 = vcombine.high %v1068, %v1090
    %v4354 = vunpack.c.l.s4 1983009808
    %v4355 = vunpack.c.0.s8 %v4354
    %v4356 = vlaneseq
    %v4357 = vshrl.u32 %v4356, 7
    %v4358 = vsub.s32 %v4355, %v4357
    %v4359 = vrot.slane %v4351, %v4358
    %v4361 = vunpack.c.l.s4 1983009808
    %v4362 = vunpack.c.0.s8 %v4361
    %v4363 = vlaneseq
    %v4364 = vshrl.u32 %v4363, 7
    %v4365 = vsub.s32 %v4362, %v4364
    %v4366 = vrot.slane %v4352, %v4365
    %v4367 = vcombine.low %v4311, %v4327
    %v4368 = vcombine.high %v4311, %v4327
    %v4370 = vunpack.c.l.s4 1934713408
    %v4371 = vunpack.c.0.s8 %v4370
    %v4372 = vlaneseq
    %v4373 = vshrl.u32 %v4372, 7
    %v4374 = vsub.s32 %v4371, %v4373
    %v4375 = vrot.slane %v4367, %v4374
    %v4377 = vunpack.c.l.s4 1934713408
    %v4378 = vunpack.c.0.s8 %v4377
    %v4379 = vlaneseq
    %v4380 = vshrl.u32 %v4379, 7
    %v4381 = vsub.s32 %v4378, %v4380
    %v4382 = vrot.slane %v4368, %v4381
    %v4383 = vcombine.low %v4318, %v4334
    %v4384 = vcombine.high %v4318, %v4334
    %v4386 = vunpack.c.l.s4 1934713408
    %v4387 = vunpack.c.0.s8 %v4386
    %v4388 = vlaneseq
    %v4389 = vshrl.u32 %v4388, 7
    %v4390 = vsub.s32 %v4387, %v4389
    %v4391 = vrot.slane %v4383, %v4390
    %v4393 = vunpack.c.l.s4 1934713408
    %v4394 = vunpack.c.0.s8 %v4393
    %v4395 = vlaneseq
    %v4396 = vshrl.u32 %v4395, 7
    %v4397 = vsub.s32 %v4394, %v4396
    %v4398 = vrot.slane %v4384, %v4397
    %v4399 = vcombine.low %v4343, %v4359
    %v4400 = vcombine.high %v4343, %v4359
    %v4402 = vunpack.c.l.s4 1934713408
    %v4403 = vunpack.c.0.s8 %v4402
    %v4404 = vlaneseq
    %v4405 = vshrl.u32 %v4404, 7
    %v4406 = vsub.s32 %v4403, %v4405
    %v4407 = vrot.slane %v4399, %v4406
    %v4409 = vunpack.c.l.s4 1934713408
    %v4410 = vunpack.c.0.s8 %v4409
    %v4411 = vlaneseq
    %v4412 = vshrl.u32 %v4411, 7
    %v4413 = vsub.s32 %v4410, %v4412
    %v4414 = vrot.slane %v4400, %v4413
    %v4415 = vcombine.low %v4350, %v4366
    %v4416 = vcombine.high %v4350, %v4366
    %v4418 = vunpack.c.l.s4 1934713408
    %v4419 = vunpack.c.0.s8 %v4418
    %v4420 = vlaneseq
    %v4421 = vshrl.u32 %v4420, 7
    %v4422 = vsub.s32 %v4419, %v4421
    %v4423 = vrot.slane %v4415, %v4422
    %v4425 = vunpack.c.l.s4 1934713408
    %v4426 = vunpack.c.0.s8 %v4425
    %v4427 = vlaneseq
    %v4428 = vshrl.u32 %v4427, 7
    %v4429 = vsub.s32 %v4426, %v4428
    %v4430 = vrot.slane %v4416, %v4429
    %v4431 = vcombine.low %v4375, %v4407
    %v4432 = vcombine.high %v4375, %v4407
    %v4433 = vcombine.low %v4382, %v4414
    %v4434 = vcombine.high %v4382, %v4414
    %v4435 = vcombine.low %v4391, %v4423
    %v4436 = vcombine.high %v4391, %v4423
    %v4437 = vcombine.low %v4398, %v4430
    %v4438 = vcombine.high %v4398, %v4430
    %v4439 = vcombine.low %v929, %v951
    %v4440 = vcombine.high %v929, %v951
    %v4442 = vunpack.c.l.s4 1983009808
    %v4443 = vunpack.c.0.s8 %v4442
    %v4444 = vlaneseq
    %v4445 = vshrl.u32 %v4444, 7
    %v4446 = vsub.s32 %v4443, %v4445
    %v4447 = vrot.slane %v4439, %v4446
    %v4449 = vunpack.c.l.s4 1983009808
    %v4450 = vunpack.c.0.s8 %v4449
    %v4451 = vlaneseq
    %v4452 = vshrl.u32 %v4451, 7
    %v4453 = vsub.s32 %v4450, %v4452
    %v4454 = vrot.slane %v4440, %v4453
    %v4455 = vcombine.low %v940, %v962
    %v4456 = vcombine.high %v940, %v962
    %v4458 = vunpack.c.l.s4 1983009808
    %v4459 = vunpack.c.0.s8 %v4458
    %v4460 = vlaneseq
    %v4461 = vshrl.u32 %v4460, 7
    %v4462 = vsub.s32 %v4459, %v4461
    %v4463 = vrot.slane %v4455, %v4462
    %v4465 = vunpack.c.l.s4 1983009808
    %v4466 = vunpack.c.0.s8 %v4465
    %v4467 = vlaneseq
    %v4468 = vshrl.u32 %v4467, 7
    %v4469 = vsub.s32 %v4466, %v4468
    %v4470 = vrot.slane %v4456, %v4469
    %v4471 = vcombine.low %v973, %v995
    %v4472 = vcombine.high %v973, %v995
    %v4474 = vunpack.c.l.s4 1983009808
    %v4475 = vunpack.c.0.s8 %v4474
    %v4476 = vlaneseq
    %v4477 = vshrl.u32 %v4476, 7
    %v4478 = vsub.s32 %v4475, %v4477
    %v4479 = vrot.slane %v4471, %v4478
    %v4481 = vunpack.c.l.s4 1983009808
    %v4482 = vunpack.c.0.s8 %v4481
    %v4483 = vlaneseq
    %v4484 = vshrl.u32 %v4483, 7
    %v4485 = vsub.s32 %v4482, %v4484
    %v4486 = vrot.slane %v4472, %v4485
    %v4487 = vcombine.low %v984, %v1006
    %v4488 = vcombine.high %v984, %v1006
    %v4490 = vunpack.c.l.s4 1983009808
    %v4491 = vunpack.c.0.s8 %v4490
    %v4492 = vlaneseq
    %v4493 = vshrl.u32 %v4492, 7
    %v4494 = vsub.s32 %v4491, %v4493
    %v4495 = vrot.slane %v4487, %v4494
    %v4497 = vunpack.c.l.s4 1983009808
    %v4498 = vunpack.c.0.s8 %v4497
    %v4499 = vlaneseq
    %v4500 = vshrl.u32 %v4499, 7
    %v4501 = vsub.s32 %v4498, %v4500
    %v4502 = vrot.slane %v4488, %v4501
    %v4503 = vcombine.low %v4447, %v4463
    %v4504 = vcombine.high %v4447, %v4463
    %v4506 = vunpack.c.l.s4 1934713408
    %v4507 = vunpack.c.0.s8 %v4506
    %v4508 = vlaneseq
    %v4509 = vshrl.u32 %v4508, 7
    %v4510 = vsub.s32 %v4507, %v4509
    %v4511 = vrot.slane %v4503, %v4510
    %v4513 = vunpack.c.l.s4 1934713408
    %v4514 = vunpack.c.0.s8 %v4513
    %v4515 = vlaneseq
    %v4516 = vshrl.u32 %v4515, 7
    %v4517 = vsub.s32 %v4514, %v4516
    %v4518 = vrot.slane %v4504, %v4517
    %v4519 = vcombine.low %v4454, %v4470
    %v4520 = vcombine.high %v4454, %v4470
    %v4522 = vunpack.c.l.s4 1934713408
    %v4523 = vunpack.c.0.s8 %v4522
    %v4524 = vlaneseq
    %v4525 = vshrl.u32 %v4524, 7
    %v4526 = vsub.s32 %v4523, %v4525
    %v4527 = vrot.slane %v4519, %v4526
    %v4529 = vunpack.c.l.s4 1934713408
    %v4530 = vunpack.c.0.s8 %v4529
    %v4531 = vlaneseq
    %v4532 = vshrl.u32 %v4531, 7
    %v4533 = vsub.s32 %v4530, %v4532
    %v4534 = vrot.slane %v4520, %v4533
    %v4535 = vcombine.low %v4479, %v4495
    %v4536 = vcombine.high %v4479, %v4495
    %v4538 = vunpack.c.l.s4 1934713408
    %v4539 = vunpack.c.0.s8 %v4538
    %v4540 = vlaneseq
    %v4541 = vshrl.u32 %v4540, 7
    %v4542 = vsub.s32 %v4539, %v4541
    %v4543 = vrot.slane %v4535, %v4542
    %v4545 = vunpack.c.l.s4 1934713408
    %v4546 = vunpack.c.0.s8 %v4545
    %v4547 = vlaneseq
    %v4548 = vshrl.u32 %v4547, 7
    %v4549 = vsub.s32 %v4546, %v4548
    %v4550 = vrot.slane %v4536, %v4549
    %v4551 = vcombine.low %v4486, %v4502
    %v4552 = vcombine.high %v4486, %v4502
    %v4554 = vunpack.c.l.s4 1934713408
    %v4555 = vunpack.c.0.s8 %v4554
    %v4556 = vlaneseq
    %v4557 = vshrl.u32 %v4556, 7
    %v4558 = vsub.s32 %v4555, %v4557
    %v4559 = vrot.slane %v4551, %v4558
    %v4561 = vunpack.c.l.s4 1934713408
    %v4562 = vunpack.c.0.s8 %v4561
    %v4563 = vlaneseq
    %v4564 = vshrl.u32 %v4563, 7
    %v4565 = vsub.s32 %v4562, %v4564
    %v4566 = vrot.slane %v4552, %v4565
    %v4567 = vcombine.low %v4511, %v4543
    %v4568 = vcombine.high %v4511, %v4543
    %v4569 = vcombine.low %v4518, %v4550
    %v4570 = vcombine.high %v4518, %v4550
    %v4571 = vcombine.low %v4527, %v4559
    %v4572 = vcombine.high %v4527, %v4559
    %v4573 = vcombine.low %v4534, %v4566
    %v4574 = vcombine.high %v4534, %v4566
    %v4575 = vcombine.low %v1017, %v1039
    %v4576 = vcombine.high %v1017, %v1039
    %v4578 = vunpack.c.l.s4 1983009808
    %v4579 = vunpack.c.0.s8 %v4578
    %v4580 = vlaneseq
    %v4581 = vshrl.u32 %v4580, 7
    %v4582 = vsub.s32 %v4579, %v4581
    %v4583 = vrot.slane %v4575, %v4582
    %v4585 = vunpack.c.l.s4 1983009808
    %v4586 = vunpack.c.0.s8 %v4585
    %v4587 = vlaneseq
    %v4588 = vshrl.u32 %v4587, 7
    %v4589 = vsub.s32 %v4586, %v4588
    %v4590 = vrot.slane %v4576, %v4589
    %v4591 = vcombine.low %v1028, %v1050
    %v4592 = vcombine.high %v1028, %v1050
    %v4594 = vunpack.c.l.s4 1983009808
    %v4595 = vunpack.c.0.s8 %v4594
    %v4596 = vlaneseq
    %v4597 = vshrl.u32 %v4596, 7
    %v4598 = vsub.s32 %v4595, %v4597
    %v4599 = vrot.slane %v4591, %v4598
    %v4601 = vunpack.c.l.s4 1983009808
    %v4602 = vunpack.c.0.s8 %v4601
    %v4603 = vlaneseq
    %v4604 = vshrl.u32 %v4603, 7
    %v4605 = vsub.s32 %v4602, %v4604
    %v4606 = vrot.slane %v4592, %v4605
    %v4607 = vcombine.low %v1061, %v1083
    %v4608 = vcombine.high %v1061, %v1083
    %v4610 = vunpack.c.l.s4 1983009808
    %v4611 = vunpack.c.0.s8 %v4610
    %v4612 = vlaneseq
    %v4613 = vshrl.u32 %v4612, 7
    %v4614 = vsub.s32 %v4611, %v4613
    %v4615 = vrot.slane %v4607, %v4614
    %v4617 = vunpack.c.l.s4 1983009808
    %v4618 = vunpack.c.0.s8 %v4617
    %v4619 = vlaneseq
    %v4620 = vshrl.u32 %v4619, 7
    %v4621 = vsub.s32 %v4618, %v4620
    %v4622 = vrot.slane %v4608, %v4621
    %v4623 = vcombine.low %v1072, %v1094
    %v4624 = vcombine.high %v1072, %v1094
    %v4626 = vunpack.c.l.s4 1983009808
    %v4627 = vunpack.c.0.s8 %v4626
    %v4628 = vlaneseq
    %v4629 = vshrl.u32 %v4628, 7
    %v4630 = vsub.s32 %v4627, %v4629
    %v4631 = vrot.slane %v4623, %v4630
    %v4633 = vunpack.c.l.s4 1983009808
    %v4634 = vunpack.c.0.s8 %v4633
    %v4635 = vlaneseq
    %v4636 = vshrl.u32 %v4635, 7
    %v4637 = vsub.s32 %v4634, %v4636
    %v4638 = vrot.slane %v4624, %v4637
    %v4639 = vcombine.low %v4583, %v4599
    %v4640 = vcombine.high %v4583, %v4599
    %v4642 = vunpack.c.l.s4 1934713408
    %v4643 = vunpack.c.0.s8 %v4642
    %v4644 = vlaneseq
    %v4645 = vshrl.u32 %v4644, 7
    %v4646 = vsub.s32 %v4643, %v4645
    %v4647 = vrot.slane %v4639, %v4646
    %v4649 = vunpack.c.l.s4 1934713408
    %v4650 = vunpack.c.0.s8 %v4649
    %v4651 = vlaneseq
    %v4652 = vshrl.u32 %v4651, 7
    %v4653 = vsub.s32 %v4650, %v4652
    %v4654 = vrot.slane %v4640, %v4653
    %v4655 = vcombine.low %v4590, %v4606
    %v4656 = vcombine.high %v4590, %v4606
    %v4658 = vunpack.c.l.s4 1934713408
    %v4659 = vunpack.c.0.s8 %v4658
    %v4660 = vlaneseq
    %v4661 = vshrl.u32 %v4660, 7
    %v4662 = vsub.s32 %v4659, %v4661
    %v4663 = vrot.slane %v4655, %v4662
    %v4665 = vunpack.c.l.s4 1934713408
    %v4666 = vunpack.c.0.s8 %v4665
    %v4667 = vlaneseq
    %v4668 = vshrl.u32 %v4667, 7
    %v4669 = vsub.s32 %v4666, %v4668
    %v4670 = vrot.slane %v4656, %v4669
    %v4671 = vcombine.low %v4615, %v4631
    %v4672 = vcombine.high %v4615, %v4631
    %v4674 = vunpack.c.l.s4 1934713408
    %v4675 = vunpack.c.0.s8 %v4674
    %v4676 = vlaneseq
    %v4677 = vshrl.u32 %v4676, 7
    %v4678 = vsub.s32 %v4675, %v4677
    %v4679 = vrot.slane %v4671, %v4678
    %v4681 = vunpack.c.l.s4 1934713408
    %v4682 = vunpack.c.0.s8 %v4681
    %v4683 = vlaneseq
    %v4684 = vshrl.u32 %v4683, 7
    %v4685 = vsub.s32 %v4682, %v4684
    %v4686 = vrot.slane %v4672, %v4685
    %v4687 = vcombine.low %v4622, %v4638
    %v4688 = vcombine.high %v4622, %v4638
    %v4690 = vunpack.c.l.s4 1934713408
    %v4691 = vunpack.c.0.s8 %v4690
    %v4692 = vlaneseq
    %v4693 = vshrl.u32 %v4692, 7
    %v4694 = vsub.s32 %v4691, %v4693
    %v4695 = vrot.slane %v4687, %v4694
    %v4697 = vunpack.c.l.s4 1934713408
    %v4698 = vunpack.c.0.s8 %v4697
    %v4699 = vlaneseq
    %v4700 = vshrl.u32 %v4699, 7
    %v4701 = vsub.s32 %v4698, %v4700
    %v4702 = vrot.slane %v4688, %v4701
    %v4703 = vcombine.low %v4647, %v4679
    %v4704 = vcombine.high %v4647, %v4679
    %v4705 = vcombine.low %v4654, %v4686
    %v4706 = vcombine.high %v4654, %v4686
    %v4707 = vcombine.low %v4663, %v4695
    %v4708 = vcombine.high %v4663, %v4695
    %v4709 = vcombine.low %v4670, %v4702
    %v4710 = vcombine.high %v4670, %v4702
    %v4711 = vcombine.low %v1101, %v1123
    %v4712 = vcombine.high %v1101, %v1123
    %v4714 = vunpack.c.l.s4 1983009808
    %v4715 = vunpack.c.0.s8 %v4714
    %v4716 = vlaneseq
    %v4717 = vshrl.u32 %v4716, 7
    %v4718 = vsub.s32 %v4715, %v4717
    %v4719 = vrot.slane %v4711, %v4718
    %v4721 = vunpack.c.l.s4 1983009808
    %v4722 = vunpack.c.0.s8 %v4721
    %v4723 = vlaneseq
    %v4724 = vshrl.u32 %v4723, 7
    %v4725 = vsub.s32 %v4722, %v4724
    %v4726 = vrot.slane %v4712, %v4725
    %v4727 = vcombine.low %v1112, %v1134
    %v4728 = vcombine.high %v1112, %v1134
    %v4730 = vunpack.c.l.s4 1983009808
    %v4731 = vunpack.c.0.s8 %v4730
    %v4732 = vlaneseq
    %v4733 = vshrl.u32 %v4732, 7
    %v4734 = vsub.s32 %v4731, %v4733
    %v4735 = vrot.slane %v4727, %v4734
    %v4737 = vunpack.c.l.s4 1983009808
    %v4738 = vunpack.c.0.s8 %v4737
    %v4739 = vlaneseq
    %v4740 = vshrl.u32 %v4739, 7
    %v4741 = vsub.s32 %v4738, %v4740
    %v4742 = vrot.slane %v4728, %v4741
    %v4743 = vcombine.low %v1145, %v1167
    %v4744 = vcombine.high %v1145, %v1167
    %v4746 = vunpack.c.l.s4 1983009808
    %v4747 = vunpack.c.0.s8 %v4746
    %v4748 = vlaneseq
    %v4749 = vshrl.u32 %v4748, 7
    %v4750 = vsub.s32 %v4747, %v4749
    %v4751 = vrot.slane %v4743, %v4750
    %v4753 = vunpack.c.l.s4 1983009808
    %v4754 = vunpack.c.0.s8 %v4753
    %v4755 = vlaneseq
    %v4756 = vshrl.u32 %v4755, 7
    %v4757 = vsub.s32 %v4754, %v4756
    %v4758 = vrot.slane %v4744, %v4757
    %v4759 = vcombine.low %v1156, %v1178
    %v4760 = vcombine.high %v1156, %v1178
    %v4762 = vunpack.c.l.s4 1983009808
    %v4763 = vunpack.c.0.s8 %v4762
    %v4764 = vlaneseq
    %v4765 = vshrl.u32 %v4764, 7
    %v4766 = vsub.s32 %v4763, %v4765
    %v4767 = vrot.slane %v4759, %v4766
    %v4769 = vunpack.c.l.s4 1983009808
    %v4770 = vunpack.c.0.s8 %v4769
    %v4771 = vlaneseq
    %v4772 = vshrl.u32 %v4771, 7
    %v4773 = vsub.s32 %v4770, %v4772
    %v4774 = vrot.slane %v4760, %v4773
    %v4775 = vcombine.low %v4719, %v4735
    %v4776 = vcombine.high %v4719, %v4735
    %v4778 = vunpack.c.l.s4 1934713408
    %v4779 = vunpack.c.0.s8 %v4778
    %v4780 = vlaneseq
    %v4781 = vshrl.u32 %v4780, 7
    %v4782 = vsub.s32 %v4779, %v4781
    %v4783 = vrot.slane %v4775, %v4782
    %v4785 = vunpack.c.l.s4 1934713408
    %v4786 = vunpack.c.0.s8 %v4785
    %v4787 = vlaneseq
    %v4788 = vshrl.u32 %v4787, 7
    %v4789 = vsub.s32 %v4786, %v4788
    %v4790 = vrot.slane %v4776, %v4789
    %v4791 = vcombine.low %v4726, %v4742
    %v4792 = vcombine.high %v4726, %v4742
    %v4794 = vunpack.c.l.s4 1934713408
    %v4795 = vunpack.c.0.s8 %v4794
    %v4796 = vlaneseq
    %v4797 = vshrl.u32 %v4796, 7
    %v4798 = vsub.s32 %v4795, %v4797
    %v4799 = vrot.slane %v4791, %v4798
    %v4801 = vunpack.c.l.s4 1934713408
    %v4802 = vunpack.c.0.s8 %v4801
    %v4803 = vlaneseq
    %v4804 = vshrl.u32 %v4803, 7
    %v4805 = vsub.s32 %v4802, %v4804
    %v4806 = vrot.slane %v4792, %v4805
    %v4807 = vcombine.low %v4751, %v4767
    %v4808 = vcombine.high %v4751, %v4767
    %v4810 = vunpack.c.l.s4 1934713408
    %v4811 = vunpack.c.0.s8 %v4810
    %v4812 = vlaneseq
    %v4813 = vshrl.u32 %v4812, 7
    %v4814 = vsub.s32 %v4811, %v4813
    %v4815 = vrot.slane %v4807, %v4814
    %v4817 = vunpack.c.l.s4 1934713408
    %v4818 = vunpack.c.0.s8 %v4817
    %v4819 = vlaneseq
    %v4820 = vshrl.u32 %v4819, 7
    %v4821 = vsub.s32 %v4818, %v4820
    %v4822 = vrot.slane %v4808, %v4821
    %v4823 = vcombine.low %v4758, %v4774
    %v4824 = vcombine.high %v4758, %v4774
    %v4826 = vunpack.c.l.s4 1934713408
    %v4827 = vunpack.c.0.s8 %v4826
    %v4828 = vlaneseq
    %v4829 = vshrl.u32 %v4828, 7
    %v4830 = vsub.s32 %v4827, %v4829
    %v4831 = vrot.slane %v4823, %v4830
    %v4833 = vunpack.c.l.s4 1934713408
    %v4834 = vunpack.c.0.s8 %v4833
    %v4835 = vlaneseq
    %v4836 = vshrl.u32 %v4835, 7
    %v4837 = vsub.s32 %v4834, %v4836
    %v4838 = vrot.slane %v4824, %v4837
    %v4839 = vcombine.low %v4783, %v4815
    %v4840 = vcombine.high %v4783, %v4815
    %v4841 = vcombine.low %v4790, %v4822
    %v4842 = vcombine.high %v4790, %v4822
    %v4843 = vcombine.low %v4799, %v4831
    %v4844 = vcombine.high %v4799, %v4831
    %v4845 = vcombine.low %v4806, %v4838
    %v4846 = vcombine.high %v4806, %v4838
    %v4847 = vcombine.low %v1189, %v1211
    %v4848 = vcombine.high %v1189, %v1211
    %v4850 = vunpack.c.l.s4 1983009808
    %v4851 = vunpack.c.0.s8 %v4850
    %v4852 = vlaneseq
    %v4853 = vshrl.u32 %v4852, 7
    %v4854 = vsub.s32 %v4851, %v4853
    %v4855 = vrot.slane %v4847, %v4854
    %v4857 = vunpack.c.l.s4 1983009808
    %v4858 = vunpack.c.0.s8 %v4857
    %v4859 = vlaneseq
    %v4860 = vshrl.u32 %v4859, 7
    %v4861 = vsub.s32 %v4858, %v4860
    %v4862 = vrot.slane %v4848, %v4861
    %v4863 = vcombine.low %v1200, %v1222
    %v4864 = vcombine.high %v1200, %v1222
    %v4866 = vunpack.c.l.s4 1983009808
    %v4867 = vunpack.c.0.s8 %v4866
    %v4868 = vlaneseq
    %v4869 = vshrl.u32 %v4868, 7
    %v4870 = vsub.s32 %v4867, %v4869
    %v4871 = vrot.slane %v4863, %v4870
    %v4873 = vunpack.c.l.s4 1983009808
    %v4874 = vunpack.c.0.s8 %v4873
    %v4875 = vlaneseq
    %v4876 = vshrl.u32 %v4875, 7
    %v4877 = vsub.s32 %v4874, %v4876
    %v4878 = vrot.slane %v4864, %v4877
    %v4879 = vcombine.low %v1233, %v1255
    %v4880 = vcombine.high %v1233, %v1255
    %v4882 = vunpack.c.l.s4 1983009808
    %v4883 = vunpack.c.0.s8 %v4882
    %v4884 = vlaneseq
    %v4885 = vshrl.u32 %v4884, 7
    %v4886 = vsub.s32 %v4883, %v4885
    %v4887 = vrot.slane %v4879, %v4886
    %v4889 = vunpack.c.l.s4 1983009808
    %v4890 = vunpack.c.0.s8 %v4889
    %v4891 = vlaneseq
    %v4892 = vshrl.u32 %v4891, 7
    %v4893 = vsub.s32 %v4890, %v4892
    %v4894 = vrot.slane %v4880, %v4893
    %v4895 = vcombine.low %v1244, %v1266
    %v4896 = vcombine.high %v1244, %v1266
    %v4898 = vunpack.c.l.s4 1983009808
    %v4899 = vunpack.c.0.s8 %v4898
    %v4900 = vlaneseq
    %v4901 = vshrl.u32 %v4900, 7
    %v4902 = vsub.s32 %v4899, %v4901
    %v4903 = vrot.slane %v4895, %v4902
    %v4905 = vunpack.c.l.s4 1983009808
    %v4906 = vunpack.c.0.s8 %v4905
    %v4907 = vlaneseq
    %v4908 = vshrl.u32 %v4907, 7
    %v4909 = vsub.s32 %v4906, %v4908
    %v4910 = vrot.slane %v4896, %v4909
    %v4911 = vcombine.low %v4855, %v4871
    %v4912 = vcombine.high %v4855, %v4871
    %v4914 = vunpack.c.l.s4 1934713408
    %v4915 = vunpack.c.0.s8 %v4914
    %v4916 = vlaneseq
    %v4917 = vshrl.u32 %v4916, 7
    %v4918 = vsub.s32 %v4915, %v4917
    %v4919 = vrot.slane %v4911, %v4918
    %v4921 = vunpack.c.l.s4 1934713408
    %v4922 = vunpack.c.0.s8 %v4921
    %v4923 = vlaneseq
    %v4924 = vshrl.u32 %v4923, 7
    %v4925 = vsub.s32 %v4922, %v4924
    %v4926 = vrot.slane %v4912, %v4925
    %v4927 = vcombine.low %v4862, %v4878
    %v4928 = vcombine.high %v4862, %v4878
    %v4930 = vunpack.c.l.s4 1934713408
    %v4931 = vunpack.c.0.s8 %v4930
    %v4932 = vlaneseq
    %v4933 = vshrl.u32 %v4932, 7
    %v4934 = vsub.s32 %v4931, %v4933
    %v4935 = vrot.slane %v4927, %v4934
    %v4937 = vunpack.c.l.s4 1934713408
    %v4938 = vunpack.c.0.s8 %v4937
    %v4939 = vlaneseq
    %v4940 = vshrl.u32 %v4939, 7
    %v4941 = vsub.s32 %v4938, %v4940
    %v4942 = vrot.slane %v4928, %v4941
    %v4943 = vcombine.low %v4887, %v4903
    %v4944 = vcombine.high %v4887, %v4903
    %v4946 = vunpack.c.l.s4 1934713408
    %v4947 = vunpack.c.0.s8 %v4946
    %v4948 = vlaneseq
    %v4949 = vshrl.u32 %v4948, 7
    %v4950 = vsub.s32 %v4947, %v4949
    %v4951 = vrot.slane %v4943, %v4950
    %v4953 = vunpack.c.l.s4 1934713408
    %v4954 = vunpack.c.0.s8 %v4953
    %v4955 = vlaneseq
    %v4956 = vshrl.u32 %v4955, 7
    %v4957 = vsub.s32 %v4954, %v4956
    %v4958 = vrot.slane %v4944, %v4957
    %v4959 = vcombine.low %v4894, %v4910
    %v4960 = vcombine.high %v4894, %v4910
    %v4962 = vunpack.c.l.s4 1934713408
    %v4963 = vunpack.c.0.s8 %v4962
    %v4964 = vlaneseq
    %v4965 = vshrl.u32 %v4964, 7
    %v4966 = vsub.s32 %v4963, %v4965
    %v4967 = vrot.slane %v4959, %v4966
    %v4969 = vunpack.c.l.s4 1934713408
    %v4970 = vunpack.c.0.s8 %v4969
    %v4971 = vlaneseq
    %v4972 = vshrl.u32 %v4971, 7
    %v4973 = vsub.s32 %v4970, %v4972
    %v4974 = vrot.slane %v4960, %v4973
    %v4975 = vcombine.low %v4919, %v4951
    %v4976 = vcombine.high %v4919, %v4951
    %v4977 = vcombine.low %v4926, %v4958
    %v4978 = vcombine.high %v4926, %v4958
    %v4979 = vcombine.low %v4935, %v4967
    %v4980 = vcombine.high %v4935, %v4967
    %v4981 = vcombine.low %v4942, %v4974
    %v4982 = vcombine.high %v4942, %v4974
    %v4983 = vcombine.low %v1105, %v1127
    %v4984 = vcombine.high %v1105, %v1127
    %v4986 = vunpack.c.l.s4 1983009808
    %v4987 = vunpack.c.0.s8 %v4986
    %v4988 = vlaneseq
    %v4989 = vshrl.u32 %v4988, 7
    %v4990 = vsub.s32 %v4987, %v4989
    %v4991 = vrot.slane %v4983, %v4990
    %v4993 = vunpack.c.l.s4 1983009808
    %v4994 = vunpack.c.0.s8 %v4993
    %v4995 = vlaneseq
    %v4996 = vshrl.u32 %v4995, 7
    %v4997 = vsub.s32 %v4994, %v4996
    %v4998 = vrot.slane %v4984, %v4997
    %v4999 = vcombine.low %v1116, %v1138
    %v5000 = vcombine.high %v1116, %v1138
    %v5002 = vunpack.c.l.s4 1983009808
    %v5003 = vunpack.c.0.s8 %v5002
    %v5004 = vlaneseq
    %v5005 = vshrl.u32 %v5004, 7
    %v5006 = vsub.s32 %v5003, %v5005
    %v5007 = vrot.slane %v4999, %v5006
    %v5009 = vunpack.c.l.s4 1983009808
    %v5010 = vunpack.c.0.s8 %v5009
    %v5011 = vlaneseq
    %v5012 = vshrl.u32 %v5011, 7
    %v5013 = vsub.s32 %v5010, %v5012
    %v5014 = vrot.slane %v5000, %v5013
    %v5015 = vcombine.low %v1149, %v1171
    %v5016 = vcombine.high %v1149, %v1171
    %v5018 = vunpack.c.l.s4 1983009808
    %v5019 = vunpack.c.0.s8 %v5018
    %v5020 = vlaneseq
    %v5021 = vshrl.u32 %v5020, 7
    %v5022 = vsub.s32 %v5019, %v5021
    %v5023 = vrot.slane %v5015, %v5022
    %v5025 = vunpack.c.l.s4 1983009808
    %v5026 = vunpack.c.0.s8 %v5025
    %v5027 = vlaneseq
    %v5028 = vshrl.u32 %v5027, 7
    %v5029 = vsub.s32 %v5026, %v5028
    %v5030 = vrot.slane %v5016, %v5029
    %v5031 = vcombine.low %v1160, %v1182
    %v5032 = vcombine.high %v1160, %v1182
    %v5034 = vunpack.c.l.s4 1983009808
    %v5035 = vunpack.c.0.s8 %v5034
    %v5036 = vlaneseq
    %v5037 = vshrl.u32 %v5036, 7
    %v5038 = vsub.s32 %v5035, %v5037
    %v5039 = vrot.slane %v5031, %v5038
    %v5041 = vunpack.c.l.s4 1983009808
    %v5042 = vunpack.c.0.s8 %v5041
    %v5043 = vlaneseq
    %v5044 = vshrl.u32 %v5043, 7
    %v5045 = vsub.s32 %v5042, %v5044
    %v5046 = vrot.slane %v5032, %v5045
    %v5047 = vcombine.low %v4991, %v5007
    %v5048 = vcombine.high %v4991, %v5007
    %v5050 = vunpack.c.l.s4 1934713408
    %v5051 = vunpack.c.0.s8 %v5050
    %v5052 = vlaneseq
    %v5053 = vshrl.u32 %v5052, 7
    %v5054 = vsub.s32 %v5051, %v5053
    %v5055 = vrot.slane %v5047, %v5054
    %v5057 = vunpack.c.l.s4 1934713408
    %v5058 = vunpack.c.0.s8 %v5057
    %v5059 = vlaneseq
    %v5060 = vshrl.u32 %v5059, 7
    %v5061 = vsub.s32 %v5058, %v5060
    %v5062 = vrot.slane %v5048, %v5061
    %v5063 = vcombine.low %v4998, %v5014
    %v5064 = vcombine.high %v4998, %v5014
    %v5066 = vunpack.c.l.s4 1934713408
    %v5067 = vunpack.c.0.s8 %v5066
    %v5068 = vlaneseq
    %v5069 = vshrl.u32 %v5068, 7
    %v5070 = vsub.s32 %v5067, %v5069
    %v5071 = vrot.slane %v5063, %v5070
    %v5073 = vunpack.c.l.s4 1934713408
    %v5074 = vunpack.c.0.s8 %v5073
    %v5075 = vlaneseq
    %v5076 = vshrl.u32 %v5075, 7
    %v5077 = vsub.s32 %v5074, %v5076
    %v5078 = vrot.slane %v5064, %v5077
    %v5079 = vcombine.low %v5023, %v5039
    %v5080 = vcombine.high %v5023, %v5039
    %v5082 = vunpack.c.l.s4 1934713408
    %v5083 = vunpack.c.0.s8 %v5082
    %v5084 = vlaneseq
    %v5085 = vshrl.u32 %v5084, 7
    %v5086 = vsub.s32 %v5083, %v5085
    %v5087 = vrot.slane %v5079, %v5086
    %v5089 = vunpack.c.l.s4 1934713408
    %v5090 = vunpack.c.0.s8 %v5089
    %v5091 = vlaneseq
    %v5092 = vshrl.u32 %v5091, 7
    %v5093 = vsub.s32 %v5090, %v5092
    %v5094 = vrot.slane %v5080, %v5093
    %v5095 = vcombine.low %v5030, %v5046
    %v5096 = vcombine.high %v5030, %v5046
    %v5098 = vunpack.c.l.s4 1934713408
    %v5099 = vunpack.c.0.s8 %v5098
    %v5100 = vlaneseq
    %v5101 = vshrl.u32 %v5100, 7
    %v5102 = vsub.s32 %v5099, %v5101
    %v5103 = vrot.slane %v5095, %v5102
    %v5105 = vunpack.c.l.s4 1934713408
    %v5106 = vunpack.c.0.s8 %v5105
    %v5107 = vlaneseq
    %v5108 = vshrl.u32 %v5107, 7
    %v5109 = vsub.s32 %v5106, %v5108
    %v5110 = vrot.slane %v5096, %v5109
    %v5111 = vcombine.low %v5055, %v5087
    %v5112 = vcombine.high %v5055, %v5087
    %v5113 = vcombine.low %v5062, %v5094
    %v5114 = vcombine.high %v5062, %v5094
    %v5115 = vcombine.low %v5071, %v5103
    %v5116 = vcombine.high %v5071, %v5103
    %v5117 = vcombine.low %v5078, %v5110
    %v5118 = vcombine.high %v5078, %v5110
    %v5119 = vcombine.low %v1193, %v1215
    %v5120 = vcombine.high %v1193, %v1215
    %v5122 = vunpack.c.l.s4 1983009808
    %v5123 = vunpack.c.0.s8 %v5122
    %v5124 = vlaneseq
    %v5125 = vshrl.u32 %v5124, 7
    %v5126 = vsub.s32 %v5123, %v5125
    %v5127 = vrot.slane %v5119, %v5126
    %v5129 = vunpack.c.l.s4 1983009808
    %v5130 = vunpack.c.0.s8 %v5129
    %v5131 = vlaneseq
    %v5132 = vshrl.u32 %v5131, 7
    %v5133 = vsub.s32 %v5130, %v5132
    %v5134 = vrot.slane %v5120, %v5133
    %v5135 = vcombine.low %v1204, %v1226
    %v5136 = vcombine.high %v1204, %v1226
    %v5138 = vunpack.c.l.s4 1983009808
    %v5139 = vunpack.c.0.s8 %v5138
    %v5140 = vlaneseq
    %v5141 = vshrl.u32 %v5140, 7
    %v5142 = vsub.s32 %v5139, %v5141
    %v5143 = vrot.slane %v5135, %v5142
    %v5145 = vunpack.c.l.s4 1983009808
    %v5146 = vunpack.c.0.s8 %v5145
    %v5147 = vlaneseq
    %v5148 = vshrl.u32 %v5147, 7
    %v5149 = vsub.s32 %v5146, %v5148
    %v5150 = vrot.slane %v5136, %v5149
    %v5151 = vcombine.low %v1237, %v1259
    %v5152 = vcombine.high %v1237, %v1259
    %v5154 = vunpack.c.l.s4 1983009808
    %v5155 = vunpack.c.0.s8 %v5154
    %v5156 = vlaneseq
    %v5157 = vshrl.u32 %v5156, 7
    %v5158 = vsub.s32 %v5155, %v5157
    %v5159 = vrot.slane %v5151, %v5158
    %v5161 = vunpack.c.l.s4 1983009808
    %v5162 = vunpack.c.0.s8 %v5161
    %v5163 = vlaneseq
    %v5164 = vshrl.u32 %v5163, 7
    %v5165 = vsub.s32 %v5162, %v5164
    %v5166 = vrot.slane %v5152, %v5165
    %v5167 = vcombine.low %v1248, %v1270
    %v5168 = vcombine.high %v1248, %v1270
    %v5170 = vunpack.c.l.s4 1983009808
    %v5171 = vunpack.c.0.s8 %v5170
    %v5172 = vlaneseq
    %v5173 = vshrl.u32 %v5172, 7
    %v5174 = vsub.s32 %v5171, %v5173
    %v5175 = vrot.slane %v5167, %v5174
    %v5177 = vunpack.c.l.s4 1983009808
    %v5178 = vunpack.c.0.s8 %v5177
    %v5179 = vlaneseq
    %v5180 = vshrl.u32 %v5179, 7
    %v5181 = vsub.s32 %v5178, %v5180
    %v5182 = vrot.slane %v5168, %v5181
    %v5183 = vcombine.low %v5127, %v5143
    %v5184 = vcombine.high %v5127, %v5143
    %v5186 = vunpack.c.l.s4 1934713408
    %v5187 = vunpack.c.0.s8 %v5186
    %v5188 = vlaneseq
    %v5189 = vshrl.u32 %v5188, 7
    %v5190 = vsub.s32 %v5187, %v5189
    %v5191 = vrot.slane %v5183, %v5190
    %v5193 = vunpack.c.l.s4 1934713408
    %v5194 = vunpack.c.0.s8 %v5193
    %v5195 = vlaneseq
    %v5196 = vshrl.u32 %v5195, 7
    %v5197 = vsub.s32 %v5194, %v5196
    %v5198 = vrot.slane %v5184, %v5197
    %v5199 = vcombine.low %v5134, %v5150
    %v5200 = vcombine.high %v5134, %v5150
    %v5202 = vunpack.c.l.s4 1934713408
    %v5203 = vunpack.c.0.s8 %v5202
    %v5204 = vlaneseq
    %v5205 = vshrl.u32 %v5204, 7
    %v5206 = vsub.s32 %v5203, %v5205
    %v5207 = vrot.slane %v5199, %v5206
    %v5209 = vunpack.c.l.s4 1934713408
    %v5210 = vunpack.c.0.s8 %v5209
    %v5211 = vlaneseq
    %v5212 = vshrl.u32 %v5211, 7
    %v5213 = vsub.s32 %v5210, %v5212
    %v5214 = vrot.slane %v5200, %v5213
    %v5215 = vcombine.low %v5159, %v5175
    %v5216 = vcombine.high %v5159, %v5175
    %v5218 = vunpack.c.l.s4 1934713408
    %v5219 = vunpack.c.0.s8 %v5218
    %v5220 = vlaneseq
    %v5221 = vshrl.u32 %v5220, 7
    %v5222 = vsub.s32 %v5219, %v5221
    %v5223 = vrot.slane %v5215, %v5222
    %v5225 = vunpack.c.l.s4 1934713408
    %v5226 = vunpack.c.0.s8 %v5225
    %v5227 = vlaneseq
    %v5228 = vshrl.u32 %v5227, 7
    %v5229 = vsub.s32 %v5226, %v5228
    %v5230 = vrot.slane %v5216, %v5229
    %v5231 = vcombine.low %v5166, %v5182
    %v5232 = vcombine.high %v5166, %v5182
    %v5234 = vunpack.c.l.s4 1934713408
    %v5235 = vunpack.c.0.s8 %v5234
    %v5236 = vlaneseq
    %v5237 = vshrl.u32 %v5236, 7
    %v5238 = vsub.s32 %v5235, %v5237
    %v5239 = vrot.slane %v5231, %v5238
    %v5241 = vunpack.c.l.s4 1934713408
    %v5242 = vunpack.c.0.s8 %v5241
    %v5243 = vlaneseq
    %v5244 = vshrl.u32 %v5243, 7
    %v5245 = vsub.s32 %v5242, %v5244
    %v5246 = vrot.slane %v5232, %v5245
    %v5247 = vcombine.low %v5191, %v5223
    %v5248 = vcombine.high %v5191, %v5223
    %v5249 = vcombine.low %v5198, %v5230
    %v5250 = vcombine.high %v5198, %v5230
    %v5251 = vcombine.low %v5207, %v5239
    %v5252 = vcombine.high %v5207, %v5239
    %v5253 = vcombine.low %v5214, %v5246
    %v5254 = vcombine.high %v5214, %v5246
    %v5255 = vcombine.low %v1277, %v1299
    %v5256 = vcombine.high %v1277, %v1299
    %v5258 = vunpack.c.l.s4 1983009808
    %v5259 = vunpack.c.0.s8 %v5258
    %v5260 = vlaneseq
    %v5261 = vshrl.u32 %v5260, 7
    %v5262 = vsub.s32 %v5259, %v5261
    %v5263 = vrot.slane %v5255, %v5262
    %v5265 = vunpack.c.l.s4 1983009808
    %v5266 = vunpack.c.0.s8 %v5265
    %v5267 = vlaneseq
    %v5268 = vshrl.u32 %v5267, 7
    %v5269 = vsub.s32 %v5266, %v5268
    %v5270 = vrot.slane %v5256, %v5269
    %v5271 = vcombine.low %v1288, %v1310
    %v5272 = vcombine.high %v1288, %v1310
    %v5274 = vunpack.c.l.s4 1983009808
    %v5275 = vunpack.c.0.s8 %v5274
    %v5276 = vlaneseq
    %v5277 = vshrl.u32 %v5276, 7
    %v5278 = vsub.s32 %v5275, %v5277
    %v5279 = vrot.slane %v5271, %v5278
    %v5281 = vunpack.c.l.s4 1983009808
    %v5282 = vunpack.c.0.s8 %v5281
    %v5283 = vlaneseq
    %v5284 = vshrl.u32 %v5283, 7
    %v5285 = vsub.s32 %v5282, %v5284
    %v5286 = vrot.slane %v5272, %v5285
    %v5287 = vcombine.low %v1321, %v1343
    %v5288 = vcombine.high %v1321, %v1343
    %v5290 = vunpack.c.l.s4 1983009808
    %v5291 = vunpack.c.0.s8 %v5290
    %v5292 = vlaneseq
    %v5293 = vshrl.u32 %v5292, 7
    %v5294 = vsub.s32 %v5291, %v5293
    %v5295 = vrot.slane %v5287, %v5294
    %v5297 = vunpack.c.l.s4 1983009808
    %v5298 = vunpack.c.0.s8 %v5297
    %v5299 = vlaneseq
    %v5300 = vshrl.u32 %v5299, 7
    %v5301 = vsub.s32 %v5298, %v5300
    %v5302 = vrot.slane %v5288, %v5301
    %v5303 = vcombine.low %v1332, %v1354
    %v5304 = vcombine.high %v1332, %v1354
    %v5306 = vunpack.c.l.s4 1983009808
    %v5307 = vunpack.c.0.s8 %v5306
    %v5308 = vlaneseq
    %v5309 = vshrl.u32 %v5308, 7
    %v5310 = vsub.s32 %v5307, %v5309
    %v5311 = vrot.slane %v5303, %v5310
    %v5313 = vunpack.c.l.s4 1983009808
    %v5314 = vunpack.c.0.s8 %v5313
    %v5315 = vlaneseq
    %v5316 = vshrl.u32 %v5315, 7
    %v5317 = vsub.s32 %v5314, %v5316
    %v5318 = vrot.slane %v5304, %v5317
    %v5319 = vcombine.low %v5263, %v5279
    %v5320 = vcombine.high %v5263, %v5279
    %v5322 = vunpack.c.l.s4 1934713408
    %v5323 = vunpack.c.0.s8 %v5322
    %v5324 = vlaneseq
    %v5325 = vshrl.u32 %v5324, 7
    %v5326 = vsub.s32 %v5323, %v5325
    %v5327 = vrot.slane %v5319, %v5326
    %v5329 = vunpack.c.l.s4 1934713408
    %v5330 = vunpack.c.0.s8 %v5329
    %v5331 = vlaneseq
    %v5332 = vshrl.u32 %v5331, 7
    %v5333 = vsub.s32 %v5330, %v5332
    %v5334 = vrot.slane %v5320, %v5333
    %v5335 = vcombine.low %v5270, %v5286
    %v5336 = vcombine.high %v5270, %v5286
    %v5338 = vunpack.c.l.s4 1934713408
    %v5339 = vunpack.c.0.s8 %v5338
    %v5340 = vlaneseq
    %v5341 = vshrl.u32 %v5340, 7
    %v5342 = vsub.s32 %v5339, %v5341
    %v5343 = vrot.slane %v5335, %v5342
    %v5345 = vunpack.c.l.s4 1934713408
    %v5346 = vunpack.c.0.s8 %v5345
    %v5347 = vlaneseq
    %v5348 = vshrl.u32 %v5347, 7
    %v5349 = vsub.s32 %v5346, %v5348
    %v5350 = vrot.slane %v5336, %v5349
    %v5351 = vcombine.low %v5295, %v5311
    %v5352 = vcombine.high %v5295, %v5311
    %v5354 = vunpack.c.l.s4 1934713408
    %v5355 = vunpack.c.0.s8 %v5354
    %v5356 = vlaneseq
    %v5357 = vshrl.u32 %v5356, 7
    %v5358 = vsub.s32 %v5355, %v5357
    %v5359 = vrot.slane %v5351, %v5358
    %v5361 = vunpack.c.l.s4 1934713408
    %v5362 = vunpack.c.0.s8 %v5361
    %v5363 = vlaneseq
    %v5364 = vshrl.u32 %v5363, 7
    %v5365 = vsub.s32 %v5362, %v5364
    %v5366 = vrot.slane %v5352, %v5365
    %v5367 = vcombine.low %v5302, %v5318
    %v5368 = vcombine.high %v5302, %v5318
    %v5370 = vunpack.c.l.s4 1934713408
    %v5371 = vunpack.c.0.s8 %v5370
    %v5372 = vlaneseq
    %v5373 = vshrl.u32 %v5372, 7
    %v5374 = vsub.s32 %v5371, %v5373
    %v5375 = vrot.slane %v5367, %v5374
    %v5377 = vunpack.c.l.s4 1934713408
    %v5378 = vunpack.c.0.s8 %v5377
    %v5379 = vlaneseq
    %v5380 = vshrl.u32 %v5379, 7
    %v5381 = vsub.s32 %v5378, %v5380
    %v5382 = vrot.slane %v5368, %v5381
    %v5383 = vcombine.low %v5327, %v5359
    %v5384 = vcombine.high %v5327, %v5359
    %v5385 = vcombine.low %v5334, %v5366
    %v5386 = vcombine.high %v5334, %v5366
    %v5387 = vcombine.low %v5343, %v5375
    %v5388 = vcombine.high %v5343, %v5375
    %v5389 = vcombine.low %v5350, %v5382
    %v5390 = vcombine.high %v5350, %v5382
    %v5391 = vcombine.low %v1365, %v1387
    %v5392 = vcombine.high %v1365, %v1387
    %v5394 = vunpack.c.l.s4 1983009808
    %v5395 = vunpack.c.0.s8 %v5394
    %v5396 = vlaneseq
    %v5397 = vshrl.u32 %v5396, 7
    %v5398 = vsub.s32 %v5395, %v5397
    %v5399 = vrot.slane %v5391, %v5398
    %v5401 = vunpack.c.l.s4 1983009808
    %v5402 = vunpack.c.0.s8 %v5401
    %v5403 = vlaneseq
    %v5404 = vshrl.u32 %v5403, 7
    %v5405 = vsub.s32 %v5402, %v5404
    %v5406 = vrot.slane %v5392, %v5405
    %v5407 = vcombine.low %v1376, %v1398
    %v5408 = vcombine.high %v1376, %v1398
    %v5410 = vunpack.c.l.s4 1983009808
    %v5411 = vunpack.c.0.s8 %v5410
    %v5412 = vlaneseq
    %v5413 = vshrl.u32 %v5412, 7
    %v5414 = vsub.s32 %v5411, %v5413
    %v5415 = vrot.slane %v5407, %v5414
    %v5417 = vunpack.c.l.s4 1983009808
    %v5418 = vunpack.c.0.s8 %v5417
    %v5419 = vlaneseq
    %v5420 = vshrl.u32 %v5419, 7
    %v5421 = vsub.s32 %v5418, %v5420
    %v5422 = vrot.slane %v5408, %v5421
    %v5423 = vcombine.low %v1409, %v1431
    %v5424 = vcombine.high %v1409, %v1431
    %v5426 = vunpack.c.l.s4 1983009808
    %v5427 = vunpack.c.0.s8 %v5426
    %v5428 = vlaneseq
    %v5429 = vshrl.u32 %v5428, 7
    %v5430 = vsub.s32 %v5427, %v5429
    %v5431 = vrot.slane %v5423, %v5430
    %v5433 = vunpack.c.l.s4 1983009808
    %v5434 = vunpack.c.0.s8 %v5433
    %v5435 = vlaneseq
    %v5436 = vshrl.u32 %v5435, 7
    %v5437 = vsub.s32 %v5434, %v5436
    %v5438 = vrot.slane %v5424, %v5437
    %v5439 = vcombine.low %v1420, %v1442
    %v5440 = vcombine.high %v1420, %v1442
    %v5442 = vunpack.c.l.s4 1983009808
    %v5443 = vunpack.c.0.s8 %v5442
    %v5444 = vlaneseq
    %v5445 = vshrl.u32 %v5444, 7
    %v5446 = vsub.s32 %v5443, %v5445
    %v5447 = vrot.slane %v5439, %v5446
    %v5449 = vunpack.c.l.s4 1983009808
    %v5450 = vunpack.c.0.s8 %v5449
    %v5451 = vlaneseq
    %v5452 = vshrl.u32 %v5451, 7
    %v5453 = vsub.s32 %v5450, %v5452
    %v5454 = vrot.slane %v5440, %v5453
    %v5455 = vcombine.low %v5399, %v5415
    %v5456 = vcombine.high %v5399, %v5415
    %v5458 = vunpack.c.l.s4 1934713408
    %v5459 = vunpack.c.0.s8 %v5458
    %v5460 = vlaneseq
    %v5461 = vshrl.u32 %v5460, 7
    %v5462 = vsub.s32 %v5459, %v5461
    %v5463 = vrot.slane %v5455, %v5462
    %v5465 = vunpack.c.l.s4 1934713408
    %v5466 = vunpack.c.0.s8 %v5465
    %v5467 = vlaneseq
    %v5468 = vshrl.u32 %v5467, 7
    %v5469 = vsub.s32 %v5466, %v5468
    %v5470 = vrot.slane %v5456, %v5469
    %v5471 = vcombine.low %v5406, %v5422
    %v5472 = vcombine.high %v5406, %v5422
    %v5474 = vunpack.c.l.s4 1934713408
    %v5475 = vunpack.c.0.s8 %v5474
    %v5476 = vlaneseq
    %v5477 = vshrl.u32 %v5476, 7
    %v5478 = vsub.s32 %v5475, %v5477
    %v5479 = vrot.slane %v5471, %v5478
    %v5481 = vunpack.c.l.s4 1934713408
    %v5482 = vunpack.c.0.s8 %v5481
    %v5483 = vlaneseq
    %v5484 = vshrl.u32 %v5483, 7
    %v5485 = vsub.s32 %v5482, %v5484
    %v5486 = vrot.slane %v5472, %v5485
    %v5487 = vcombine.low %v5431, %v5447
    %v5488 = vcombine.high %v5431, %v5447
    %v5490 = vunpack.c.l.s4 1934713408
    %v5491 = vunpack.c.0.s8 %v5490
    %v5492 = vlaneseq
    %v5493 = vshrl.u32 %v5492, 7
    %v5494 = vsub.s32 %v5491, %v5493
    %v5495 = vrot.slane %v5487, %v5494
    %v5497 = vunpack.c.l.s4 1934713408
    %v5498 = vunpack.c.0.s8 %v5497
    %v5499 = vlaneseq
    %v5500 = vshrl.u32 %v5499, 7
    %v5501 = vsub.s32 %v5498, %v5500
    %v5502 = vrot.slane %v5488, %v5501
    %v5503 = vcombine.low %v5438, %v5454
    %v5504 = vcombine.high %v5438, %v5454
    %v5506 = vunpack.c.l.s4 1934713408
    %v5507 = vunpack.c.0.s8 %v5506
    %v5508 = vlaneseq
    %v5509 = vshrl.u32 %v5508, 7
    %v5510 = vsub.s32 %v5507, %v5509
    %v5511 = vrot.slane %v5503, %v5510
    %v5513 = vunpack.c.l.s4 1934713408
    %v5514 = vunpack.c.0.s8 %v5513
    %v5515 = vlaneseq
    %v5516 = vshrl.u32 %v5515, 7
    %v5517 = vsub.s32 %v5514, %v5516
    %v5518 = vrot.slane %v5504, %v5517
    %v5519 = vcombine.low %v5463, %v5495
    %v5520 = vcombine.high %v5463, %v5495
    %v5521 = vcombine.low %v5470, %v5502
    %v5522 = vcombine.high %v5470, %v5502
    %v5523 = vcombine.low %v5479, %v5511
    %v5524 = vcombine.high %v5479, %v5511
    %v5525 = vcombine.low %v5486, %v5518
    %v5526 = vcombine.high %v5486, %v5518
    %v5527 = vcombine.low %v1281, %v1303
    %v5528 = vcombine.high %v1281, %v1303
    %v5530 = vunpack.c.l.s4 1983009808
    %v5531 = vunpack.c.0.s8 %v5530
    %v5532 = vlaneseq
    %v5533 = vshrl.u32 %v5532, 7
    %v5534 = vsub.s32 %v5531, %v5533
    %v5535 = vrot.slane %v5527, %v5534
    %v5537 = vunpack.c.l.s4 1983009808
    %v5538 = vunpack.c.0.s8 %v5537
    %v5539 = vlaneseq
    %v5540 = vshrl.u32 %v5539, 7
    %v5541 = vsub.s32 %v5538, %v5540
    %v5542 = vrot.slane %v5528, %v5541
    %v5543 = vcombine.low %v1292, %v1314
    %v5544 = vcombine.high %v1292, %v1314
    %v5546 = vunpack.c.l.s4 1983009808
    %v5547 = vunpack.c.0.s8 %v5546
    %v5548 = vlaneseq
    %v5549 = vshrl.u32 %v5548, 7
    %v5550 = vsub.s32 %v5547, %v5549
    %v5551 = vrot.slane %v5543, %v5550
    %v5553 = vunpack.c.l.s4 1983009808
    %v5554 = vunpack.c.0.s8 %v5553
    %v5555 = vlaneseq
    %v5556 = vshrl.u32 %v5555, 7
    %v5557 = vsub.s32 %v5554, %v5556
    %v5558 = vrot.slane %v5544, %v5557
    %v5559 = vcombine.low %v1325, %v1347
    %v5560 = vcombine.high %v1325, %v1347
    %v5562 = vunpack.c.l.s4 1983009808
    %v5563 = vunpack.c.0.s8 %v5562
    %v5564 = vlaneseq
    %v5565 = vshrl.u32 %v5564, 7
    %v5566 = vsub.s32 %v5563, %v5565
    %v5567 = vrot.slane %v5559, %v5566
    %v5569 = vunpack.c.l.s4 1983009808
    %v5570 = vunpack.c.0.s8 %v5569
    %v5571 = vlaneseq
    %v5572 = vshrl.u32 %v5571, 7
    %v5573 = vsub.s32 %v5570, %v5572
    %v5574 = vrot.slane %v5560, %v5573
    %v5575 = vcombine.low %v1336, %v1358
    %v5576 = vcombine.high %v1336, %v1358
    %v5578 = vunpack.c.l.s4 1983009808
    %v5579 = vunpack.c.0.s8 %v5578
    %v5580 = vlaneseq
    %v5581 = vshrl.u32 %v5580, 7
    %v5582 = vsub.s32 %v5579, %v5581
    %v5583 = vrot.slane %v5575, %v5582
    %v5585 = vunpack.c.l.s4 1983009808
    %v5586 = vunpack.c.0.s8 %v5585
    %v5587 = vlaneseq
    %v5588 = vshrl.u32 %v5587, 7
    %v5589 = vsub.s32 %v5586, %v5588
    %v5590 = vrot.slane %v5576, %v5589
    %v5591 = vcombine.low %v5535, %v5551
    %v5592 = vcombine.high %v5535, %v5551
    %v5594 = vunpack.c.l.s4 1934713408
    %v5595 = vunpack.c.0.s8 %v5594
    %v5596 = vlaneseq
    %v5597 = vshrl.u32 %v5596, 7
    %v5598 = vsub.s32 %v5595, %v5597
    %v5599 = vrot.slane %v5591, %v5598
    %v5601 = vunpack.c.l.s4 1934713408
    %v5602 = vunpack.c.0.s8 %v5601
    %v5603 = vlaneseq
    %v5604 = vshrl.u32 %v5603, 7
    %v5605 = vsub.s32 %v5602, %v5604
    %v5606 = vrot.slane %v5592, %v5605
    %v5607 = vcombine.low %v5542, %v5558
    %v5608 = vcombine.high %v5542, %v5558
    %v5610 = vunpack.c.l.s4 1934713408
    %v5611 = vunpack.c.0.s8 %v5610
    %v5612 = vlaneseq
    %v5613 = vshrl.u32 %v5612, 7
    %v5614 = vsub.s32 %v5611, %v5613
    %v5615 = vrot.slane %v5607, %v5614
    %v5617 = vunpack.c.l.s4 1934713408
    %v5618 = vunpack.c.0.s8 %v5617
    %v5619 = vlaneseq
    %v5620 = vshrl.u32 %v5619, 7
    %v5621 = vsub.s32 %v5618, %v5620
    %v5622 = vrot.slane %v5608, %v5621
    %v5623 = vcombine.low %v5567, %v5583
    %v5624 = vcombine.high %v5567, %v5583
    %v5626 = vunpack.c.l.s4 1934713408
    %v5627 = vunpack.c.0.s8 %v5626
    %v5628 = vlaneseq
    %v5629 = vshrl.u32 %v5628, 7
    %v5630 = vsub.s32 %v5627, %v5629
    %v5631 = vrot.slane %v5623, %v5630
    %v5633 = vunpack.c.l.s4 1934713408
    %v5634 = vunpack.c.0.s8 %v5633
    %v5635 = vlaneseq
    %v5636 = vshrl.u32 %v5635, 7
    %v5637 = vsub.s32 %v5634, %v5636
    %v5638 = vrot.slane %v5624, %v5637
    %v5639 = vcombine.low %v5574, %v5590
    %v5640 = vcombine.high %v5574, %v5590
    %v5642 = vunpack.c.l.s4 1934713408
    %v5643 = vunpack.c.0.s8 %v5642
    %v5644 = vlaneseq
    %v5645 = vshrl.u32 %v5644, 7
    %v5646 = vsub.s32 %v5643, %v5645
    %v5647 = vrot.slane %v5639, %v5646
    %v5649 = vunpack.c.l.s4 1934713408
    %v5650 = vunpack.c.0.s8 %v5649
    %v5651 = vlaneseq
    %v5652 = vshrl.u32 %v5651, 7
    %v5653 = vsub.s32 %v5650, %v5652
    %v5654 = vrot.slane %v5640, %v5653
    %v5655 = vcombine.low %v5599, %v5631
    %v5656 = vcombine.high %v5599, %v5631
    %v5657 = vcombine.low %v5606, %v5638
    %v5658 = vcombine.high %v5606, %v5638
    %v5659 = vcombine.low %v5615, %v5647
    %v5660 = vcombine.high %v5615, %v5647
    %v5661 = vcombine.low %v5622, %v5654
    %v5662 = vcombine.high %v5622, %v5654
    %v5663 = vcombine.low %v1369, %v1391
    %v5664 = vcombine.high %v1369, %v1391
    %v5666 = vunpack.c.l.s4 1983009808
    %v5667 = vunpack.c.0.s8 %v5666
    %v5668 = vlaneseq
    %v5669 = vshrl.u32 %v5668, 7
    %v5670 = vsub.s32 %v5667, %v5669
    %v5671 = vrot.slane %v5663, %v5670
    %v5673 = vunpack.c.l.s4 1983009808
    %v5674 = vunpack.c.0.s8 %v5673
    %v5675 = vlaneseq
    %v5676 = vshrl.u32 %v5675, 7
    %v5677 = vsub.s32 %v5674, %v5676
    %v5678 = vrot.slane %v5664, %v5677
    %v5679 = vcombine.low %v1380, %v1402
    %v5680 = vcombine.high %v1380, %v1402
    %v5682 = vunpack.c.l.s4 1983009808
    %v5683 = vunpack.c.0.s8 %v5682
    %v5684 = vlaneseq
    %v5685 = vshrl.u32 %v5684, 7
    %v5686 = vsub.s32 %v5683, %v5685
    %v5687 = vrot.slane %v5679, %v5686
    %v5689 = vunpack.c.l.s4 1983009808
    %v5690 = vunpack.c.0.s8 %v5689
    %v5691 = vlaneseq
    %v5692 = vshrl.u32 %v5691, 7
    %v5693 = vsub.s32 %v5690, %v5692
    %v5694 = vrot.slane %v5680, %v5693
    %v5695 = vcombine.low %v1413, %v1435
    %v5696 = vcombine.high %v1413, %v1435
    %v5698 = vunpack.c.l.s4 1983009808
    %v5699 = vunpack.c.0.s8 %v5698
    %v5700 = vlaneseq
    %v5701 = vshrl.u32 %v5700, 7
    %v5702 = vsub.s32 %v5699, %v5701
    %v5703 = vrot.slane %v5695, %v5702
    %v5705 = vunpack.c.l.s4 1983009808
    %v5706 = vunpack.c.0.s8 %v5705
    %v5707 = vlaneseq
    %v5708 = vshrl.u32 %v5707, 7
    %v5709 = vsub.s32 %v5706, %v5708
    %v5710 = vrot.slane %v5696, %v5709
    %v5711 = vcombine.low %v1424, %v1446
    %v5712 = vcombine.high %v1424, %v1446
    %v5714 = vunpack.c.l.s4 1983009808
    %v5715 = vunpack.c.0.s8 %v5714
    %v5716 = vlaneseq
    %v5717 = vshrl.u32 %v5716, 7
    %v5718 = vsub.s32 %v5715, %v5717
    %v5719 = vrot.slane %v5711, %v5718
    %v5721 = vunpack.c.l.s4 1983009808
    %v5722 = vunpack.c.0.s8 %v5721
    %v5723 = vlaneseq
    %v5724 = vshrl.u32 %v5723, 7
    %v5725 = vsub.s32 %v5722, %v5724
    %v5726 = vrot.slane %v5712, %v5725
    %v5727 = vcombine.low %v5671, %v5687
    %v5728 = vcombine.high %v5671, %v5687
    %v5730 = vunpack.c.l.s4 1934713408
    %v5731 = vunpack.c.0.s8 %v5730
    %v5732 = vlaneseq
    %v5733 = vshrl.u32 %v5732, 7
    %v5734 = vsub.s32 %v5731, %v5733
    %v5735 = vrot.slane %v5727, %v5734
    %v5737 = vunpack.c.l.s4 1934713408
    %v5738 = vunpack.c.0.s8 %v5737
    %v5739 = vlaneseq
    %v5740 = vshrl.u32 %v5739, 7
    %v5741 = vsub.s32 %v5738, %v5740
    %v5742 = vrot.slane %v5728, %v5741
    %v5743 = vcombine.low %v5678, %v5694
    %v5744 = vcombine.high %v5678, %v5694
    %v5746 = vunpack.c.l.s4 1934713408
    %v5747 = vunpack.c.0.s8 %v5746
    %v5748 = vlaneseq
    %v5749 = vshrl.u32 %v5748, 7
    %v5750 = vsub.s32 %v5747, %v5749
    %v5751 = vrot.slane %v5743, %v5750
    %v5753 = vunpack.c.l.s4 1934713408
    %v5754 = vunpack.c.0.s8 %v5753
    %v5755 = vlaneseq
    %v5756 = vshrl.u32 %v5755, 7
    %v5757 = vsub.s32 %v5754, %v5756
    %v5758 = vrot.slane %v5744, %v5757
    %v5759 = vcombine.low %v5703, %v5719
    %v5760 = vcombine.high %v5703, %v5719
    %v5762 = vunpack.c.l.s4 1934713408
    %v5763 = vunpack.c.0.s8 %v5762
    %v5764 = vlaneseq
    %v5765 = vshrl.u32 %v5764, 7
    %v5766 = vsub.s32 %v5763, %v5765
    %v5767 = vrot.slane %v5759, %v5766
    %v5769 = vunpack.c.l.s4 1934713408
    %v5770 = vunpack.c.0.s8 %v5769
    %v5771 = vlaneseq
    %v5772 = vshrl.u32 %v5771, 7
    %v5773 = vsub.s32 %v5770, %v5772
    %v5774 = vrot.slane %v5760, %v5773
    %v5775 = vcombine.low %v5710, %v5726
    %v5776 = vcombine.high %v5710, %v5726
    %v5778 = vunpack.c.l.s4 1934713408
    %v5779 = vunpack.c.0.s8 %v5778
    %v5780 = vlaneseq
    %v5781 = vshrl.u32 %v5780, 7
    %v5782 = vsub.s32 %v5779, %v5781
    %v5783 = vrot.slane %v5775, %v5782
    %v5785 = vunpack.c.l.s4 1934713408
    %v5786 = vunpack.c.0.s8 %v5785
    %v5787 = vlaneseq
    %v5788 = vshrl.u32 %v5787, 7
    %v5789 = vsub.s32 %v5786, %v5788
    %v5790 = vrot.slane %v5776, %v5789
    %v5791 = vcombine.low %v5735, %v5767
    %v5792 = vcombine.high %v5735, %v5767
    %v5793 = vcombine.low %v5742, %v5774
    %v5794 = vcombine.high %v5742, %v5774
    %v5795 = vcombine.low %v5751, %v5783
    %v5796 = vcombine.high %v5751, %v5783
    %v5797 = vcombine.low %v5758, %v5790
    %v5798 = vcombine.high %v5758, %v5790
    %5815 = vrot.lane.b32.xlu0 %v1576, 2
    %v5816 = vpop.permute.xlu0 %5815
    %5817 = vrot.lane.b32.xlu0 %v1712, 2
    %v5818 = vpop.permute.xlu0 %5817
    %5819 = vrot.lane.b32.xlu0 %v2120, 2
    %v5820 = vpop.permute.xlu0 %5819
    %5821 = vrot.lane.b32.xlu0 %v2256, 2
    %v5822 = vpop.permute.xlu0 %5821
    %5823 = vrot.lane.b32.xlu0 %v2664, 2
    %v5824 = vpop.permute.xlu0 %5823
    %5825 = vrot.lane.b32.xlu0 %v2800, 2
    %v5826 = vpop.permute.xlu0 %5825
    %5827 = vrot.lane.b32.xlu0 %v3208, 2
    %v5828 = vpop.permute.xlu0 %5827
    %5829 = vrot.lane.b32.xlu0 %v3344, 2
    %v5830 = vpop.permute.xlu0 %5829
    %5831 = vrot.lane.b32.xlu0 %v3752, 2
    %v5832 = vpop.permute.xlu0 %5831
    %5833 = vrot.lane.b32.xlu0 %v3888, 2
    %v5834 = vpop.permute.xlu0 %5833
    %5835 = vrot.lane.b32.xlu0 %v4296, 2
    %v5836 = vpop.permute.xlu0 %5835
    %5837 = vrot.lane.b32.xlu0 %v4432, 2
    %v5838 = vpop.permute.xlu0 %5837
    %5839 = vrot.lane.b32.xlu0 %v4840, 2
    %v5840 = vpop.permute.xlu0 %5839
    %5841 = vrot.lane.b32.xlu0 %v4976, 2
    %v5842 = vpop.permute.xlu0 %5841
    %5843 = vrot.lane.b32.xlu0 %v5384, 2
    %v5844 = vpop.permute.xlu0 %5843
    %5845 = vrot.lane.b32.xlu0 %v5520, 2
    %v5846 = vpop.permute.xlu0 %5845
    %5879 = vrot.lane.b32.xlu0 %v1577, 4
    %v5880 = vpop.permute.xlu0 %5879
    %5881 = vrot.lane.b32.xlu0 %v1713, 4
    %v5882 = vpop.permute.xlu0 %5881
    %5883 = vrot.lane.b32.xlu0 %v2121, 4
    %v5884 = vpop.permute.xlu0 %5883
    %5885 = vrot.lane.b32.xlu0 %v2257, 4
    %v5886 = vpop.permute.xlu0 %5885
    %5887 = vrot.lane.b32.xlu0 %v2665, 4
    %v5888 = vpop.permute.xlu0 %5887
    %5889 = vrot.lane.b32.xlu0 %v2801, 4
    %v5890 = vpop.permute.xlu0 %5889
    %5891 = vrot.lane.b32.xlu0 %v3209, 4
    %v5892 = vpop.permute.xlu0 %5891
    %5893 = vrot.lane.b32.xlu0 %v3345, 4
    %v5894 = vpop.permute.xlu0 %5893
    %5895 = vrot.lane.b32.xlu0 %v3753, 4
    %v5896 = vpop.permute.xlu0 %5895
    %5897 = vrot.lane.b32.xlu0 %v3889, 4
    %v5898 = vpop.permute.xlu0 %5897
    %5899 = vrot.lane.b32.xlu0 %v4297, 4
    %v5900 = vpop.permute.xlu0 %5899
    %5901 = vrot.lane.b32.xlu0 %v4433, 4
    %v5902 = vpop.permute.xlu0 %5901
    %5903 = vrot.lane.b32.xlu0 %v4841, 4
    %v5904 = vpop.permute.xlu0 %5903
    %5905 = vrot.lane.b32.xlu0 %v4977, 4
    %v5906 = vpop.permute.xlu0 %5905
    %5907 = vrot.lane.b32.xlu0 %v5385, 4
    %v5908 = vpop.permute.xlu0 %5907
    %5909 = vrot.lane.b32.xlu0 %v5521, 4
    %v5910 = vpop.permute.xlu0 %5909
    %5943 = vrot.lane.b32.xlu0 %v1578, 6
    %v5944 = vpop.permute.xlu0 %5943
    %5945 = vrot.lane.b32.xlu0 %v1714, 6
    %v5946 = vpop.permute.xlu0 %5945
    %5947 = vrot.lane.b32.xlu0 %v2122, 6
    %v5948 = vpop.permute.xlu0 %5947
    %5949 = vrot.lane.b32.xlu0 %v2258, 6
    %v5950 = vpop.permute.xlu0 %5949
    %5951 = vrot.lane.b32.xlu0 %v2666, 6
    %v5952 = vpop.permute.xlu0 %5951
    %5953 = vrot.lane.b32.xlu0 %v2802, 6
    %v5954 = vpop.permute.xlu0 %5953
    %5955 = vrot.lane.b32.xlu0 %v3210, 6
    %v5956 = vpop.permute.xlu0 %5955
    %5957 = vrot.lane.b32.xlu0 %v3346, 6
    %v5958 = vpop.permute.xlu0 %5957
    %5959 = vrot.lane.b32.xlu0 %v3754, 6
    %v5960 = vpop.permute.xlu0 %5959
    %5961 = vrot.lane.b32.xlu0 %v3890, 6
    %v5962 = vpop.permute.xlu0 %5961
    %5963 = vrot.lane.b32.xlu0 %v4298, 6
    %v5964 = vpop.permute.xlu0 %5963
    %5965 = vrot.lane.b32.xlu0 %v4434, 6
    %v5966 = vpop.permute.xlu0 %5965
    %5967 = vrot.lane.b32.xlu0 %v4842, 6
    %v5968 = vpop.permute.xlu0 %5967
    %5969 = vrot.lane.b32.xlu0 %v4978, 6
    %v5970 = vpop.permute.xlu0 %5969
    %5971 = vrot.lane.b32.xlu0 %v5386, 6
    %v5972 = vpop.permute.xlu0 %5971
    %5973 = vrot.lane.b32.xlu0 %v5522, 6
    %v5974 = vpop.permute.xlu0 %5973
    %6007 = vrot.lane.b32.xlu0 %v1579, 8
    %v6008 = vpop.permute.xlu0 %6007
    %6009 = vrot.lane.b32.xlu0 %v1715, 8
    %v6010 = vpop.permute.xlu0 %6009
    %6011 = vrot.lane.b32.xlu0 %v2123, 8
    %v6012 = vpop.permute.xlu0 %6011
    %6013 = vrot.lane.b32.xlu0 %v2259, 8
    %v6014 = vpop.permute.xlu0 %6013
    %6015 = vrot.lane.b32.xlu0 %v2667, 8
    %v6016 = vpop.permute.xlu0 %6015
    %6017 = vrot.lane.b32.xlu0 %v2803, 8
    %v6018 = vpop.permute.xlu0 %6017
    %6019 = vrot.lane.b32.xlu0 %v3211, 8
    %v6020 = vpop.permute.xlu0 %6019
    %6021 = vrot.lane.b32.xlu0 %v3347, 8
    %v6022 = vpop.permute.xlu0 %6021
    %6023 = vrot.lane.b32.xlu0 %v3755, 8
    %v6024 = vpop.permute.xlu0 %6023
    %6025 = vrot.lane.b32.xlu0 %v3891, 8
    %v6026 = vpop.permute.xlu0 %6025
    %6027 = vrot.lane.b32.xlu0 %v4299, 8
    %v6028 = vpop.permute.xlu0 %6027
    %6029 = vrot.lane.b32.xlu0 %v4435, 8
    %v6030 = vpop.permute.xlu0 %6029
    %6031 = vrot.lane.b32.xlu0 %v4843, 8
    %v6032 = vpop.permute.xlu0 %6031
    %6033 = vrot.lane.b32.xlu0 %v4979, 8
    %v6034 = vpop.permute.xlu0 %6033
    %6035 = vrot.lane.b32.xlu0 %v5387, 8
    %v6036 = vpop.permute.xlu0 %6035
    %6037 = vrot.lane.b32.xlu0 %v5523, 8
    %v6038 = vpop.permute.xlu0 %6037
    %6071 = vrot.lane.b32.xlu0 %v1580, 10
    %v6072 = vpop.permute.xlu0 %6071
    %6073 = vrot.lane.b32.xlu0 %v1716, 10
    %v6074 = vpop.permute.xlu0 %6073
    %6075 = vrot.lane.b32.xlu0 %v2124, 10
    %v6076 = vpop.permute.xlu0 %6075
    %6077 = vrot.lane.b32.xlu0 %v2260, 10
    %v6078 = vpop.permute.xlu0 %6077
    %6079 = vrot.lane.b32.xlu0 %v2668, 10
    %v6080 = vpop.permute.xlu0 %6079
    %6081 = vrot.lane.b32.xlu0 %v2804, 10
    %v6082 = vpop.permute.xlu0 %6081
    %6083 = vrot.lane.b32.xlu0 %v3212, 10
    %v6084 = vpop.permute.xlu0 %6083
    %6085 = vrot.lane.b32.xlu0 %v3348, 10
    %v6086 = vpop.permute.xlu0 %6085
    %6087 = vrot.lane.b32.xlu0 %v3756, 10
    %v6088 = vpop.permute.xlu0 %6087
    %6089 = vrot.lane.b32.xlu0 %v3892, 10
    %v6090 = vpop.permute.xlu0 %6089
    %6091 = vrot.lane.b32.xlu0 %v4300, 10
    %v6092 = vpop.permute.xlu0 %6091
    %6093 = vrot.lane.b32.xlu0 %v4436, 10
    %v6094 = vpop.permute.xlu0 %6093
    %6095 = vrot.lane.b32.xlu0 %v4844, 10
    %v6096 = vpop.permute.xlu0 %6095
    %6097 = vrot.lane.b32.xlu0 %v4980, 10
    %v6098 = vpop.permute.xlu0 %6097
    %6099 = vrot.lane.b32.xlu0 %v5388, 10
    %v6100 = vpop.permute.xlu0 %6099
    %6101 = vrot.lane.b32.xlu0 %v5524, 10
    %v6102 = vpop.permute.xlu0 %6101
    %6135 = vrot.lane.b32.xlu0 %v1581, 12
    %v6136 = vpop.permute.xlu0 %6135
    %6137 = vrot.lane.b32.xlu0 %v1717, 12
    %v6138 = vpop.permute.xlu0 %6137
    %6139 = vrot.lane.b32.xlu0 %v2125, 12
    %v6140 = vpop.permute.xlu0 %6139
    %6141 = vrot.lane.b32.xlu0 %v2261, 12
    %v6142 = vpop.permute.xlu0 %6141
    %6143 = vrot.lane.b32.xlu0 %v2669, 12
    %v6144 = vpop.permute.xlu0 %6143
    %6145 = vrot.lane.b32.xlu0 %v2805, 12
    %v6146 = vpop.permute.xlu0 %6145
    %6147 = vrot.lane.b32.xlu0 %v3213, 12
    %v6148 = vpop.permute.xlu0 %6147
    %6149 = vrot.lane.b32.xlu0 %v3349, 12
    %v6150 = vpop.permute.xlu0 %6149
    %6151 = vrot.lane.b32.xlu0 %v3757, 12
    %v6152 = vpop.permute.xlu0 %6151
    %6153 = vrot.lane.b32.xlu0 %v3893, 12
    %v6154 = vpop.permute.xlu0 %6153
    %6155 = vrot.lane.b32.xlu0 %v4301, 12
    %v6156 = vpop.permute.xlu0 %6155
    %6157 = vrot.lane.b32.xlu0 %v4437, 12
    %v6158 = vpop.permute.xlu0 %6157
    %6159 = vrot.lane.b32.xlu0 %v4845, 12
    %v6160 = vpop.permute.xlu0 %6159
    %6161 = vrot.lane.b32.xlu0 %v4981, 12
    %v6162 = vpop.permute.xlu0 %6161
    %6163 = vrot.lane.b32.xlu0 %v5389, 12
    %v6164 = vpop.permute.xlu0 %6163
    %6165 = vrot.lane.b32.xlu0 %v5525, 12
    %v6166 = vpop.permute.xlu0 %6165
    %6199 = vrot.lane.b32.xlu0 %v1582, 14
    %v6200 = vpop.permute.xlu0 %6199
    %6201 = vrot.lane.b32.xlu0 %v1718, 14
    %v6202 = vpop.permute.xlu0 %6201
    %6203 = vrot.lane.b32.xlu0 %v2126, 14
    %v6204 = vpop.permute.xlu0 %6203
    %6205 = vrot.lane.b32.xlu0 %v2262, 14
    %v6206 = vpop.permute.xlu0 %6205
    %6207 = vrot.lane.b32.xlu0 %v2670, 14
    %v6208 = vpop.permute.xlu0 %6207
    %6209 = vrot.lane.b32.xlu0 %v2806, 14
    %v6210 = vpop.permute.xlu0 %6209
    %6211 = vrot.lane.b32.xlu0 %v3214, 14
    %v6212 = vpop.permute.xlu0 %6211
    %6213 = vrot.lane.b32.xlu0 %v3350, 14
    %v6214 = vpop.permute.xlu0 %6213
    %6215 = vrot.lane.b32.xlu0 %v3758, 14
    %v6216 = vpop.permute.xlu0 %6215
    %6217 = vrot.lane.b32.xlu0 %v3894, 14
    %v6218 = vpop.permute.xlu0 %6217
    %6219 = vrot.lane.b32.xlu0 %v4302, 14
    %v6220 = vpop.permute.xlu0 %6219
    %6221 = vrot.lane.b32.xlu0 %v4438, 14
    %v6222 = vpop.permute.xlu0 %6221
    %6223 = vrot.lane.b32.xlu0 %v4846, 14
    %v6224 = vpop.permute.xlu0 %6223
    %6225 = vrot.lane.b32.xlu0 %v4982, 14
    %v6226 = vpop.permute.xlu0 %6225
    %6227 = vrot.lane.b32.xlu0 %v5390, 14
    %v6228 = vpop.permute.xlu0 %6227
    %6229 = vrot.lane.b32.xlu0 %v5526, 14
    %v6230 = vpop.permute.xlu0 %6229
    %6263 = vrot.lane.b32.xlu0 %v1847, 16
    %v6264 = vpop.permute.xlu0 %6263
    %6265 = vrot.lane.b32.xlu0 %v1983, 16
    %v6266 = vpop.permute.xlu0 %6265
    %6267 = vrot.lane.b32.xlu0 %v2391, 16
    %v6268 = vpop.permute.xlu0 %6267
    %6269 = vrot.lane.b32.xlu0 %v2527, 16
    %v6270 = vpop.permute.xlu0 %6269
    %6271 = vrot.lane.b32.xlu0 %v2935, 16
    %v6272 = vpop.permute.xlu0 %6271
    %6273 = vrot.lane.b32.xlu0 %v3071, 16
    %v6274 = vpop.permute.xlu0 %6273
    %6275 = vrot.lane.b32.xlu0 %v3479, 16
    %v6276 = vpop.permute.xlu0 %6275
    %6277 = vrot.lane.b32.xlu0 %v3615, 16
    %v6278 = vpop.permute.xlu0 %6277
    %6279 = vrot.lane.b32.xlu0 %v4023, 16
    %v6280 = vpop.permute.xlu0 %6279
    %6281 = vrot.lane.b32.xlu0 %v4159, 16
    %v6282 = vpop.permute.xlu0 %6281
    %6283 = vrot.lane.b32.xlu0 %v4567, 16
    %v6284 = vpop.permute.xlu0 %6283
    %6285 = vrot.lane.b32.xlu0 %v4703, 16
    %v6286 = vpop.permute.xlu0 %6285
    %6287 = vrot.lane.b32.xlu0 %v5111, 16
    %v6288 = vpop.permute.xlu0 %6287
    %6289 = vrot.lane.b32.xlu0 %v5247, 16
    %v6290 = vpop.permute.xlu0 %6289
    %6291 = vrot.lane.b32.xlu0 %v5655, 16
    %v6292 = vpop.permute.xlu0 %6291
    %6293 = vrot.lane.b32.xlu0 %v5791, 16
    %v6294 = vpop.permute.xlu0 %6293
    %6327 = vrot.lane.b32.xlu0 %v1848, 18
    %v6328 = vpop.permute.xlu0 %6327
    %6329 = vrot.lane.b32.xlu0 %v1984, 18
    %v6330 = vpop.permute.xlu0 %6329
    %6331 = vrot.lane.b32.xlu0 %v2392, 18
    %v6332 = vpop.permute.xlu0 %6331
    %6333 = vrot.lane.b32.xlu0 %v2528, 18
    %v6334 = vpop.permute.xlu0 %6333
    %6335 = vrot.lane.b32.xlu0 %v2936, 18
    %v6336 = vpop.permute.xlu0 %6335
    %6337 = vrot.lane.b32.xlu0 %v3072, 18
    %v6338 = vpop.permute.xlu0 %6337
    %6339 = vrot.lane.b32.xlu0 %v3480, 18
    %v6340 = vpop.permute.xlu0 %6339
    %6341 = vrot.lane.b32.xlu0 %v3616, 18
    %v6342 = vpop.permute.xlu0 %6341
    %6343 = vrot.lane.b32.xlu0 %v4024, 18
    %v6344 = vpop.permute.xlu0 %6343
    %6345 = vrot.lane.b32.xlu0 %v4160, 18
    %v6346 = vpop.permute.xlu0 %6345
    %6347 = vrot.lane.b32.xlu0 %v4568, 18
    %v6348 = vpop.permute.xlu0 %6347
    %6349 = vrot.lane.b32.xlu0 %v4704, 18
    %v6350 = vpop.permute.xlu0 %6349
    %6351 = vrot.lane.b32.xlu0 %v5112, 18
    %v6352 = vpop.permute.xlu0 %6351
    %6353 = vrot.lane.b32.xlu0 %v5248, 18
    %v6354 = vpop.permute.xlu0 %6353
    %6355 = vrot.lane.b32.xlu0 %v5656, 18
    %v6356 = vpop.permute.xlu0 %6355
    %6357 = vrot.lane.b32.xlu0 %v5792, 18
    %v6358 = vpop.permute.xlu0 %6357
    %6391 = vrot.lane.b32.xlu0 %v1849, 20
    %v6392 = vpop.permute.xlu0 %6391
    %6393 = vrot.lane.b32.xlu0 %v1985, 20
    %v6394 = vpop.permute.xlu0 %6393
    %6395 = vrot.lane.b32.xlu0 %v2393, 20
    %v6396 = vpop.permute.xlu0 %6395
    %6397 = vrot.lane.b32.xlu0 %v2529, 20
    %v6398 = vpop.permute.xlu0 %6397
    %6399 = vrot.lane.b32.xlu0 %v2937, 20
    %v6400 = vpop.permute.xlu0 %6399
    %6401 = vrot.lane.b32.xlu0 %v3073, 20
    %v6402 = vpop.permute.xlu0 %6401
    %6403 = vrot.lane.b32.xlu0 %v3481, 20
    %v6404 = vpop.permute.xlu0 %6403
    %6405 = vrot.lane.b32.xlu0 %v3617, 20
    %v6406 = vpop.permute.xlu0 %6405
    %6407 = vrot.lane.b32.xlu0 %v4025, 20
    %v6408 = vpop.permute.xlu0 %6407
    %6409 = vrot.lane.b32.xlu0 %v4161, 20
    %v6410 = vpop.permute.xlu0 %6409
    %6411 = vrot.lane.b32.xlu0 %v4569, 20
    %v6412 = vpop.permute.xlu0 %6411
    %6413 = vrot.lane.b32.xlu0 %v4705, 20
    %v6414 = vpop.permute.xlu0 %6413
    %6415 = vrot.lane.b32.xlu0 %v5113, 20
    %v6416 = vpop.permute.xlu0 %6415
    %6417 = vrot.lane.b32.xlu0 %v5249, 20
    %v6418 = vpop.permute.xlu0 %6417
    %6419 = vrot.lane.b32.xlu0 %v5657, 20
    %v6420 = vpop.permute.xlu0 %6419
    %6421 = vrot.lane.b32.xlu0 %v5793, 20
    %v6422 = vpop.permute.xlu0 %6421
    %6455 = vrot.lane.b32.xlu0 %v1850, 22
    %v6456 = vpop.permute.xlu0 %6455
    %6457 = vrot.lane.b32.xlu0 %v1986, 22
    %v6458 = vpop.permute.xlu0 %6457
    %6459 = vrot.lane.b32.xlu0 %v2394, 22
    %v6460 = vpop.permute.xlu0 %6459
    %6461 = vrot.lane.b32.xlu0 %v2530, 22
    %v6462 = vpop.permute.xlu0 %6461
    %6463 = vrot.lane.b32.xlu0 %v2938, 22
    %v6464 = vpop.permute.xlu0 %6463
    %6465 = vrot.lane.b32.xlu0 %v3074, 22
    %v6466 = vpop.permute.xlu0 %6465
    %6467 = vrot.lane.b32.xlu0 %v3482, 22
    %v6468 = vpop.permute.xlu0 %6467
    %6469 = vrot.lane.b32.xlu0 %v3618, 22
    %v6470 = vpop.permute.xlu0 %6469
    %6471 = vrot.lane.b32.xlu0 %v4026, 22
    %v6472 = vpop.permute.xlu0 %6471
    %6473 = vrot.lane.b32.xlu0 %v4162, 22
    %v6474 = vpop.permute.xlu0 %6473
    %6475 = vrot.lane.b32.xlu0 %v4570, 22
    %v6476 = vpop.permute.xlu0 %6475
    %6477 = vrot.lane.b32.xlu0 %v4706, 22
    %v6478 = vpop.permute.xlu0 %6477
    %6479 = vrot.lane.b32.xlu0 %v5114, 22
    %v6480 = vpop.permute.xlu0 %6479
    %6481 = vrot.lane.b32.xlu0 %v5250, 22
    %v6482 = vpop.permute.xlu0 %6481
    %6483 = vrot.lane.b32.xlu0 %v5658, 22
    %v6484 = vpop.permute.xlu0 %6483
    %6485 = vrot.lane.b32.xlu0 %v5794, 22
    %v6486 = vpop.permute.xlu0 %6485
    %6519 = vrot.lane.b32.xlu0 %v1851, 24
    %v6520 = vpop.permute.xlu0 %6519
    %6521 = vrot.lane.b32.xlu0 %v1987, 24
    %v6522 = vpop.permute.xlu0 %6521
    %6523 = vrot.lane.b32.xlu0 %v2395, 24
    %v6524 = vpop.permute.xlu0 %6523
    %6525 = vrot.lane.b32.xlu0 %v2531, 24
    %v6526 = vpop.permute.xlu0 %6525
    %6527 = vrot.lane.b32.xlu0 %v2939, 24
    %v6528 = vpop.permute.xlu0 %6527
    %6529 = vrot.lane.b32.xlu0 %v3075, 24
    %v6530 = vpop.permute.xlu0 %6529
    %6531 = vrot.lane.b32.xlu0 %v3483, 24
    %v6532 = vpop.permute.xlu0 %6531
    %6533 = vrot.lane.b32.xlu0 %v3619, 24
    %v6534 = vpop.permute.xlu0 %6533
    %6535 = vrot.lane.b32.xlu0 %v4027, 24
    %v6536 = vpop.permute.xlu0 %6535
    %6537 = vrot.lane.b32.xlu0 %v4163, 24
    %v6538 = vpop.permute.xlu0 %6537
    %6539 = vrot.lane.b32.xlu0 %v4571, 24
    %v6540 = vpop.permute.xlu0 %6539
    %6541 = vrot.lane.b32.xlu0 %v4707, 24
    %v6542 = vpop.permute.xlu0 %6541
    %6543 = vrot.lane.b32.xlu0 %v5115, 24
    %v6544 = vpop.permute.xlu0 %6543
    %6545 = vrot.lane.b32.xlu0 %v5251, 24
    %v6546 = vpop.permute.xlu0 %6545
    %6547 = vrot.lane.b32.xlu0 %v5659, 24
    %v6548 = vpop.permute.xlu0 %6547
    %6549 = vrot.lane.b32.xlu0 %v5795, 24
    %v6550 = vpop.permute.xlu0 %6549
    %6583 = vrot.lane.b32.xlu0 %v1852, 26
    %v6584 = vpop.permute.xlu0 %6583
    %6585 = vrot.lane.b32.xlu0 %v1988, 26
    %v6586 = vpop.permute.xlu0 %6585
    %6587 = vrot.lane.b32.xlu0 %v2396, 26
    %v6588 = vpop.permute.xlu0 %6587
    %6589 = vrot.lane.b32.xlu0 %v2532, 26
    %v6590 = vpop.permute.xlu0 %6589
    %6591 = vrot.lane.b32.xlu0 %v2940, 26
    %v6592 = vpop.permute.xlu0 %6591
    %6593 = vrot.lane.b32.xlu0 %v3076, 26
    %v6594 = vpop.permute.xlu0 %6593
    %6595 = vrot.lane.b32.xlu0 %v3484, 26
    %v6596 = vpop.permute.xlu0 %6595
    %6597 = vrot.lane.b32.xlu0 %v3620, 26
    %v6598 = vpop.permute.xlu0 %6597
    %6599 = vrot.lane.b32.xlu0 %v4028, 26
    %v6600 = vpop.permute.xlu0 %6599
    %6601 = vrot.lane.b32.xlu0 %v4164, 26
    %v6602 = vpop.permute.xlu0 %6601
    %6603 = vrot.lane.b32.xlu0 %v4572, 26
    %v6604 = vpop.permute.xlu0 %6603
    %6605 = vrot.lane.b32.xlu0 %v4708, 26
    %v6606 = vpop.permute.xlu0 %6605
    %6607 = vrot.lane.b32.xlu0 %v5116, 26
    %v6608 = vpop.permute.xlu0 %6607
    %6609 = vrot.lane.b32.xlu0 %v5252, 26
    %v6610 = vpop.permute.xlu0 %6609
    %6611 = vrot.lane.b32.xlu0 %v5660, 26
    %v6612 = vpop.permute.xlu0 %6611
    %6613 = vrot.lane.b32.xlu0 %v5796, 26
    %v6614 = vpop.permute.xlu0 %6613
    %6647 = vrot.lane.b32.xlu0 %v1853, 28
    %v6648 = vpop.permute.xlu0 %6647
    %6649 = vrot.lane.b32.xlu0 %v1989, 28
    %v6650 = vpop.permute.xlu0 %6649
    %6651 = vrot.lane.b32.xlu0 %v2397, 28
    %v6652 = vpop.permute.xlu0 %6651
    %6653 = vrot.lane.b32.xlu0 %v2533, 28
    %v6654 = vpop.permute.xlu0 %6653
    %6655 = vrot.lane.b32.xlu0 %v2941, 28
    %v6656 = vpop.permute.xlu0 %6655
    %6657 = vrot.lane.b32.xlu0 %v3077, 28
    %v6658 = vpop.permute.xlu0 %6657
    %6659 = vrot.lane.b32.xlu0 %v3485, 28
    %v6660 = vpop.permute.xlu0 %6659
    %6661 = vrot.lane.b32.xlu0 %v3621, 28
    %v6662 = vpop.permute.xlu0 %6661
    %6663 = vrot.lane.b32.xlu0 %v4029, 28
    %v6664 = vpop.permute.xlu0 %6663
    %6665 = vrot.lane.b32.xlu0 %v4165, 28
    %v6666 = vpop.permute.xlu0 %6665
    %6667 = vrot.lane.b32.xlu0 %v4573, 28
    %v6668 = vpop.permute.xlu0 %6667
    %6669 = vrot.lane.b32.xlu0 %v4709, 28
    %v6670 = vpop.permute.xlu0 %6669
    %6671 = vrot.lane.b32.xlu0 %v5117, 28
    %v6672 = vpop.permute.xlu0 %6671
    %6673 = vrot.lane.b32.xlu0 %v5253, 28
    %v6674 = vpop.permute.xlu0 %6673
    %6675 = vrot.lane.b32.xlu0 %v5661, 28
    %v6676 = vpop.permute.xlu0 %6675
    %6677 = vrot.lane.b32.xlu0 %v5797, 28
    %v6678 = vpop.permute.xlu0 %6677
    %6711 = vrot.lane.b32.xlu0 %v1854, 30
    %v6712 = vpop.permute.xlu0 %6711
    %6713 = vrot.lane.b32.xlu0 %v1990, 30
    %v6714 = vpop.permute.xlu0 %6713
    %6715 = vrot.lane.b32.xlu0 %v2398, 30
    %v6716 = vpop.permute.xlu0 %6715
    %6717 = vrot.lane.b32.xlu0 %v2534, 30
    %v6718 = vpop.permute.xlu0 %6717
    %6719 = vrot.lane.b32.xlu0 %v2942, 30
    %v6720 = vpop.permute.xlu0 %6719
    %6721 = vrot.lane.b32.xlu0 %v3078, 30
    %v6722 = vpop.permute.xlu0 %6721
    %6723 = vrot.lane.b32.xlu0 %v3486, 30
    %v6724 = vpop.permute.xlu0 %6723
    %6725 = vrot.lane.b32.xlu0 %v3622, 30
    %v6726 = vpop.permute.xlu0 %6725
    %6727 = vrot.lane.b32.xlu0 %v4030, 30
    %v6728 = vpop.permute.xlu0 %6727
    %6729 = vrot.lane.b32.xlu0 %v4166, 30
    %v6730 = vpop.permute.xlu0 %6729
    %6731 = vrot.lane.b32.xlu0 %v4574, 30
    %v6732 = vpop.permute.xlu0 %6731
    %6733 = vrot.lane.b32.xlu0 %v4710, 30
    %v6734 = vpop.permute.xlu0 %6733
    %6735 = vrot.lane.b32.xlu0 %v5118, 30
    %v6736 = vpop.permute.xlu0 %6735
    %6737 = vrot.lane.b32.xlu0 %v5254, 30
    %v6738 = vpop.permute.xlu0 %6737
    %6739 = vrot.lane.b32.xlu0 %v5662, 30
    %v6740 = vpop.permute.xlu0 %6739
    %6741 = vrot.lane.b32.xlu0 %v5798, 30
    %v6742 = vpop.permute.xlu0 %6741
    %vm6759 = vcmask 15360
    %v6760 = vsel %vm6759, %v1575, %v5816
    %v6761 = vsel %vm6759, %v1711, %v5818
    %v6762 = vsel %vm6759, %v2119, %v5820
    %v6763 = vsel %vm6759, %v2255, %v5822
    %v6764 = vsel %vm6759, %v2663, %v5824
    %v6765 = vsel %vm6759, %v2799, %v5826
    %v6766 = vsel %vm6759, %v3207, %v5828
    %v6767 = vsel %vm6759, %v3343, %v5830
    %v6768 = vsel %vm6759, %v3751, %v5832
    %v6769 = vsel %vm6759, %v3887, %v5834
    %v6770 = vsel %vm6759, %v4295, %v5836
    %v6771 = vsel %vm6759, %v4431, %v5838
    %v6772 = vsel %vm6759, %v4839, %v5840
    %v6773 = vsel %vm6759, %v4975, %v5842
    %v6774 = vsel %vm6759, %v5383, %v5844
    %v6775 = vsel %vm6759, %v5519, %v5846
    %vm6776 = vcmask 31744
    %v6777 = vsel %vm6776, %v6760, %v5880
    %v6778 = vsel %vm6776, %v6761, %v5882
    %v6779 = vsel %vm6776, %v6762, %v5884
    %v6780 = vsel %vm6776, %v6763, %v5886
    %v6781 = vsel %vm6776, %v6764, %v5888
    %v6782 = vsel %vm6776, %v6765, %v5890
    %v6783 = vsel %vm6776, %v6766, %v5892
    %v6784 = vsel %vm6776, %v6767, %v5894
    %v6785 = vsel %vm6776, %v6768, %v5896
    %v6786 = vsel %vm6776, %v6769, %v5898
    %v6787 = vsel %vm6776, %v6770, %v5900
    %v6788 = vsel %vm6776, %v6771, %v5902
    %v6789 = vsel %vm6776, %v6772, %v5904
    %v6790 = vsel %vm6776, %v6773, %v5906
    %v6791 = vsel %vm6776, %v6774, %v5908
    %v6792 = vsel %vm6776, %v6775, %v5910
    %vm6793 = vcmask 48128
    %v6794 = vsel %vm6793, %v6777, %v5944
    %v6795 = vsel %vm6793, %v6778, %v5946
    %v6796 = vsel %vm6793, %v6779, %v5948
    %v6797 = vsel %vm6793, %v6780, %v5950
    %v6798 = vsel %vm6793, %v6781, %v5952
    %v6799 = vsel %vm6793, %v6782, %v5954
    %v6800 = vsel %vm6793, %v6783, %v5956
    %v6801 = vsel %vm6793, %v6784, %v5958
    %v6802 = vsel %vm6793, %v6785, %v5960
    %v6803 = vsel %vm6793, %v6786, %v5962
    %v6804 = vsel %vm6793, %v6787, %v5964
    %v6805 = vsel %vm6793, %v6788, %v5966
    %v6806 = vsel %vm6793, %v6789, %v5968
    %v6807 = vsel %vm6793, %v6790, %v5970
    %v6808 = vsel %vm6793, %v6791, %v5972
    %v6809 = vsel %vm6793, %v6792, %v5974
    %vm6810 = vcmask 64512
    %v6811 = vsel %vm6810, %v6794, %v6008
    %v6812 = vsel %vm6810, %v6795, %v6010
    %v6813 = vsel %vm6810, %v6796, %v6012
    %v6814 = vsel %vm6810, %v6797, %v6014
    %v6815 = vsel %vm6810, %v6798, %v6016
    %v6816 = vsel %vm6810, %v6799, %v6018
    %v6817 = vsel %vm6810, %v6800, %v6020
    %v6818 = vsel %vm6810, %v6801, %v6022
    %v6819 = vsel %vm6810, %v6802, %v6024
    %v6820 = vsel %vm6810, %v6803, %v6026
    %v6821 = vsel %vm6810, %v6804, %v6028
    %v6822 = vsel %vm6810, %v6805, %v6030
    %v6823 = vsel %vm6810, %v6806, %v6032
    %v6824 = vsel %vm6810, %v6807, %v6034
    %v6825 = vsel %vm6810, %v6808, %v6036
    %v6826 = vsel %vm6810, %v6809, %v6038
    %vm6827 = vcmask 80896
    %v6828 = vsel %vm6827, %v6811, %v6072
    %v6829 = vsel %vm6827, %v6812, %v6074
    %v6830 = vsel %vm6827, %v6813, %v6076
    %v6831 = vsel %vm6827, %v6814, %v6078
    %v6832 = vsel %vm6827, %v6815, %v6080
    %v6833 = vsel %vm6827, %v6816, %v6082
    %v6834 = vsel %vm6827, %v6817, %v6084
    %v6835 = vsel %vm6827, %v6818, %v6086
    %v6836 = vsel %vm6827, %v6819, %v6088
    %v6837 = vsel %vm6827, %v6820, %v6090
    %v6838 = vsel %vm6827, %v6821, %v6092
    %v6839 = vsel %vm6827, %v6822, %v6094
    %v6840 = vsel %vm6827, %v6823, %v6096
    %v6841 = vsel %vm6827, %v6824, %v6098
    %v6842 = vsel %vm6827, %v6825, %v6100
    %v6843 = vsel %vm6827, %v6826, %v6102
    %vm6844 = vcmask 97280
    %v6845 = vsel %vm6844, %v6828, %v6136
    %v6846 = vsel %vm6844, %v6829, %v6138
    %v6847 = vsel %vm6844, %v6830, %v6140
    %v6848 = vsel %vm6844, %v6831, %v6142
    %v6849 = vsel %vm6844, %v6832, %v6144
    %v6850 = vsel %vm6844, %v6833, %v6146
    %v6851 = vsel %vm6844, %v6834, %v6148
    %v6852 = vsel %vm6844, %v6835, %v6150
    %v6853 = vsel %vm6844, %v6836, %v6152
    %v6854 = vsel %vm6844, %v6837, %v6154
    %v6855 = vsel %vm6844, %v6838, %v6156
    %v6856 = vsel %vm6844, %v6839, %v6158
    %v6857 = vsel %vm6844, %v6840, %v6160
    %v6858 = vsel %vm6844, %v6841, %v6162
    %v6859 = vsel %vm6844, %v6842, %v6164
    %v6860 = vsel %vm6844, %v6843, %v6166
    %vm6861 = vcmask 113664
    %v6862 = vsel %vm6861, %v6845, %v6200
    %v6863 = vsel %vm6861, %v6846, %v6202
    %v6864 = vsel %vm6861, %v6847, %v6204
    %v6865 = vsel %vm6861, %v6848, %v6206
    %v6866 = vsel %vm6861, %v6849, %v6208
    %v6867 = vsel %vm6861, %v6850, %v6210
    %v6868 = vsel %vm6861, %v6851, %v6212
    %v6869 = vsel %vm6861, %v6852, %v6214
    %v6870 = vsel %vm6861, %v6853, %v6216
    %v6871 = vsel %vm6861, %v6854, %v6218
    %v6872 = vsel %vm6861, %v6855, %v6220
    %v6873 = vsel %vm6861, %v6856, %v6222
    %v6874 = vsel %vm6861, %v6857, %v6224
    %v6875 = vsel %vm6861, %v6858, %v6226
    %v6876 = vsel %vm6861, %v6859, %v6228
    %v6877 = vsel %vm6861, %v6860, %v6230
    %vm6878 = vcmask 130048
    %v6879 = vsel %vm6878, %v6862, %v6264
    %v6880 = vsel %vm6878, %v6863, %v6266
    %v6881 = vsel %vm6878, %v6864, %v6268
    %v6882 = vsel %vm6878, %v6865, %v6270
    %v6883 = vsel %vm6878, %v6866, %v6272
    %v6884 = vsel %vm6878, %v6867, %v6274
    %v6885 = vsel %vm6878, %v6868, %v6276
    %v6886 = vsel %vm6878, %v6869, %v6278
    %v6887 = vsel %vm6878, %v6870, %v6280
    %v6888 = vsel %vm6878, %v6871, %v6282
    %v6889 = vsel %vm6878, %v6872, %v6284
    %v6890 = vsel %vm6878, %v6873, %v6286
    %v6891 = vsel %vm6878, %v6874, %v6288
    %v6892 = vsel %vm6878, %v6875, %v6290
    %v6893 = vsel %vm6878, %v6876, %v6292
    %v6894 = vsel %vm6878, %v6877, %v6294
    %vm6895 = vcmask 146432
    %v6896 = vsel %vm6895, %v6879, %v6328
    %v6897 = vsel %vm6895, %v6880, %v6330
    %v6898 = vsel %vm6895, %v6881, %v6332
    %v6899 = vsel %vm6895, %v6882, %v6334
    %v6900 = vsel %vm6895, %v6883, %v6336
    %v6901 = vsel %vm6895, %v6884, %v6338
    %v6902 = vsel %vm6895, %v6885, %v6340
    %v6903 = vsel %vm6895, %v6886, %v6342
    %v6904 = vsel %vm6895, %v6887, %v6344
    %v6905 = vsel %vm6895, %v6888, %v6346
    %v6906 = vsel %vm6895, %v6889, %v6348
    %v6907 = vsel %vm6895, %v6890, %v6350
    %v6908 = vsel %vm6895, %v6891, %v6352
    %v6909 = vsel %vm6895, %v6892, %v6354
    %v6910 = vsel %vm6895, %v6893, %v6356
    %v6911 = vsel %vm6895, %v6894, %v6358
    %vm6912 = vcmask 162816
    %v6913 = vsel %vm6912, %v6896, %v6392
    %v6914 = vsel %vm6912, %v6897, %v6394
    %v6915 = vsel %vm6912, %v6898, %v6396
    %v6916 = vsel %vm6912, %v6899, %v6398
    %v6917 = vsel %vm6912, %v6900, %v6400
    %v6918 = vsel %vm6912, %v6901, %v6402
    %v6919 = vsel %vm6912, %v6902, %v6404
    %v6920 = vsel %vm6912, %v6903, %v6406
    %v6921 = vsel %vm6912, %v6904, %v6408
    %v6922 = vsel %vm6912, %v6905, %v6410
    %v6923 = vsel %vm6912, %v6906, %v6412
    %v6924 = vsel %vm6912, %v6907, %v6414
    %v6925 = vsel %vm6912, %v6908, %v6416
    %v6926 = vsel %vm6912, %v6909, %v6418
    %v6927 = vsel %vm6912, %v6910, %v6420
    %v6928 = vsel %vm6912, %v6911, %v6422
    %vm6929 = vcmask 179200
    %v6930 = vsel %vm6929, %v6913, %v6456
    %v6931 = vsel %vm6929, %v6914, %v6458
    %v6932 = vsel %vm6929, %v6915, %v6460
    %v6933 = vsel %vm6929, %v6916, %v6462
    %v6934 = vsel %vm6929, %v6917, %v6464
    %v6935 = vsel %vm6929, %v6918, %v6466
    %v6936 = vsel %vm6929, %v6919, %v6468
    %v6937 = vsel %vm6929, %v6920, %v6470
    %v6938 = vsel %vm6929, %v6921, %v6472
    %v6939 = vsel %vm6929, %v6922, %v6474
    %v6940 = vsel %vm6929, %v6923, %v6476
    %v6941 = vsel %vm6929, %v6924, %v6478
    %v6942 = vsel %vm6929, %v6925, %v6480
    %v6943 = vsel %vm6929, %v6926, %v6482
    %v6944 = vsel %vm6929, %v6927, %v6484
    %v6945 = vsel %vm6929, %v6928, %v6486
    %vm6946 = vcmask 195584
    %v6947 = vsel %vm6946, %v6930, %v6520
    %v6948 = vsel %vm6946, %v6931, %v6522
    %v6949 = vsel %vm6946, %v6932, %v6524
    %v6950 = vsel %vm6946, %v6933, %v6526
    %v6951 = vsel %vm6946, %v6934, %v6528
    %v6952 = vsel %vm6946, %v6935, %v6530
    %v6953 = vsel %vm6946, %v6936, %v6532
    %v6954 = vsel %vm6946, %v6937, %v6534
    %v6955 = vsel %vm6946, %v6938, %v6536
    %v6956 = vsel %vm6946, %v6939, %v6538
    %v6957 = vsel %vm6946, %v6940, %v6540
    %v6958 = vsel %vm6946, %v6941, %v6542
    %v6959 = vsel %vm6946, %v6942, %v6544
    %v6960 = vsel %vm6946, %v6943, %v6546
    %v6961 = vsel %vm6946, %v6944, %v6548
    %v6962 = vsel %vm6946, %v6945, %v6550
    %vm6963 = vcmask 211968
    %v6964 = vsel %vm6963, %v6947, %v6584
    %v6965 = vsel %vm6963, %v6948, %v6586
    %v6966 = vsel %vm6963, %v6949, %v6588
    %v6967 = vsel %vm6963, %v6950, %v6590
    %v6968 = vsel %vm6963, %v6951, %v6592
    %v6969 = vsel %vm6963, %v6952, %v6594
    %v6970 = vsel %vm6963, %v6953, %v6596
    %v6971 = vsel %vm6963, %v6954, %v6598
    %v6972 = vsel %vm6963, %v6955, %v6600
    %v6973 = vsel %vm6963, %v6956, %v6602
    %v6974 = vsel %vm6963, %v6957, %v6604
    %v6975 = vsel %vm6963, %v6958, %v6606
    %v6976 = vsel %vm6963, %v6959, %v6608
    %v6977 = vsel %vm6963, %v6960, %v6610
    %v6978 = vsel %vm6963, %v6961, %v6612
    %v6979 = vsel %vm6963, %v6962, %v6614
    %vm6980 = vcmask 228352
    %v6981 = vsel %vm6980, %v6964, %v6648
    %v6982 = vsel %vm6980, %v6965, %v6650
    %v6983 = vsel %vm6980, %v6966, %v6652
    %v6984 = vsel %vm6980, %v6967, %v6654
    %v6985 = vsel %vm6980, %v6968, %v6656
    %v6986 = vsel %vm6980, %v6969, %v6658
    %v6987 = vsel %vm6980, %v6970, %v6660
    %v6988 = vsel %vm6980, %v6971, %v6662
    %v6989 = vsel %vm6980, %v6972, %v6664
    %v6990 = vsel %vm6980, %v6973, %v6666
    %v6991 = vsel %vm6980, %v6974, %v6668
    %v6992 = vsel %vm6980, %v6975, %v6670
    %v6993 = vsel %vm6980, %v6976, %v6672
    %v6994 = vsel %vm6980, %v6977, %v6674
    %v6995 = vsel %vm6980, %v6978, %v6676
    %v6996 = vsel %vm6980, %v6979, %v6678
    %vm6997 = vcmask 244736
    %v6998 = vsel %vm6997, %v6981, %v6712
    %v6999 = vsel %vm6997, %v6982, %v6714
    %v7000 = vsel %vm6997, %v6983, %v6716
    %v7001 = vsel %vm6997, %v6984, %v6718
    %v7002 = vsel %vm6997, %v6985, %v6720
    %v7003 = vsel %vm6997, %v6986, %v6722
    %v7004 = vsel %vm6997, %v6987, %v6724
    %v7005 = vsel %vm6997, %v6988, %v6726
    %v7006 = vsel %vm6997, %v6989, %v6728
    %v7007 = vsel %vm6997, %v6990, %v6730
    %v7008 = vsel %vm6997, %v6991, %v6732
    %v7009 = vsel %vm6997, %v6992, %v6734
    %v7010 = vsel %vm6997, %v6993, %v6736
    %v7011 = vsel %vm6997, %v6994, %v6738
    %v7012 = vsel %vm6997, %v6995, %v6740
    %v7013 = vsel %vm6997, %v6996, %v6742
    %7030 = vrot.lane.b32.xlu0 %v6998, 32
    %v7031 = vpop.permute.xlu0 %7030
    %7032 = vrot.lane.b32.xlu0 %v6999, 32
    %v7033 = vpop.permute.xlu0 %7032
    %7034 = vrot.lane.b32.xlu0 %v7000, 32
    %v7035 = vpop.permute.xlu0 %7034
    %7036 = vrot.lane.b32.xlu0 %v7001, 32
    %v7037 = vpop.permute.xlu0 %7036
    %7038 = vrot.lane.b32.xlu0 %v7002, 32
    %v7039 = vpop.permute.xlu0 %7038
    %7040 = vrot.lane.b32.xlu0 %v7003, 32
    %v7041 = vpop.permute.xlu0 %7040
    %7042 = vrot.lane.b32.xlu0 %v7004, 32
    %v7043 = vpop.permute.xlu0 %7042
    %7044 = vrot.lane.b32.xlu0 %v7005, 32
    %v7045 = vpop.permute.xlu0 %7044
    %7046 = vrot.lane.b32.xlu0 %v7006, 32
    %v7047 = vpop.permute.xlu0 %7046
    %7048 = vrot.lane.b32.xlu0 %v7007, 32
    %v7049 = vpop.permute.xlu0 %7048
    %7050 = vrot.lane.b32.xlu0 %v7008, 32
    %v7051 = vpop.permute.xlu0 %7050
    %7052 = vrot.lane.b32.xlu0 %v7009, 32
    %v7053 = vpop.permute.xlu0 %7052
    %7054 = vrot.lane.b32.xlu0 %v7010, 32
    %v7055 = vpop.permute.xlu0 %7054
    %7056 = vrot.lane.b32.xlu0 %v7011, 32
    %v7057 = vpop.permute.xlu0 %7056
    %7058 = vrot.lane.b32.xlu0 %v7012, 32
    %v7059 = vpop.permute.xlu0 %7058
    %7060 = vrot.lane.b32.xlu0 %v7013, 32
    %v7061 = vpop.permute.xlu0 %7060
    %vm7078 = vcmask 261120
    %v7079 = vsel %vm7078, %v6998, %v7031
    %v7080 = vsel %vm7078, %v6999, %v7033
    %v7081 = vsel %vm7078, %v7000, %v7035
    %v7082 = vsel %vm7078, %v7001, %v7037
    %v7083 = vsel %vm7078, %v7002, %v7039
    %v7084 = vsel %vm7078, %v7003, %v7041
    %v7085 = vsel %vm7078, %v7004, %v7043
    %v7086 = vsel %vm7078, %v7005, %v7045
    %v7087 = vsel %vm7078, %v7006, %v7047
    %v7088 = vsel %vm7078, %v7007, %v7049
    %v7089 = vsel %vm7078, %v7008, %v7051
    %v7090 = vsel %vm7078, %v7009, %v7053
    %v7091 = vsel %vm7078, %v7010, %v7055
    %v7092 = vsel %vm7078, %v7011, %v7057
    %v7093 = vsel %vm7078, %v7012, %v7059
    %v7094 = vsel %vm7078, %v7013, %v7061
    %vm7095 = vcmask 523264
    %7096 = vst.msk [vmem:[#allocation5] sm:$0xff] %vm7095, %v7079
    %7097 = vst.msk [vmem:[#allocation5 + $0x8] sm:$0xff] %vm7095, %v7080
    %7098 = vst.msk [vmem:[#allocation5 + $0x10] sm:$0xff] %vm7095, %v7081
    %7099 = vst.msk [vmem:[#allocation5 + $0x18] sm:$0xff] %vm7095, %v7082
    %7100 = vst.msk [vmem:[#allocation5 + $0x20] sm:$0xff] %vm7095, %v7083
    %7101 = vst.msk [vmem:[#allocation5 + $0x28] sm:$0xff] %vm7095, %v7084
    %7102 = vst.msk [vmem:[#allocation5 + $0x30] sm:$0xff] %vm7095, %v7085
    %7103 = vst.msk [vmem:[#allocation5 + $0x38] sm:$0xff] %vm7095, %v7086
    %7104 = vst.msk [vmem:[#allocation5 + $0x40] sm:$0xff] %vm7095, %v7087
    %7105 = vst.msk [vmem:[#allocation5 + $0x48] sm:$0xff] %vm7095, %v7088
    %7106 = vst.msk [vmem:[#allocation5 + $0x50] sm:$0xff] %vm7095, %v7089
    %7107 = vst.msk [vmem:[#allocation5 + $0x58] sm:$0xff] %vm7095, %v7090
    %7108 = vst.msk [vmem:[#allocation5 + $0x60] sm:$0xff] %vm7095, %v7091
    %7109 = vst.msk [vmem:[#allocation5 + $0x68] sm:$0xff] %vm7095, %v7092
    %7110 = vst.msk [vmem:[#allocation5 + $0x70] sm:$0xff] %vm7095, %v7093
    %7111 = vst.msk [vmem:[#allocation5 + $0x78] sm:$0xff] %vm7095, %v7094
    // Predicated region
    $region10: #{tpu_custom_call.1} parent=1 // pred_check
      _
    $region11: #{tpu_custom_call.1} parent=1 // pred_check_branch
      %7113 = sbr.rel (0) target = $region13
    $region12: #{tpu_custom_call.1} parent=1 // pred_region
      %s7115 = ssub.s32 2048, 2048
      %7116 = vsyncadd [#allocation4], %s7115
      %s7117 = sshll.u32 [#allocation5], 4
      %s7118 = int_to_ptr.vmem [resolvable:$true] %s7117
      %7123 = dma.vmem_to_hbm [thread:$0]  %s7118, 2048, %s1, [#allocation4], 128, 128, 8
    $region13: #{tpu_custom_call.1} parent=1 // pred_fallthru
      _
    // Predicated region
    $region14: #{tpu_custom_call.1} parent=1 // pred_check
      _
    $region15: #{tpu_custom_call.1} parent=1 // pred_check_branch
      %7125 = sbr.rel (0) target = $region17
    $region16: #{tpu_custom_call.1} parent=1 // pred_region
      %7126 = dma.done [#allocation4], 2048
    $region17: #{tpu_custom_call.1} parent=1 // pred_fallthru
      _
    %7127 = vsyncpa [#allocation3], 1
    %7128 = vsyncpa [#allocation4], 1

</llo_original>
